<compile_context>
chip_gen: v7x
topology: tpu7x:2x2x1
jax: 0.10.0
libtpu: 0.0.40
codegen_flags: <defaults>
</compile_context>

<pallas_src>
import jax
import jax.numpy as jnp
from jax.experimental import pallas as pl
from jax.experimental.pallas import tpu as pltpu

IN_DIM = 28 * 28                 # 784
H1, H2, H3 = 600, 400, 100       # logical (PyTorch) hidden widths
H1P, H2P, H3P = 640, 512, 128    # lane-padded widths (multiples of 128)
OUT_DIM = 20
HEAD = 2 * OUT_DIM               # fused mu|logvar head width (40)


def encoder_kernel(x_ref,
                   w1_ref, b1_ref,
                   w2_ref, b2_ref,
                   w3_ref, b3_ref,
                   wh_ref, bh_ref,
                   out_ref):
    # x: (B_TILE, 784) f32; weights bf16. Cast activations to bf16 at each MXU
    # input (native bf16 matmul path), accumulate f32, do bias/ReLU in f32.
    h = jnp.dot(x_ref[...].astype(jnp.bfloat16), w1_ref[...],
                preferred_element_type=jnp.float32)
    h = jnp.maximum(h + b1_ref[...], 0.0)                       # (B_TILE, 640)
    h = jnp.dot(h.astype(jnp.bfloat16), w2_ref[...],
                preferred_element_type=jnp.float32)
    h = jnp.maximum(h + b2_ref[...], 0.0)                       # (B_TILE, 512)
    h = jnp.dot(h.astype(jnp.bfloat16), w3_ref[...],
                preferred_element_type=jnp.float32)
    h = jnp.maximum(h + b3_ref[...], 0.0)                       # (B_TILE, 128)
    # fused mu|logvar head -> (B_TILE, 40)
    out_ref[...] = (jnp.dot(h.astype(jnp.bfloat16), wh_ref[...],
                            preferred_element_type=jnp.float32) + bh_ref[...])


def _round_up(x, m):
    return (x + m - 1) // m * m


@jax.jit
def encoder_forward(x_nchw, kparams):
    """x_nchw: (B, 1, 28, 28) f32 -> (mu (B, 20), logvar (B, 20))."""
    w1, b1, w2, b2, w3, b3, wh, bh = kparams
    B = x_nchw.shape[0]
    x = x_nchw.reshape(B, IN_DIM).astype(jnp.float32)   # == input.view(-1, 784)

    # Batch tile: biggest that is comfortable on all generations (v7x = 64 MiB
    # VMEM), at least the 8-row f32 sublane granule.
    b_tile = min(512, _round_up(B, 8))
    b_pad = _round_up(B, b_tile)
    if b_pad != B:
        x = jnp.pad(x, ((0, b_pad - B), (0, 0)))
    n_tiles = b_pad // b_tile

    resident = lambda i: (0, 0)   # weights/biases: same block every step -> stay in VMEM
    out = pl.pallas_call(
        encoder_kernel,
        out_shape=jax.ShapeDtypeStruct((b_pad, HEAD), jnp.float32),
        grid=(n_tiles,),
        in_specs=[
            pl.BlockSpec((b_tile, IN_DIM), lambda i: (i, 0)),
            pl.BlockSpec((IN_DIM, H1P), resident), pl.BlockSpec((1, H1P), resident),
            pl.BlockSpec((H1P, H2P), resident),    pl.BlockSpec((1, H2P), resident),
            pl.BlockSpec((H2P, H3P), resident),    pl.BlockSpec((1, H3P), resident),
            pl.BlockSpec((H3P, HEAD), resident),   pl.BlockSpec((1, HEAD), resident),
        ],
        out_specs=pl.BlockSpec((b_tile, HEAD), lambda i: (i, 0)),
        compiler_params=pltpu.CompilerParams(
            dimension_semantics=("parallel",),
            vmem_limit_bytes=64 * 1024 * 1024),
    )(x, w1, b1, w2, b2, w3, b3, wh, bh)

    out = out[:B]
    return out[:, :OUT_DIM], out[:, OUT_DIM:HEAD]


def init_params(key):
    """f32 params at logical PyTorch shapes, pre-transposed to (in, out);
    same uniform(-1/sqrt(fan_in), 1/sqrt(fan_in)) scale as nn.Linear default."""
    dims = [(IN_DIM, H1), (H1, H2), (H2, H3), (H3, OUT_DIM), (H3, OUT_DIM)]
    params = []
    for din, dout in dims:
        key, kw, kb = jax.random.split(key, 3)
        bound = 1.0 / jnp.sqrt(din)
        w = jax.random.uniform(kw, (din, dout), jnp.float32, -bound, bound)
        b = jax.random.uniform(kb, (1, dout), jnp.float32, -bound, bound)
        params += [w, b]
    return tuple(params)


def prepare_params(params):
    """One-time packing: fuse mu/logvar heads, zero-pad hidden widths to lane
    multiples, cast weights to bf16 (biases stay f32, padded with zeros)."""
    w1, b1, w2, b2, w3, b3, wmu, bmu, wlv, blv = params

    def pad(a, rows, cols):
        return jnp.pad(a, ((0, rows - a.shape[0]), (0, cols - a.shape[1])))

    w1p, b1p = pad(w1, IN_DIM, H1P), pad(b1, 1, H1P)
    w2p, b2p = pad(w2, H1P, H2P), pad(b2, 1, H2P)
    w3p, b3p = pad(w3, H2P, H3P), pad(b3, 1, H3P)
    whp = pad(jnp.concatenate([wmu, wlv], axis=1), H3P, HEAD)
    bhp = jnp.concatenate([bmu, blv], axis=1)

    bf16 = lambda w: w.astype(jnp.bfloat16)
    return (bf16(w1p), b1p, bf16(w2p), b2p, bf16(w3p), b3p, bf16(whp), bhp)


def reference_forward_bf16(x_nchw, kparams):
    """Plain-JAX reference with the exact kernel numerics (bf16 weights/inputs,
    f32 accumulation) for a tight correctness check."""
    w1, b1, w2, b2, w3, b3, wh, bh = kparams
    B = x_nchw.shape[0]
    x = x_nchw.reshape(B, IN_DIM).astype(jnp.float32)
    dot = lambda a, b: jnp.dot(a.astype(jnp.bfloat16), b,
                               preferred_element_type=jnp.float32)
    h = jnp.maximum(dot(x, w1) + b1, 0.0)
    h = jnp.maximum(dot(h, w2) + b2, 0.0)
    h = jnp.maximum(dot(h, w3) + b3, 0.0)
    out = dot(h, wh) + bh
    return out[:, :OUT_DIM], out[:, OUT_DIM:HEAD]


def reference_forward_f32(x_nchw, params):
    """Pure-f32, unpadded reference matching the original PyTorch module."""
    w1, b1, w2, b2, w3, b3, wmu, bmu, wlv, blv = params
    B = x_nchw.shape[0]
    x = x_nchw.reshape(B, IN_DIM).astype(jnp.float32)
    h = jnp.maximum(x @ w1 + b1, 0.0)
    h = jnp.maximum(h @ w2 + b2, 0.0)
    h = jnp.maximum(h @ w3 + b3, 0.0)
    return h @ wmu + bmu, h @ wlv + blv


if __name__ == "__main__":
    key = jax.random.PRNGKey(0)
    key, kx = jax.random.split(key)
    # Small batch, NCHW MNIST-like input consistent with the 28*28 flatten.
    x = jax.random.normal(kx, (2, 1, 28, 28), jnp.float32)

    params = init_params(key)
    kparams = prepare_params(params)   # packed once, reused every call

    mu, logvar = encoder_forward(x, kparams)
    jax.block_until_ready((mu, logvar))
    assert mu.shape == (2, OUT_DIM) and logvar.shape == (2, OUT_DIM)

    # Tight check vs. the bf16-matched reference.
    mu_r, lv_r = reference_forward_bf16(x, kparams)
    assert jnp.allclose(mu, mu_r, atol=1e-3, rtol=1e-3)
    assert jnp.allclose(logvar, lv_r, atol=1e-3, rtol=1e-3)

    # Loose sanity check vs. the exact f32 PyTorch-equivalent math
    # (tolerance loosened because weights are stored in bf16).
    mu_f, lv_f = reference_forward_f32(x, params)
    assert jnp.allclose(mu, mu_f, atol=5e-2, rtol=5e-2)
    assert jnp.allclose(logvar, lv_f, atol=5e-2, rtol=5e-2)

    print("KERNEL_OK")
</pallas_src>

<mosaic_0001>
module attributes {stable_mosaic.version = 11 : i64} {
  func.func @encoder_kernel(%arg0: i32, %arg1: memref<8x784xf32, #tpu.memory_space<vmem>>, %arg2: memref<784x640xbf16, #tpu.memory_space<vmem>>, %arg3: memref<1x640xf32, #tpu.memory_space<vmem>>, %arg4: memref<640x512xbf16, #tpu.memory_space<vmem>>, %arg5: memref<1x512xf32, #tpu.memory_space<vmem>>, %arg6: memref<512x128xbf16, #tpu.memory_space<vmem>>, %arg7: memref<1x128xf32, #tpu.memory_space<vmem>>, %arg8: memref<128x40xbf16, #tpu.memory_space<vmem>>, %arg9: memref<1x40xf32, #tpu.memory_space<vmem>>, %arg10: memref<8x40xf32, #tpu.memory_space<vmem>>) attributes {dimension_semantics = [#tpu.dimension_semantics<parallel>], iteration_bounds = array<i64: 1>, scalar_prefetch = 0 : i64, scratch_operands = 0 : i64, tpu.core_type = #tpu.core_type<tc>, window_params = [{transform_indices = @transform_0, window_bounds = array<i64: 8, 784>}, {pipeline_mode = #tpu.pipeline_mode<synchronous>, transform_indices = @transform_1, window_bounds = array<i64: 784, 640>}, {pipeline_mode = #tpu.pipeline_mode<synchronous>, transform_indices = @transform_2, window_bounds = array<i64: 1, 640>}, {pipeline_mode = #tpu.pipeline_mode<synchronous>, transform_indices = @transform_3, window_bounds = array<i64: 640, 512>}, {pipeline_mode = #tpu.pipeline_mode<synchronous>, transform_indices = @transform_4, window_bounds = array<i64: 1, 512>}, {pipeline_mode = #tpu.pipeline_mode<synchronous>, transform_indices = @transform_5, window_bounds = array<i64: 512, 128>}, {pipeline_mode = #tpu.pipeline_mode<synchronous>, transform_indices = @transform_6, window_bounds = array<i64: 1, 128>}, {pipeline_mode = #tpu.pipeline_mode<synchronous>, transform_indices = @transform_7, window_bounds = array<i64: 128, 40>}, {pipeline_mode = #tpu.pipeline_mode<synchronous>, transform_indices = @transform_8, window_bounds = array<i64: 1, 40>}, {transform_indices = @transform_9, window_bounds = array<i64: 8, 40>}]} {
    %c0 = arith.constant 0 : index
    %c0_0 = arith.constant 0 : index
    %0 = vector.load %arg1[%c0, %c0_0] : memref<8x784xf32, #tpu.memory_space<vmem>>, vector<8x784xf32>
    %1 = arith.truncf %0 : vector<8x784xf32> to vector<8x784xbf16>
    %c0_1 = arith.constant 0 : index
    %c0_2 = arith.constant 0 : index
    %2 = vector.load %arg2[%c0_1, %c0_2] : memref<784x640xbf16, #tpu.memory_space<vmem>>, vector<784x640xbf16>
    %cst = arith.constant dense<0.000000e+00> : vector<8x640xf32>
    %3 = tpu.matmul %1, %2, %cst {dimension_numbers = #tpu.dot_dimension_numbers<[1], [0], [0], [1], [0, 0, 1, 1], [], []>} : vector<8x784xbf16>, vector<784x640xbf16>, vector<8x640xf32> -> vector<8x640xf32>
    %c0_3 = arith.constant 0 : index
    %c0_4 = arith.constant 0 : index
    %4 = vector.load %arg3[%c0_3, %c0_4] : memref<1x640xf32, #tpu.memory_space<vmem>>, vector<1x640xf32>
    %5 = vector.broadcast %4 : vector<1x640xf32> to vector<8x640xf32>
    %6 = arith.addf %3, %5 : vector<8x640xf32>
    %cst_5 = arith.constant 0.000000e+00 : f32
    %7 = vector.broadcast %cst_5 : f32 to vector<8x640xf32>
    %8 = arith.maximumf %6, %7 : vector<8x640xf32>
    %9 = arith.truncf %8 : vector<8x640xf32> to vector<8x640xbf16>
    %c0_6 = arith.constant 0 : index
    %c0_7 = arith.constant 0 : index
    %10 = vector.load %arg4[%c0_6, %c0_7] : memref<640x512xbf16, #tpu.memory_space<vmem>>, vector<640x512xbf16>
    %cst_8 = arith.constant dense<0.000000e+00> : vector<8x512xf32>
    %11 = tpu.matmul %9, %10, %cst_8 {dimension_numbers = #tpu.dot_dimension_numbers<[1], [0], [0], [1], [0, 0, 1, 1], [], []>} : vector<8x640xbf16>, vector<640x512xbf16>, vector<8x512xf32> -> vector<8x512xf32>
    %c0_9 = arith.constant 0 : index
    %c0_10 = arith.constant 0 : index
    %12 = vector.load %arg5[%c0_9, %c0_10] : memref<1x512xf32, #tpu.memory_space<vmem>>, vector<1x512xf32>
    %13 = vector.broadcast %12 : vector<1x512xf32> to vector<8x512xf32>
    %14 = arith.addf %11, %13 : vector<8x512xf32>
    %cst_11 = arith.constant 0.000000e+00 : f32
    %15 = vector.broadcast %cst_11 : f32 to vector<8x512xf32>
    %16 = arith.maximumf %14, %15 : vector<8x512xf32>
    %17 = arith.truncf %16 : vector<8x512xf32> to vector<8x512xbf16>
    %c0_12 = arith.constant 0 : index
    %c0_13 = arith.constant 0 : index
    %18 = vector.load %arg6[%c0_12, %c0_13] : memref<512x128xbf16, #tpu.memory_space<vmem>>, vector<512x128xbf16>
    %cst_14 = arith.constant dense<0.000000e+00> : vector<8x128xf32>
    %19 = tpu.matmul %17, %18, %cst_14 {dimension_numbers = #tpu.dot_dimension_numbers<[1], [0], [0], [1], [0, 0, 1, 1], [], []>} : vector<8x512xbf16>, vector<512x128xbf16>, vector<8x128xf32> -> vector<8x128xf32>
    %c0_15 = arith.constant 0 : index
    %c0_16 = arith.constant 0 : index
    %20 = vector.load %arg7[%c0_15, %c0_16] : memref<1x128xf32, #tpu.memory_space<vmem>>, vector<1x128xf32>
    %21 = vector.broadcast %20 : vector<1x128xf32> to vector<8x128xf32>
    %22 = arith.addf %19, %21 : vector<8x128xf32>
    %cst_17 = arith.constant 0.000000e+00 : f32
    %23 = vector.broadcast %cst_17 : f32 to vector<8x128xf32>
    %24 = arith.maximumf %22, %23 : vector<8x128xf32>
    %25 = arith.truncf %24 : vector<8x128xf32> to vector<8x128xbf16>
    %c0_18 = arith.constant 0 : index
    %c0_19 = arith.constant 0 : index
    %26 = vector.load %arg8[%c0_18, %c0_19] : memref<128x40xbf16, #tpu.memory_space<vmem>>, vector<128x40xbf16>
    %cst_20 = arith.constant dense<0.000000e+00> : vector<8x40xf32>
    %27 = tpu.matmul %25, %26, %cst_20 {dimension_numbers = #tpu.dot_dimension_numbers<[1], [0], [0], [1], [0, 0, 1, 1], [], []>} : vector<8x128xbf16>, vector<128x40xbf16>, vector<8x40xf32> -> vector<8x40xf32>
    %c0_21 = arith.constant 0 : index
    %c0_22 = arith.constant 0 : index
    %28 = vector.load %arg9[%c0_21, %c0_22] : memref<1x40xf32, #tpu.memory_space<vmem>>, vector<1x40xf32>
    %29 = vector.broadcast %28 : vector<1x40xf32> to vector<8x40xf32>
    %30 = arith.addf %27, %29 : vector<8x40xf32>
    %c0_23 = arith.constant 0 : index
    %c0_24 = arith.constant 0 : index
    %31 = vector.load %arg10[%c0_23, %c0_24] : memref<8x40xf32, #tpu.memory_space<vmem>>, vector<8x40xf32>
    tpu.vector_store %arg10[%c0_23, %c0_24], %30 {strides = array<i32>} : memref<8x40xf32, #tpu.memory_space<vmem>>, vector<8x40xf32>,
    return
  }
  func.func @transform_0(%arg0: i32) -> (i32, i32) {
    %c0_i32 = arith.constant 0 : i32
    %c0_i32_0 = arith.constant 0 : i32
    return %arg0, %c0_i32 : i32, i32
  }
  func.func @transform_1(%arg0: i32) -> (i32, i32) {
    %c0_i32 = arith.constant 0 : i32
    %c0_i32_0 = arith.constant 0 : i32
    %c0_i32_1 = arith.constant 0 : i32
    return %c0_i32, %c0_i32_0 : i32, i32
  }
  func.func @transform_2(%arg0: i32) -> (i32, i32) {
    %c0_i32 = arith.constant 0 : i32
    %c0_i32_0 = arith.constant 0 : i32
    %c0_i32_1 = arith.constant 0 : i32
    return %c0_i32, %c0_i32_0 : i32, i32
  }
  func.func @transform_3(%arg0: i32) -> (i32, i32) {
    %c0_i32 = arith.constant 0 : i32
    %c0_i32_0 = arith.constant 0 : i32
    %c0_i32_1 = arith.constant 0 : i32
    return %c0_i32, %c0_i32_0 : i32, i32
  }
  func.func @transform_4(%arg0: i32) -> (i32, i32) {
    %c0_i32 = arith.constant 0 : i32
    %c0_i32_0 = arith.constant 0 : i32
    %c0_i32_1 = arith.constant 0 : i32
    return %c0_i32, %c0_i32_0 : i32, i32
  }
  func.func @transform_5(%arg0: i32) -> (i32, i32) {
    %c0_i32 = arith.constant 0 : i32
    %c0_i32_0 = arith.constant 0 : i32
    %c0_i32_1 = arith.constant 0 : i32
    return %c0_i32, %c0_i32_0 : i32, i32
  }
  func.func @transform_6(%arg0: i32) -> (i32, i32) {
    %c0_i32 = arith.constant 0 : i32
    %c0_i32_0 = arith.constant 0 : i32
    %c0_i32_1 = arith.constant 0 : i32
    return %c0_i32, %c0_i32_0 : i32, i32
  }
  func.func @transform_7(%arg0: i32) -> (i32, i32) {
    %c0_i32 = arith.constant 0 : i32
    %c0_i32_0 = arith.constant 0 : i32
    %c0_i32_1 = arith.constant 0 : i32
    return %c0_i32, %c0_i32_0 : i32, i32
  }
  func.func @transform_8(%arg0: i32) -> (i32, i32) {
    %c0_i32 = arith.constant 0 : i32
    %c0_i32_0 = arith.constant 0 : i32
    %c0_i32_1 = arith.constant 0 : i32
    return %c0_i32, %c0_i32_0 : i32, i32
  }
  func.func @transform_9(%arg0: i32) -> (i32, i32) {
    %c0_i32 = arith.constant 0 : i32
    %c0_i32_0 = arith.constant 0 : i32
    return %arg0, %c0_i32 : i32, i32
  }
}

</mosaic_0001>

<llo_original>
// kernel: encoder_forward.1
$region0: #{encoder_forward.1}
  #allocation0 [shape = 'u32[]', space=smem, size = 0x4, offset = 0x4, fixed_abs, tag = 'smem constant byte address 0x4 - core index']
  #allocation1 [shape = 'u32[144,128]{1,0:T(1,128)}', space=vmem, size = 0x12000, scoped, tag = 'internal scratch']
  %s0 = inlined_call_operand.hbm [shape: f32[8,784], index: 0, kind: input, shape index: {}]
  %s1 = inlined_call_operand.hbm [shape: bf16[784,640], index: 1, kind: input, shape index: {}]
  %s2 = inlined_call_operand.hbm [shape: f32[1,640], index: 2, kind: input, shape index: {}]
  %s3 = inlined_call_operand.hbm [shape: bf16[640,512], index: 3, kind: input, shape index: {}]
  %s4 = inlined_call_operand.hbm [shape: f32[1,512], index: 4, kind: input, shape index: {}]
  %s5 = inlined_call_operand.hbm [shape: bf16[512,128], index: 5, kind: input, shape index: {}]
  %s6 = inlined_call_operand.hbm [shape: f32[1,128], index: 6, kind: input, shape index: {}]
  %s7 = inlined_call_operand.hbm [shape: bf16[128,40], index: 7, kind: input, shape index: {}]
  %s8 = inlined_call_operand.hbm [shape: f32[1,40], index: 8, kind: input, shape index: {}]
  %s9 = inlined_call_operand.hbm [shape: f32[8,40], index: 9, kind: output, shape index: {}]
  %s10 = sld [smem:[#allocation0]]
  $region82: #{encoder_forward.1} parent=0
    _
  %s12 = ssub.s32 1, %s10
  %s13 = scalar_select 0, %s12, %s10
  $region1: #{encoder_forward.1} parent=0
    #allocation2 [shape = 'u8[28672]{0}', space=vmem, size = 0x7000, scoped, tag = 'input window, operand 0, single buffered']
    #allocation3 [shape = 's32[1]{0}', space=sflag, size = 0x4, scoped, tag = 'scoped memory for encoder_forward.1']
    #allocation4 [shape = 's32[1]{0}', space=sflag, size = 0x4, scoped, tag = 'scoped memory for encoder_forward.1']
    #allocation5 [shape = 'u8[1003520]{0}', space=vmem, size = 0xf5000, scoped, tag = 'input window, operand 1, single buffered']
    #allocation6 [shape = 's32[1]{0}', space=sflag, size = 0x4, scoped, tag = 'scoped memory for encoder_forward.1']
    #allocation7 [shape = 'u8[2560]{0}', space=vmem, size = 0xc00, scoped, tag = 'input window, operand 2, single buffered']
    #allocation8 [shape = 'u8[655360]{0}', space=vmem, size = 0xa0000, scoped, tag = 'input window, operand 3, single buffered']
    #allocation9 [shape = 's32[1]{0}', space=sflag, size = 0x4, scoped, tag = 'scoped memory for encoder_forward.1']
    #allocation10 [shape = 'u8[2048]{0}', space=vmem, size = 0x800, scoped, tag = 'input window, operand 4, single buffered']
    #allocation11 [shape = 'u8[131072]{0}', space=vmem, size = 0x20000, scoped, tag = 'input window, operand 5, single buffered']
    #allocation12 [shape = 's32[1]{0}', space=sflag, size = 0x4, scoped, tag = 'scoped memory for encoder_forward.1']
    #allocation13 [shape = 'u8[512]{0}', space=vmem, size = 0x400, scoped, tag = 'input window, operand 6, single buffered']
    #allocation14 [shape = 'u8[32768]{0}', space=vmem, size = 0x8000, scoped, tag = 'input window, operand 7, single buffered']
    #allocation15 [shape = 's32[1]{0}', space=sflag, size = 0x4, scoped, tag = 'scoped memory for encoder_forward.1']
    #allocation16 [shape = 'u8[512]{0}', space=vmem, size = 0x400, scoped, tag = 'input window, operand 8, single buffered']
    #allocation17 [shape = 'u8[4096]{0}', space=vmem, size = 0x1000, scoped, tag = 'output window, operand 0, single buffered']
    %14 = vsyncpa [#allocation3], 0
    %15 = vsyncpa [#allocation6], 0
    %16 = vsyncpa [#allocation9], 0
    %17 = vsyncpa [#allocation12], 0
    %18 = vsyncpa [#allocation15], 0
    %19 = vsyncpa [#allocation4], 0
    // Predicated region
    $region2: #{encoder_forward.1} parent=1 // pred_check
      _
    $region3: #{encoder_forward.1} parent=1 // pred_check_branch
      %21 = sbr.rel (0) target = $region5
    $region4: #{encoder_forward.1} parent=1 // pred_region
      %s23 = ssub.s32 896, 896
      %24 = vsyncadd [#allocation3], %s23
      %s26 = sshll.u32 [#allocation2], 4
      %s27 = int_to_ptr.vmem [resolvable:$true] %s26
      %29 = dma.hbm_to_vmem [thread:$0]  %s0, 896, %s27, [#allocation3]
    $region5: #{encoder_forward.1} parent=1 // pred_fallthru
      _
    // Predicated region
    $region6: #{encoder_forward.1} parent=1 // pred_check
      _
    $region7: #{encoder_forward.1} parent=1 // pred_check_branch
      %31 = sbr.rel (0) target = $region9
    $region8: #{encoder_forward.1} parent=1 // pred_region
      %s33 = ssub.s32 31360, 31360
      %34 = vsyncadd [#allocation6], %s33
      %s35 = sshll.u32 [#allocation5], 4
      %s36 = int_to_ptr.vmem [resolvable:$true] %s35
      %41 = dma.hbm_to_vmem [thread:$0]  %s1, 31360, %s36, [#allocation6], 320, 320, 20
    $region9: #{encoder_forward.1} parent=1 // pred_fallthru
      _
    // Predicated region
    $region10: #{encoder_forward.1} parent=1 // pred_check
      _
    $region11: #{encoder_forward.1} parent=1 // pred_check_branch
      %43 = sbr.rel (0) target = $region13
    $region12: #{encoder_forward.1} parent=1 // pred_region
      %s45 = ssub.s32 80, 80
      %46 = vsyncadd [#allocation6], %s45
      %s48 = sshll.u32 [#allocation7], 4
      %s49 = int_to_ptr.vmem [resolvable:$true] %s48
      %51 = dma.hbm_to_vmem [thread:$0]  %s2, 80, %s49, [#allocation6]
    $region13: #{encoder_forward.1} parent=1 // pred_fallthru
      _
    // Predicated region
    $region14: #{encoder_forward.1} parent=1 // pred_check
      _
    $region15: #{encoder_forward.1} parent=1 // pred_check_branch
      %53 = sbr.rel (0) target = $region17
    $region16: #{encoder_forward.1} parent=1 // pred_region
      %s55 = ssub.s32 20480, 20480
      %56 = vsyncadd [#allocation9], %s55
      %s57 = sshll.u32 [#allocation8], 4
      %s58 = int_to_ptr.vmem [resolvable:$true] %s57
      %63 = dma.hbm_to_vmem [thread:$0]  %s3, 20480, %s58, [#allocation9], 256, 256, 16
    $region17: #{encoder_forward.1} parent=1 // pred_fallthru
      _
    // Predicated region
    $region18: #{encoder_forward.1} parent=1 // pred_check
      _
    $region19: #{encoder_forward.1} parent=1 // pred_check_branch
      %65 = sbr.rel (0) target = $region21
    $region20: #{encoder_forward.1} parent=1 // pred_region
      %s67 = ssub.s32 64, 64
      %68 = vsyncadd [#allocation9], %s67
      %s70 = sshll.u32 [#allocation10], 4
      %s71 = int_to_ptr.vmem [resolvable:$true] %s70
      %73 = dma.hbm_to_vmem [thread:$0]  %s4, 64, %s71, [#allocation9]
    $region21: #{encoder_forward.1} parent=1 // pred_fallthru
      _
    // Predicated region
    $region22: #{encoder_forward.1} parent=1 // pred_check
      _
    $region23: #{encoder_forward.1} parent=1 // pred_check_branch
      %75 = sbr.rel (0) target = $region25
    $region24: #{encoder_forward.1} parent=1 // pred_region
      %s77 = ssub.s32 4096, 4096
      %78 = vsyncadd [#allocation12], %s77
      %s79 = sshll.u32 [#allocation11], 4
      %s80 = int_to_ptr.vmem [resolvable:$true] %s79
      %85 = dma.hbm_to_vmem [thread:$0]  %s5, 4096, %s80, [#allocation12], 64, 64, 4
    $region25: #{encoder_forward.1} parent=1 // pred_fallthru
      _
    // Predicated region
    $region26: #{encoder_forward.1} parent=1 // pred_check
      _
    $region27: #{encoder_forward.1} parent=1 // pred_check_branch
      %87 = sbr.rel (0) target = $region29
    $region28: #{encoder_forward.1} parent=1 // pred_region
      %s89 = ssub.s32 16, 16
      %90 = vsyncadd [#allocation12], %s89
      %s92 = sshll.u32 [#allocation13], 4
      %s93 = int_to_ptr.vmem [resolvable:$true] %s92
      %95 = dma.hbm_to_vmem [thread:$0]  %s6, 16, %s93, [#allocation12]
    $region29: #{encoder_forward.1} parent=1 // pred_fallthru
      _
    // Predicated region
    $region30: #{encoder_forward.1} parent=1 // pred_check
      _
    $region31: #{encoder_forward.1} parent=1 // pred_check_branch
      %97 = sbr.rel (0) target = $region33
    $region32: #{encoder_forward.1} parent=1 // pred_region
      %s99 = ssub.s32 1024, 1024
      %100 = vsyncadd [#allocation15], %s99
      %s101 = sshll.u32 [#allocation14], 4
      %s102 = int_to_ptr.vmem [resolvable:$true] %s101
      %107 = dma.hbm_to_vmem [thread:$0]  %s7, 1024, %s102, [#allocation15], 64, 64, 4
    $region33: #{encoder_forward.1} parent=1 // pred_fallthru
      _
    // Predicated region
    $region34: #{encoder_forward.1} parent=1 // pred_check
      _
    $region35: #{encoder_forward.1} parent=1 // pred_check_branch
      %109 = sbr.rel (0) target = $region37
    $region36: #{encoder_forward.1} parent=1 // pred_region
      %s111 = ssub.s32 16, 16
      %112 = vsyncadd [#allocation15], %s111
      %s114 = sshll.u32 [#allocation16], 4
      %s115 = int_to_ptr.vmem [resolvable:$true] %s114
      %117 = dma.hbm_to_vmem [thread:$0]  %s8, 16, %s115, [#allocation15]
    $region37: #{encoder_forward.1} parent=1 // pred_fallthru
      _
    // Predicated region
    $region38: #{encoder_forward.1} parent=1 // pred_check
      _
    $region39: #{encoder_forward.1} parent=1 // pred_check_branch
      %119 = sbr.rel (0) target = $region41
    $region40: #{encoder_forward.1} parent=1 // pred_region
      %120 = dma.done [#allocation3], 896
    $region41: #{encoder_forward.1} parent=1 // pred_fallthru
      _
    // Predicated region
    $region42: #{encoder_forward.1} parent=1 // pred_check
      _
    $region43: #{encoder_forward.1} parent=1 // pred_check_branch
      %122 = sbr.rel (0) target = $region45
    $region44: #{encoder_forward.1} parent=1 // pred_region
      %123 = dma.done [#allocation6], 31360
    $region45: #{encoder_forward.1} parent=1 // pred_fallthru
      _
    // Predicated region
    $region46: #{encoder_forward.1} parent=1 // pred_check
      _
    $region47: #{encoder_forward.1} parent=1 // pred_check_branch
      %125 = sbr.rel (0) target = $region49
    $region48: #{encoder_forward.1} parent=1 // pred_region
      %126 = dma.done [#allocation6], 80
    $region49: #{encoder_forward.1} parent=1 // pred_fallthru
      _
    // Predicated region
    $region50: #{encoder_forward.1} parent=1 // pred_check
      _
    $region51: #{encoder_forward.1} parent=1 // pred_check_branch
      %128 = sbr.rel (0) target = $region53
    $region52: #{encoder_forward.1} parent=1 // pred_region
      %129 = dma.done [#allocation9], 20480
    $region53: #{encoder_forward.1} parent=1 // pred_fallthru
      _
    // Predicated region
    $region54: #{encoder_forward.1} parent=1 // pred_check
      _
    $region55: #{encoder_forward.1} parent=1 // pred_check_branch
      %131 = sbr.rel (0) target = $region57
    $region56: #{encoder_forward.1} parent=1 // pred_region
      %132 = dma.done [#allocation9], 64
    $region57: #{encoder_forward.1} parent=1 // pred_fallthru
      _
    // Predicated region
    $region58: #{encoder_forward.1} parent=1 // pred_check
      _
    $region59: #{encoder_forward.1} parent=1 // pred_check_branch
      %134 = sbr.rel (0) target = $region61
    $region60: #{encoder_forward.1} parent=1 // pred_region
      %135 = dma.done [#allocation12], 4096
    $region61: #{encoder_forward.1} parent=1 // pred_fallthru
      _
    // Predicated region
    $region62: #{encoder_forward.1} parent=1 // pred_check
      _
    $region63: #{encoder_forward.1} parent=1 // pred_check_branch
      %137 = sbr.rel (0) target = $region65
    $region64: #{encoder_forward.1} parent=1 // pred_region
      %138 = dma.done [#allocation12], 16
    $region65: #{encoder_forward.1} parent=1 // pred_fallthru
      _
    // Predicated region
    $region66: #{encoder_forward.1} parent=1 // pred_check
      _
    $region67: #{encoder_forward.1} parent=1 // pred_check_branch
      %140 = sbr.rel (0) target = $region69
    $region68: #{encoder_forward.1} parent=1 // pred_region
      %141 = dma.done [#allocation15], 1024
    $region69: #{encoder_forward.1} parent=1 // pred_fallthru
      _
    // Predicated region
    $region70: #{encoder_forward.1} parent=1 // pred_check
      _
    $region71: #{encoder_forward.1} parent=1 // pred_check_branch
      %143 = sbr.rel (0) target = $region73
    $region72: #{encoder_forward.1} parent=1 // pred_region
      %144 = dma.done [#allocation15], 16
    $region73: #{encoder_forward.1} parent=1 // pred_fallthru
      _
    %v146 = vld [vmem:[#allocation2] sm:$0xff]
    %v147 = vld [vmem:[#allocation2 + $0x8] sm:$0xff]
    %v148 = vld [vmem:[#allocation2 + $0x10] sm:$0xff]
    %v149 = vld [vmem:[#allocation2 + $0x18] sm:$0xff]
    %v150 = vld [vmem:[#allocation2 + $0x20] sm:$0xff]
    %v151 = vld [vmem:[#allocation2 + $0x28] sm:$0xff]
    %v152 = vld [vmem:[#allocation2 + $0x30] sm:$0xff]
    %v153 = vpack.c.bf16 %v146, %v146
    %v154 = vpack.c.bf16 %v147, %v147
    %v155 = vpack.c.bf16 %v148, %v148
    %v156 = vpack.c.bf16 %v149, %v149
    %v157 = vpack.c.bf16 %v150, %v150
    %v158 = vpack.c.bf16 %v151, %v151
    %v159 = vpack.c.bf16 %v152, %v152
    %v160 = vld [vmem:[#allocation5] sm:$0xff]
    %v161 = vld [vmem:[#allocation5 + $0x8] sm:$0xff]
    %v162 = vld [vmem:[#allocation5 + $0x10] sm:$0xf]
    %v163 = vld [vmem:[#allocation5 + $0x14] sm:$0xff]
    %v164 = vld [vmem:[#allocation5 + $0x1c] sm:$0xff]
    %v165 = vld [vmem:[#allocation5 + $0x24] sm:$0xf]
    %v166 = vld [vmem:[#allocation5 + $0x28] sm:$0xff]
    %v167 = vld [vmem:[#allocation5 + $0x30] sm:$0xff]
    %v168 = vld [vmem:[#allocation5 + $0x38] sm:$0xf]
    %v169 = vld [vmem:[#allocation5 + $0x3c] sm:$0xff]
    %v170 = vld [vmem:[#allocation5 + $0x44] sm:$0xff]
    %v171 = vld [vmem:[#allocation5 + $0x4c] sm:$0xf]
    %v172 = vld [vmem:[#allocation5 + $0x50] sm:$0xff]
    %v173 = vld [vmem:[#allocation5 + $0x58] sm:$0xff]
    %v174 = vld [vmem:[#allocation5 + $0x60] sm:$0xf]
    %v175 = vld [vmem:[#allocation5 + $0x64] sm:$0xff]
    %v176 = vld [vmem:[#allocation5 + $0x6c] sm:$0xff]
    %v177 = vld [vmem:[#allocation5 + $0x74] sm:$0xf]
    %v178 = vld [vmem:[#allocation5 + $0x78] sm:$0xff]
    %v179 = vld [vmem:[#allocation5 + $0x80] sm:$0xff]
    %v180 = vld [vmem:[#allocation5 + $0x88] sm:$0xf]
    %v181 = vld [vmem:[#allocation5 + $0x8c] sm:$0xff]
    %v182 = vld [vmem:[#allocation5 + $0x94] sm:$0xff]
    %v183 = vld [vmem:[#allocation5 + $0x9c] sm:$0xf]
    %v184 = vld [vmem:[#allocation5 + $0xa0] sm:$0xff]
    %v185 = vld [vmem:[#allocation5 + $0xa8] sm:$0xff]
    %v186 = vld [vmem:[#allocation5 + $0xb0] sm:$0xf]
    %v187 = vld [vmem:[#allocation5 + $0xb4] sm:$0xff]
    %v188 = vld [vmem:[#allocation5 + $0xbc] sm:$0xff]
    %v189 = vld [vmem:[#allocation5 + $0xc4] sm:$0xf]
    %v190 = vld [vmem:[#allocation5 + $0xc8] sm:$0xff]
    %v191 = vld [vmem:[#allocation5 + $0xd0] sm:$0xff]
    %v192 = vld [vmem:[#allocation5 + $0xd8] sm:$0xf]
    %v193 = vld [vmem:[#allocation5 + $0xdc] sm:$0xff]
    %v194 = vld [vmem:[#allocation5 + $0xe4] sm:$0xff]
    %v195 = vld [vmem:[#allocation5 + $0xec] sm:$0xf]
    %v196 = vld [vmem:[#allocation5 + $0xf0] sm:$0xff]
    %v197 = vld [vmem:[#allocation5 + $0xf8] sm:$0xff]
    %v198 = vld [vmem:[#allocation5 + $0x100] sm:$0xf]
    %v199 = vld [vmem:[#allocation5 + $0x104] sm:$0xff]
    %v200 = vld [vmem:[#allocation5 + $0x10c] sm:$0xff]
    %v201 = vld [vmem:[#allocation5 + $0x114] sm:$0xf]
    %v202 = vld [vmem:[#allocation5 + $0x118] sm:$0xff]
    %v203 = vld [vmem:[#allocation5 + $0x120] sm:$0xff]
    %v204 = vld [vmem:[#allocation5 + $0x128] sm:$0xf]
    %v205 = vld [vmem:[#allocation5 + $0x12c] sm:$0xff]
    %v206 = vld [vmem:[#allocation5 + $0x134] sm:$0xff]
    %v207 = vld [vmem:[#allocation5 + $0x13c] sm:$0xf]
    %v208 = vld [vmem:[#allocation5 + $0x140] sm:$0xff]
    %v209 = vld [vmem:[#allocation5 + $0x148] sm:$0xff]
    %v210 = vld [vmem:[#allocation5 + $0x150] sm:$0xf]
    %v211 = vld [vmem:[#allocation5 + $0x154] sm:$0xff]
    %v212 = vld [vmem:[#allocation5 + $0x15c] sm:$0xff]
    %v213 = vld [vmem:[#allocation5 + $0x164] sm:$0xf]
    %v214 = vld [vmem:[#allocation5 + $0x168] sm:$0xff]
    %v215 = vld [vmem:[#allocation5 + $0x170] sm:$0xff]
    %v216 = vld [vmem:[#allocation5 + $0x178] sm:$0xf]
    %v217 = vld [vmem:[#allocation5 + $0x17c] sm:$0xff]
    %v218 = vld [vmem:[#allocation5 + $0x184] sm:$0xff]
    %v219 = vld [vmem:[#allocation5 + $0x18c] sm:$0xf]
    %v220 = vld [vmem:[#allocation5 + $0x190] sm:$0xff]
    %v221 = vld [vmem:[#allocation5 + $0x198] sm:$0xff]
    %v222 = vld [vmem:[#allocation5 + $0x1a0] sm:$0xf]
    %v223 = vld [vmem:[#allocation5 + $0x1a4] sm:$0xff]
    %v224 = vld [vmem:[#allocation5 + $0x1ac] sm:$0xff]
    %v225 = vld [vmem:[#allocation5 + $0x1b4] sm:$0xf]
    %v226 = vld [vmem:[#allocation5 + $0x1b8] sm:$0xff]
    %v227 = vld [vmem:[#allocation5 + $0x1c0] sm:$0xff]
    %v228 = vld [vmem:[#allocation5 + $0x1c8] sm:$0xf]
    %v229 = vld [vmem:[#allocation5 + $0x1cc] sm:$0xff]
    %v230 = vld [vmem:[#allocation5 + $0x1d4] sm:$0xff]
    %v231 = vld [vmem:[#allocation5 + $0x1dc] sm:$0xf]
    %v232 = vld [vmem:[#allocation5 + $0x1e0] sm:$0xff]
    %v233 = vld [vmem:[#allocation5 + $0x1e8] sm:$0xff]
    %v234 = vld [vmem:[#allocation5 + $0x1f0] sm:$0xf]
    %v235 = vld [vmem:[#allocation5 + $0x1f4] sm:$0xff]
    %v236 = vld [vmem:[#allocation5 + $0x1fc] sm:$0xff]
    %v237 = vld [vmem:[#allocation5 + $0x204] sm:$0xf]
    %v238 = vld [vmem:[#allocation5 + $0x208] sm:$0xff]
    %v239 = vld [vmem:[#allocation5 + $0x210] sm:$0xff]
    %v240 = vld [vmem:[#allocation5 + $0x218] sm:$0xf]
    %v241 = vld [vmem:[#allocation5 + $0x21c] sm:$0xff]
    %v242 = vld [vmem:[#allocation5 + $0x224] sm:$0xff]
    %v243 = vld [vmem:[#allocation5 + $0x22c] sm:$0xf]
    %v244 = vld [vmem:[#allocation5 + $0x230] sm:$0xff]
    %v245 = vld [vmem:[#allocation5 + $0x238] sm:$0xff]
    %v246 = vld [vmem:[#allocation5 + $0x240] sm:$0xf]
    %v247 = vld [vmem:[#allocation5 + $0x244] sm:$0xff]
    %v248 = vld [vmem:[#allocation5 + $0x24c] sm:$0xff]
    %v249 = vld [vmem:[#allocation5 + $0x254] sm:$0xf]
    %v250 = vld [vmem:[#allocation5 + $0x258] sm:$0xff]
    %v251 = vld [vmem:[#allocation5 + $0x260] sm:$0xff]
    %v252 = vld [vmem:[#allocation5 + $0x268] sm:$0xf]
    %v253 = vld [vmem:[#allocation5 + $0x26c] sm:$0xff]
    %v254 = vld [vmem:[#allocation5 + $0x274] sm:$0xff]
    %v255 = vld [vmem:[#allocation5 + $0x27c] sm:$0xf]
    %v256 = vld [vmem:[#allocation5 + $0x280] sm:$0xff]
    %v257 = vld [vmem:[#allocation5 + $0x288] sm:$0xff]
    %v258 = vld [vmem:[#allocation5 + $0x290] sm:$0xf]
    %v259 = vld [vmem:[#allocation5 + $0x294] sm:$0xff]
    %v260 = vld [vmem:[#allocation5 + $0x29c] sm:$0xff]
    %v261 = vld [vmem:[#allocation5 + $0x2a4] sm:$0xf]
    %v262 = vld [vmem:[#allocation5 + $0x2a8] sm:$0xff]
    %v263 = vld [vmem:[#allocation5 + $0x2b0] sm:$0xff]
    %v264 = vld [vmem:[#allocation5 + $0x2b8] sm:$0xf]
    %v265 = vld [vmem:[#allocation5 + $0x2bc] sm:$0xff]
    %v266 = vld [vmem:[#allocation5 + $0x2c4] sm:$0xff]
    %v267 = vld [vmem:[#allocation5 + $0x2cc] sm:$0xf]
    %v268 = vld [vmem:[#allocation5 + $0x2d0] sm:$0xff]
    %v269 = vld [vmem:[#allocation5 + $0x2d8] sm:$0xff]
    %v270 = vld [vmem:[#allocation5 + $0x2e0] sm:$0xf]
    %v271 = vld [vmem:[#allocation5 + $0x2e4] sm:$0xff]
    %v272 = vld [vmem:[#allocation5 + $0x2ec] sm:$0xff]
    %v273 = vld [vmem:[#allocation5 + $0x2f4] sm:$0xf]
    %v274 = vld [vmem:[#allocation5 + $0x2f8] sm:$0xff]
    %v275 = vld [vmem:[#allocation5 + $0x300] sm:$0xff]
    %v276 = vld [vmem:[#allocation5 + $0x308] sm:$0xf]
    %v277 = vld [vmem:[#allocation5 + $0x30c] sm:$0xff]
    %v278 = vld [vmem:[#allocation5 + $0x314] sm:$0xff]
    %v279 = vld [vmem:[#allocation5 + $0x31c] sm:$0xf]
    %v280 = vld [vmem:[#allocation5 + $0x320] sm:$0xff]
    %v281 = vld [vmem:[#allocation5 + $0x328] sm:$0xff]
    %v282 = vld [vmem:[#allocation5 + $0x330] sm:$0xf]
    %v283 = vld [vmem:[#allocation5 + $0x334] sm:$0xff]
    %v284 = vld [vmem:[#allocation5 + $0x33c] sm:$0xff]
    %v285 = vld [vmem:[#allocation5 + $0x344] sm:$0xf]
    %v286 = vld [vmem:[#allocation5 + $0x348] sm:$0xff]
    %v287 = vld [vmem:[#allocation5 + $0x350] sm:$0xff]
    %v288 = vld [vmem:[#allocation5 + $0x358] sm:$0xf]
    %v289 = vld [vmem:[#allocation5 + $0x35c] sm:$0xff]
    %v290 = vld [vmem:[#allocation5 + $0x364] sm:$0xff]
    %v291 = vld [vmem:[#allocation5 + $0x36c] sm:$0xf]
    %v292 = vld [vmem:[#allocation5 + $0x370] sm:$0xff]
    %v293 = vld [vmem:[#allocation5 + $0x378] sm:$0xff]
    %v294 = vld [vmem:[#allocation5 + $0x380] sm:$0xf]
    %v295 = vld [vmem:[#allocation5 + $0x384] sm:$0xff]
    %v296 = vld [vmem:[#allocation5 + $0x38c] sm:$0xff]
    %v297 = vld [vmem:[#allocation5 + $0x394] sm:$0xf]
    %v298 = vld [vmem:[#allocation5 + $0x398] sm:$0xff]
    %v299 = vld [vmem:[#allocation5 + $0x3a0] sm:$0xff]
    %v300 = vld [vmem:[#allocation5 + $0x3a8] sm:$0xf]
    %v301 = vld [vmem:[#allocation5 + $0x3ac] sm:$0xff]
    %v302 = vld [vmem:[#allocation5 + $0x3b4] sm:$0xff]
    %v303 = vld [vmem:[#allocation5 + $0x3bc] sm:$0xf]
    %v304 = vld [vmem:[#allocation5 + $0x3c0] sm:$0xff]
    %v305 = vld [vmem:[#allocation5 + $0x3c8] sm:$0xff]
    %v306 = vld [vmem:[#allocation5 + $0x3d0] sm:$0xf]
    %v307 = vld [vmem:[#allocation5 + $0x3d4] sm:$0xff]
    %v308 = vld [vmem:[#allocation5 + $0x3dc] sm:$0xff]
    %v309 = vld [vmem:[#allocation5 + $0x3e4] sm:$0xf]
    %v310 = vld [vmem:[#allocation5 + $0x3e8] sm:$0xff]
    %v311 = vld [vmem:[#allocation5 + $0x3f0] sm:$0xff]
    %v312 = vld [vmem:[#allocation5 + $0x3f8] sm:$0xf]
    %v313 = vld [vmem:[#allocation5 + $0x3fc] sm:$0xff]
    %v314 = vld [vmem:[#allocation5 + $0x404] sm:$0xff]
    %v315 = vld [vmem:[#allocation5 + $0x40c] sm:$0xf]
    %v316 = vld [vmem:[#allocation5 + $0x410] sm:$0xff]
    %v317 = vld [vmem:[#allocation5 + $0x418] sm:$0xff]
    %v318 = vld [vmem:[#allocation5 + $0x420] sm:$0xf]
    %v319 = vld [vmem:[#allocation5 + $0x424] sm:$0xff]
    %v320 = vld [vmem:[#allocation5 + $0x42c] sm:$0xff]
    %v321 = vld [vmem:[#allocation5 + $0x434] sm:$0xf]
    %v322 = vld [vmem:[#allocation5 + $0x438] sm:$0xff]
    %v323 = vld [vmem:[#allocation5 + $0x440] sm:$0xff]
    %v324 = vld [vmem:[#allocation5 + $0x448] sm:$0xf]
    %v325 = vld [vmem:[#allocation5 + $0x44c] sm:$0xff]
    %v326 = vld [vmem:[#allocation5 + $0x454] sm:$0xff]
    %v327 = vld [vmem:[#allocation5 + $0x45c] sm:$0xf]
    %v328 = vld [vmem:[#allocation5 + $0x460] sm:$0xff]
    %v329 = vld [vmem:[#allocation5 + $0x468] sm:$0xff]
    %v330 = vld [vmem:[#allocation5 + $0x470] sm:$0xf]
    %v331 = vld [vmem:[#allocation5 + $0x474] sm:$0xff]
    %v332 = vld [vmem:[#allocation5 + $0x47c] sm:$0xff]
    %v333 = vld [vmem:[#allocation5 + $0x484] sm:$0xf]
    %v334 = vld [vmem:[#allocation5 + $0x488] sm:$0xff]
    %v335 = vld [vmem:[#allocation5 + $0x490] sm:$0xff]
    %v336 = vld [vmem:[#allocation5 + $0x498] sm:$0xf]
    %v337 = vld [vmem:[#allocation5 + $0x49c] sm:$0xff]
    %v338 = vld [vmem:[#allocation5 + $0x4a4] sm:$0xff]
    %v339 = vld [vmem:[#allocation5 + $0x4ac] sm:$0xf]
    %v340 = vld [vmem:[#allocation5 + $0x4b0] sm:$0xff]
    %v341 = vld [vmem:[#allocation5 + $0x4b8] sm:$0xff]
    %v342 = vld [vmem:[#allocation5 + $0x4c0] sm:$0xf]
    %v343 = vld [vmem:[#allocation5 + $0x4c4] sm:$0xff]
    %v344 = vld [vmem:[#allocation5 + $0x4cc] sm:$0xff]
    %v345 = vld [vmem:[#allocation5 + $0x4d4] sm:$0xf]
    %v346 = vld [vmem:[#allocation5 + $0x4d8] sm:$0xff]
    %v347 = vld [vmem:[#allocation5 + $0x4e0] sm:$0xff]
    %v348 = vld [vmem:[#allocation5 + $0x4e8] sm:$0xf]
    %v349 = vld [vmem:[#allocation5 + $0x4ec] sm:$0xff]
    %v350 = vld [vmem:[#allocation5 + $0x4f4] sm:$0xff]
    %v351 = vld [vmem:[#allocation5 + $0x4fc] sm:$0xf]
    %v352 = vld [vmem:[#allocation5 + $0x500] sm:$0xff]
    %v353 = vld [vmem:[#allocation5 + $0x508] sm:$0xff]
    %v354 = vld [vmem:[#allocation5 + $0x510] sm:$0xf]
    %v355 = vld [vmem:[#allocation5 + $0x514] sm:$0xff]
    %v356 = vld [vmem:[#allocation5 + $0x51c] sm:$0xff]
    %v357 = vld [vmem:[#allocation5 + $0x524] sm:$0xf]
    %v358 = vld [vmem:[#allocation5 + $0x528] sm:$0xff]
    %v359 = vld [vmem:[#allocation5 + $0x530] sm:$0xff]
    %v360 = vld [vmem:[#allocation5 + $0x538] sm:$0xf]
    %v361 = vld [vmem:[#allocation5 + $0x53c] sm:$0xff]
    %v362 = vld [vmem:[#allocation5 + $0x544] sm:$0xff]
    %v363 = vld [vmem:[#allocation5 + $0x54c] sm:$0xf]
    %v364 = vld [vmem:[#allocation5 + $0x550] sm:$0xff]
    %v365 = vld [vmem:[#allocation5 + $0x558] sm:$0xff]
    %v366 = vld [vmem:[#allocation5 + $0x560] sm:$0xf]
    %v367 = vld [vmem:[#allocation5 + $0x564] sm:$0xff]
    %v368 = vld [vmem:[#allocation5 + $0x56c] sm:$0xff]
    %v369 = vld [vmem:[#allocation5 + $0x574] sm:$0xf]
    %v370 = vld [vmem:[#allocation5 + $0x578] sm:$0xff]
    %v371 = vld [vmem:[#allocation5 + $0x580] sm:$0xff]
    %v372 = vld [vmem:[#allocation5 + $0x588] sm:$0xf]
    %v373 = vld [vmem:[#allocation5 + $0x58c] sm:$0xff]
    %v374 = vld [vmem:[#allocation5 + $0x594] sm:$0xff]
    %v375 = vld [vmem:[#allocation5 + $0x59c] sm:$0xf]
    %v376 = vld [vmem:[#allocation5 + $0x5a0] sm:$0xff]
    %v377 = vld [vmem:[#allocation5 + $0x5a8] sm:$0xff]
    %v378 = vld [vmem:[#allocation5 + $0x5b0] sm:$0xf]
    %v379 = vld [vmem:[#allocation5 + $0x5b4] sm:$0xff]
    %v380 = vld [vmem:[#allocation5 + $0x5bc] sm:$0xff]
    %v381 = vld [vmem:[#allocation5 + $0x5c4] sm:$0xf]
    %v382 = vld [vmem:[#allocation5 + $0x5c8] sm:$0xff]
    %v383 = vld [vmem:[#allocation5 + $0x5d0] sm:$0xff]
    %v384 = vld [vmem:[#allocation5 + $0x5d8] sm:$0xf]
    %v385 = vld [vmem:[#allocation5 + $0x5dc] sm:$0xff]
    %v386 = vld [vmem:[#allocation5 + $0x5e4] sm:$0xff]
    %v387 = vld [vmem:[#allocation5 + $0x5ec] sm:$0xf]
    %v388 = vld [vmem:[#allocation5 + $0x5f0] sm:$0xff]
    %v389 = vld [vmem:[#allocation5 + $0x5f8] sm:$0xff]
    %v390 = vld [vmem:[#allocation5 + $0x600] sm:$0xf]
    %v391 = vld [vmem:[#allocation5 + $0x604] sm:$0xff]
    %v392 = vld [vmem:[#allocation5 + $0x60c] sm:$0xff]
    %v393 = vld [vmem:[#allocation5 + $0x614] sm:$0xf]
    %v394 = vld [vmem:[#allocation5 + $0x618] sm:$0xff]
    %v395 = vld [vmem:[#allocation5 + $0x620] sm:$0xff]
    %v396 = vld [vmem:[#allocation5 + $0x628] sm:$0xf]
    %v397 = vld [vmem:[#allocation5 + $0x62c] sm:$0xff]
    %v398 = vld [vmem:[#allocation5 + $0x634] sm:$0xff]
    %v399 = vld [vmem:[#allocation5 + $0x63c] sm:$0xf]
    %v400 = vld [vmem:[#allocation5 + $0x640] sm:$0xff]
    %v401 = vld [vmem:[#allocation5 + $0x648] sm:$0xff]
    %v402 = vld [vmem:[#allocation5 + $0x650] sm:$0xf]
    %v403 = vld [vmem:[#allocation5 + $0x654] sm:$0xff]
    %v404 = vld [vmem:[#allocation5 + $0x65c] sm:$0xff]
    %v405 = vld [vmem:[#allocation5 + $0x664] sm:$0xf]
    %v406 = vld [vmem:[#allocation5 + $0x668] sm:$0xff]
    %v407 = vld [vmem:[#allocation5 + $0x670] sm:$0xff]
    %v408 = vld [vmem:[#allocation5 + $0x678] sm:$0xf]
    %v409 = vld [vmem:[#allocation5 + $0x67c] sm:$0xff]
    %v410 = vld [vmem:[#allocation5 + $0x684] sm:$0xff]
    %v411 = vld [vmem:[#allocation5 + $0x68c] sm:$0xf]
    %v412 = vld [vmem:[#allocation5 + $0x690] sm:$0xff]
    %v413 = vld [vmem:[#allocation5 + $0x698] sm:$0xff]
    %v414 = vld [vmem:[#allocation5 + $0x6a0] sm:$0xf]
    %v415 = vld [vmem:[#allocation5 + $0x6a4] sm:$0xff]
    %v416 = vld [vmem:[#allocation5 + $0x6ac] sm:$0xff]
    %v417 = vld [vmem:[#allocation5 + $0x6b4] sm:$0xf]
    %v418 = vld [vmem:[#allocation5 + $0x6b8] sm:$0xff]
    %v419 = vld [vmem:[#allocation5 + $0x6c0] sm:$0xff]
    %v420 = vld [vmem:[#allocation5 + $0x6c8] sm:$0xf]
    %v421 = vld [vmem:[#allocation5 + $0x6cc] sm:$0xff]
    %v422 = vld [vmem:[#allocation5 + $0x6d4] sm:$0xff]
    %v423 = vld [vmem:[#allocation5 + $0x6dc] sm:$0xf]
    %v424 = vld [vmem:[#allocation5 + $0x6e0] sm:$0xff]
    %v425 = vld [vmem:[#allocation5 + $0x6e8] sm:$0xff]
    %v426 = vld [vmem:[#allocation5 + $0x6f0] sm:$0xf]
    %v427 = vld [vmem:[#allocation5 + $0x6f4] sm:$0xff]
    %v428 = vld [vmem:[#allocation5 + $0x6fc] sm:$0xff]
    %v429 = vld [vmem:[#allocation5 + $0x704] sm:$0xf]
    %v430 = vld [vmem:[#allocation5 + $0x708] sm:$0xff]
    %v431 = vld [vmem:[#allocation5 + $0x710] sm:$0xff]
    %v432 = vld [vmem:[#allocation5 + $0x718] sm:$0xf]
    %v433 = vld [vmem:[#allocation5 + $0x71c] sm:$0xff]
    %v434 = vld [vmem:[#allocation5 + $0x724] sm:$0xff]
    %v435 = vld [vmem:[#allocation5 + $0x72c] sm:$0xf]
    %v436 = vld [vmem:[#allocation5 + $0x730] sm:$0xff]
    %v437 = vld [vmem:[#allocation5 + $0x738] sm:$0xff]
    %v438 = vld [vmem:[#allocation5 + $0x740] sm:$0xf]
    %v439 = vld [vmem:[#allocation5 + $0x744] sm:$0xff]
    %v440 = vld [vmem:[#allocation5 + $0x74c] sm:$0xff]
    %v441 = vld [vmem:[#allocation5 + $0x754] sm:$0xf]
    %v442 = vld [vmem:[#allocation5 + $0x758] sm:$0xff]
    %v443 = vld [vmem:[#allocation5 + $0x760] sm:$0xff]
    %v444 = vld [vmem:[#allocation5 + $0x768] sm:$0xf]
    %v445 = vld [vmem:[#allocation5 + $0x76c] sm:$0xff]
    %v446 = vld [vmem:[#allocation5 + $0x774] sm:$0xff]
    %v447 = vld [vmem:[#allocation5 + $0x77c] sm:$0xf]
    %v448 = vld [vmem:[#allocation5 + $0x780] sm:$0xff]
    %v449 = vld [vmem:[#allocation5 + $0x788] sm:$0xff]
    %v450 = vld [vmem:[#allocation5 + $0x790] sm:$0xf]
    %v451 = vld [vmem:[#allocation5 + $0x794] sm:$0xff]
    %v452 = vld [vmem:[#allocation5 + $0x79c] sm:$0xff]
    %v453 = vld [vmem:[#allocation5 + $0x7a4] sm:$0xf]
    %v454 = vld [vmem:[#allocation7] sm:$0x1f]
    %v456 = vlaneseq
    %v457 = vshrl.u32 %v456, 7
    %v458 = vsub.s32 0, %v457
    %v459 = vrot.slane %v454, %v458
    %v460 = vlaneseq
    %v461 = vshrl.u32 %v460, 7
    %v462 = vsub.s32 1, %v461
    %v463 = vrot.slane %v454, %v462
    %v464 = vlaneseq
    %v465 = vshrl.u32 %v464, 7
    %v466 = vsub.s32 2, %v465
    %v467 = vrot.slane %v454, %v466
    %v468 = vlaneseq
    %v469 = vshrl.u32 %v468, 7
    %v470 = vsub.s32 3, %v469
    %v471 = vrot.slane %v454, %v470
    %v472 = vlaneseq
    %v473 = vshrl.u32 %v472, 7
    %v474 = vsub.s32 4, %v473
    %v475 = vrot.slane %v454, %v474
    %v775 = vunpack.c.l.b16 %v160
    %v776 = vunpack.c.h.b16 %v160
    %v777 = vunpack.c.l.b16 %v161
    %v778 = vunpack.c.h.b16 %v161
    %v779 = vunpack.c.l.b16 %v162
    %v780 = vunpack.c.l.b16 %v163
    %v781 = vunpack.c.h.b16 %v163
    %v782 = vunpack.c.l.b16 %v164
    %v783 = vunpack.c.h.b16 %v164
    %v784 = vunpack.c.l.b16 %v165
    %v785 = vunpack.c.l.b16 %v166
    %v786 = vunpack.c.h.b16 %v166
    %v787 = vunpack.c.l.b16 %v167
    %v788 = vunpack.c.h.b16 %v167
    %v789 = vunpack.c.l.b16 %v168
    %v790 = vunpack.c.l.b16 %v169
    %v791 = vunpack.c.h.b16 %v169
    %v792 = vunpack.c.l.b16 %v170
    %v793 = vunpack.c.h.b16 %v170
    %v794 = vunpack.c.l.b16 %v171
    %v795 = vunpack.c.l.b16 %v172
    %v796 = vunpack.c.h.b16 %v172
    %v797 = vunpack.c.l.b16 %v173
    %v798 = vunpack.c.h.b16 %v173
    %v799 = vunpack.c.l.b16 %v174
    %v800 = vunpack.c.l.b16 %v175
    %v801 = vunpack.c.h.b16 %v175
    %v802 = vunpack.c.l.b16 %v176
    %v803 = vunpack.c.h.b16 %v176
    %v804 = vunpack.c.l.b16 %v177
    %v805 = vunpack.c.l.b16 %v178
    %v806 = vunpack.c.h.b16 %v178
    %v807 = vunpack.c.l.b16 %v179
    %v808 = vunpack.c.h.b16 %v179
    %v809 = vunpack.c.l.b16 %v180
    %v810 = vunpack.c.l.b16 %v181
    %v811 = vunpack.c.h.b16 %v181
    %v812 = vunpack.c.l.b16 %v182
    %v813 = vunpack.c.h.b16 %v182
    %v814 = vunpack.c.l.b16 %v183
    %v815 = vunpack.c.l.b16 %v184
    %v816 = vunpack.c.h.b16 %v184
    %v817 = vunpack.c.l.b16 %v185
    %v818 = vunpack.c.h.b16 %v185
    %v819 = vunpack.c.l.b16 %v186
    %v820 = vunpack.c.l.b16 %v187
    %v821 = vunpack.c.h.b16 %v187
    %v822 = vunpack.c.l.b16 %v188
    %v823 = vunpack.c.h.b16 %v188
    %v824 = vunpack.c.l.b16 %v189
    %v825 = vunpack.c.l.b16 %v190
    %v826 = vunpack.c.h.b16 %v190
    %v827 = vunpack.c.l.b16 %v191
    %v828 = vunpack.c.h.b16 %v191
    %v829 = vunpack.c.l.b16 %v192
    %v830 = vunpack.c.l.b16 %v193
    %v831 = vunpack.c.h.b16 %v193
    %v832 = vunpack.c.l.b16 %v194
    %v833 = vunpack.c.h.b16 %v194
    %v834 = vunpack.c.l.b16 %v195
    %v835 = vunpack.c.l.b16 %v196
    %v836 = vunpack.c.h.b16 %v196
    %v837 = vunpack.c.l.b16 %v197
    %v838 = vunpack.c.h.b16 %v197
    %v839 = vunpack.c.l.b16 %v198
    %v840 = vunpack.c.l.b16 %v199
    %v841 = vunpack.c.h.b16 %v199
    %v842 = vunpack.c.l.b16 %v200
    %v843 = vunpack.c.h.b16 %v200
    %v844 = vunpack.c.l.b16 %v201
    %v845 = vunpack.c.l.b16 %v202
    %v846 = vunpack.c.h.b16 %v202
    %v847 = vunpack.c.l.b16 %v203
    %v848 = vunpack.c.h.b16 %v203
    %v849 = vunpack.c.l.b16 %v204
    %v850 = vunpack.c.l.b16 %v205
    %v851 = vunpack.c.h.b16 %v205
    %v852 = vunpack.c.l.b16 %v206
    %v853 = vunpack.c.h.b16 %v206
    %v854 = vunpack.c.l.b16 %v207
    %v855 = vunpack.c.l.b16 %v208
    %v856 = vunpack.c.h.b16 %v208
    %v857 = vunpack.c.l.b16 %v209
    %v858 = vunpack.c.h.b16 %v209
    %v859 = vunpack.c.l.b16 %v210
    %v860 = vunpack.c.l.b16 %v211
    %v861 = vunpack.c.h.b16 %v211
    %v862 = vunpack.c.l.b16 %v212
    %v863 = vunpack.c.h.b16 %v212
    %v864 = vunpack.c.l.b16 %v213
    %v865 = vunpack.c.l.b16 %v214
    %v866 = vunpack.c.h.b16 %v214
    %v867 = vunpack.c.l.b16 %v215
    %v868 = vunpack.c.h.b16 %v215
    %v869 = vunpack.c.l.b16 %v216
    %v870 = vunpack.c.l.b16 %v217
    %v871 = vunpack.c.h.b16 %v217
    %v872 = vunpack.c.l.b16 %v218
    %v873 = vunpack.c.h.b16 %v218
    %v874 = vunpack.c.l.b16 %v219
    %v875 = vunpack.c.l.b16 %v220
    %v876 = vunpack.c.h.b16 %v220
    %v877 = vunpack.c.l.b16 %v221
    %v878 = vunpack.c.h.b16 %v221
    %v879 = vunpack.c.l.b16 %v222
    %v880 = vunpack.c.l.b16 %v223
    %v881 = vunpack.c.h.b16 %v223
    %v882 = vunpack.c.l.b16 %v224
    %v883 = vunpack.c.h.b16 %v224
    %v884 = vunpack.c.l.b16 %v225
    %v885 = vunpack.c.l.b16 %v226
    %v886 = vunpack.c.h.b16 %v226
    %v887 = vunpack.c.l.b16 %v227
    %v888 = vunpack.c.h.b16 %v227
    %v889 = vunpack.c.l.b16 %v228
    %v890 = vunpack.c.l.b16 %v229
    %v891 = vunpack.c.h.b16 %v229
    %v892 = vunpack.c.l.b16 %v230
    %v893 = vunpack.c.h.b16 %v230
    %v894 = vunpack.c.l.b16 %v231
    %v895 = vunpack.c.l.b16 %v232
    %v896 = vunpack.c.h.b16 %v232
    %v897 = vunpack.c.l.b16 %v233
    %v898 = vunpack.c.h.b16 %v233
    %v899 = vunpack.c.l.b16 %v234
    %v900 = vunpack.c.l.b16 %v235
    %v901 = vunpack.c.h.b16 %v235
    %v902 = vunpack.c.l.b16 %v236
    %v903 = vunpack.c.h.b16 %v236
    %v904 = vunpack.c.l.b16 %v237
    %v905 = vunpack.c.l.b16 %v238
    %v906 = vunpack.c.h.b16 %v238
    %v907 = vunpack.c.l.b16 %v239
    %v908 = vunpack.c.h.b16 %v239
    %v909 = vunpack.c.l.b16 %v240
    %v910 = vunpack.c.l.b16 %v241
    %v911 = vunpack.c.h.b16 %v241
    %v912 = vunpack.c.l.b16 %v242
    %v913 = vunpack.c.h.b16 %v242
    %v914 = vunpack.c.l.b16 %v243
    %v915 = vunpack.c.l.b16 %v244
    %v916 = vunpack.c.h.b16 %v244
    %v917 = vunpack.c.l.b16 %v245
    %v918 = vunpack.c.h.b16 %v245
    %v919 = vunpack.c.l.b16 %v246
    %v920 = vunpack.c.l.b16 %v247
    %v921 = vunpack.c.h.b16 %v247
    %v922 = vunpack.c.l.b16 %v248
    %v923 = vunpack.c.h.b16 %v248
    %v924 = vunpack.c.l.b16 %v249
    %v925 = vunpack.c.l.b16 %v250
    %v926 = vunpack.c.h.b16 %v250
    %v927 = vunpack.c.l.b16 %v251
    %v928 = vunpack.c.h.b16 %v251
    %v929 = vunpack.c.l.b16 %v252
    %v930 = vunpack.c.l.b16 %v253
    %v931 = vunpack.c.h.b16 %v253
    %v932 = vunpack.c.l.b16 %v254
    %v933 = vunpack.c.h.b16 %v254
    %v934 = vunpack.c.l.b16 %v255
    %v935 = vunpack.c.l.b16 %v256
    %v936 = vunpack.c.h.b16 %v256
    %v937 = vunpack.c.l.b16 %v257
    %v938 = vunpack.c.h.b16 %v257
    %v939 = vunpack.c.l.b16 %v258
    %v940 = vunpack.c.l.b16 %v259
    %v941 = vunpack.c.h.b16 %v259
    %v942 = vunpack.c.l.b16 %v260
    %v943 = vunpack.c.h.b16 %v260
    %v944 = vunpack.c.l.b16 %v261
    %v945 = vunpack.c.l.b16 %v262
    %v946 = vunpack.c.h.b16 %v262
    %v947 = vunpack.c.l.b16 %v263
    %v948 = vunpack.c.h.b16 %v263
    %v949 = vunpack.c.l.b16 %v264
    %v950 = vunpack.c.l.b16 %v265
    %v951 = vunpack.c.h.b16 %v265
    %v952 = vunpack.c.l.b16 %v266
    %v953 = vunpack.c.h.b16 %v266
    %v954 = vunpack.c.l.b16 %v267
    %v955 = vunpack.c.l.b16 %v268
    %v956 = vunpack.c.h.b16 %v268
    %v957 = vunpack.c.l.b16 %v269
    %v958 = vunpack.c.h.b16 %v269
    %v959 = vunpack.c.l.b16 %v270
    %v960 = vunpack.c.l.b16 %v271
    %v961 = vunpack.c.h.b16 %v271
    %v962 = vunpack.c.l.b16 %v272
    %v963 = vunpack.c.h.b16 %v272
    %v964 = vunpack.c.l.b16 %v273
    %v965 = vunpack.c.l.b16 %v274
    %v966 = vunpack.c.h.b16 %v274
    %v967 = vunpack.c.l.b16 %v275
    %v968 = vunpack.c.h.b16 %v275
    %v969 = vunpack.c.l.b16 %v276
    %v970 = vunpack.c.l.b16 %v277
    %v971 = vunpack.c.h.b16 %v277
    %v972 = vunpack.c.l.b16 %v278
    %v973 = vunpack.c.h.b16 %v278
    %v974 = vunpack.c.l.b16 %v279
    %v975 = vunpack.c.l.b16 %v280
    %v976 = vunpack.c.h.b16 %v280
    %v977 = vunpack.c.l.b16 %v281
    %v978 = vunpack.c.h.b16 %v281
    %v979 = vunpack.c.l.b16 %v282
    %v980 = vunpack.c.l.b16 %v283
    %v981 = vunpack.c.h.b16 %v283
    %v982 = vunpack.c.l.b16 %v284
    %v983 = vunpack.c.h.b16 %v284
    %v984 = vunpack.c.l.b16 %v285
    %v985 = vunpack.c.l.b16 %v286
    %v986 = vunpack.c.h.b16 %v286
    %v987 = vunpack.c.l.b16 %v287
    %v988 = vunpack.c.h.b16 %v287
    %v989 = vunpack.c.l.b16 %v288
    %v990 = vunpack.c.l.b16 %v289
    %v991 = vunpack.c.h.b16 %v289
    %v992 = vunpack.c.l.b16 %v290
    %v993 = vunpack.c.h.b16 %v290
    %v994 = vunpack.c.l.b16 %v291
    %v995 = vunpack.c.l.b16 %v292
    %v996 = vunpack.c.h.b16 %v292
    %v997 = vunpack.c.l.b16 %v293
    %v998 = vunpack.c.h.b16 %v293
    %v999 = vunpack.c.l.b16 %v294
    %v1000 = vunpack.c.l.b16 %v295
    %v1001 = vunpack.c.h.b16 %v295
    %v1002 = vunpack.c.l.b16 %v296
    %v1003 = vunpack.c.h.b16 %v296
    %v1004 = vunpack.c.l.b16 %v297
    %v1005 = vunpack.c.l.b16 %v298
    %v1006 = vunpack.c.h.b16 %v298
    %v1007 = vunpack.c.l.b16 %v299
    %v1008 = vunpack.c.h.b16 %v299
    %v1009 = vunpack.c.l.b16 %v300
    %v1010 = vunpack.c.l.b16 %v301
    %v1011 = vunpack.c.h.b16 %v301
    %v1012 = vunpack.c.l.b16 %v302
    %v1013 = vunpack.c.h.b16 %v302
    %v1014 = vunpack.c.l.b16 %v303
    %v1015 = vunpack.c.l.b16 %v304
    %v1016 = vunpack.c.h.b16 %v304
    %v1017 = vunpack.c.l.b16 %v305
    %v1018 = vunpack.c.h.b16 %v305
    %v1019 = vunpack.c.l.b16 %v306
    %v1020 = vunpack.c.l.b16 %v307
    %v1021 = vunpack.c.h.b16 %v307
    %v1022 = vunpack.c.l.b16 %v308
    %v1023 = vunpack.c.h.b16 %v308
    %v1024 = vunpack.c.l.b16 %v309
    %v1025 = vunpack.c.l.b16 %v310
    %v1026 = vunpack.c.h.b16 %v310
    %v1027 = vunpack.c.l.b16 %v311
    %v1028 = vunpack.c.h.b16 %v311
    %v1029 = vunpack.c.l.b16 %v312
    %v1030 = vunpack.c.l.b16 %v313
    %v1031 = vunpack.c.h.b16 %v313
    %v1032 = vunpack.c.l.b16 %v314
    %v1033 = vunpack.c.h.b16 %v314
    %v1034 = vunpack.c.l.b16 %v315
    %v1035 = vunpack.c.l.b16 %v316
    %v1036 = vunpack.c.h.b16 %v316
    %v1037 = vunpack.c.l.b16 %v317
    %v1038 = vunpack.c.h.b16 %v317
    %v1039 = vunpack.c.l.b16 %v318
    %v1040 = vunpack.c.l.b16 %v319
    %v1041 = vunpack.c.h.b16 %v319
    %v1042 = vunpack.c.l.b16 %v320
    %v1043 = vunpack.c.h.b16 %v320
    %v1044 = vunpack.c.l.b16 %v321
    %v1045 = vunpack.c.l.b16 %v322
    %v1046 = vunpack.c.h.b16 %v322
    %v1047 = vunpack.c.l.b16 %v323
    %v1048 = vunpack.c.h.b16 %v323
    %v1049 = vunpack.c.l.b16 %v324
    %v1050 = vunpack.c.l.b16 %v325
    %v1051 = vunpack.c.h.b16 %v325
    %v1052 = vunpack.c.l.b16 %v326
    %v1053 = vunpack.c.h.b16 %v326
    %v1054 = vunpack.c.l.b16 %v327
    %v1055 = vunpack.c.l.b16 %v328
    %v1056 = vunpack.c.h.b16 %v328
    %v1057 = vunpack.c.l.b16 %v329
    %v1058 = vunpack.c.h.b16 %v329
    %v1059 = vunpack.c.l.b16 %v330
    %v1060 = vunpack.c.l.b16 %v331
    %v1061 = vunpack.c.h.b16 %v331
    %v1062 = vunpack.c.l.b16 %v332
    %v1063 = vunpack.c.h.b16 %v332
    %v1064 = vunpack.c.l.b16 %v333
    %v1065 = vunpack.c.l.b16 %v334
    %v1066 = vunpack.c.h.b16 %v334
    %v1067 = vunpack.c.l.b16 %v335
    %v1068 = vunpack.c.h.b16 %v335
    %v1069 = vunpack.c.l.b16 %v336
    %v1070 = vunpack.c.l.b16 %v337
    %v1071 = vunpack.c.h.b16 %v337
    %v1072 = vunpack.c.l.b16 %v338
    %v1073 = vunpack.c.h.b16 %v338
    %v1074 = vunpack.c.l.b16 %v339
    %v1075 = vunpack.c.l.b16 %v340
    %v1076 = vunpack.c.h.b16 %v340
    %v1077 = vunpack.c.l.b16 %v341
    %v1078 = vunpack.c.h.b16 %v341
    %v1079 = vunpack.c.l.b16 %v342
    %v1080 = vunpack.c.l.b16 %v343
    %v1081 = vunpack.c.h.b16 %v343
    %v1082 = vunpack.c.l.b16 %v344
    %v1083 = vunpack.c.h.b16 %v344
    %v1084 = vunpack.c.l.b16 %v345
    %v1085 = vunpack.c.l.b16 %v346
    %v1086 = vunpack.c.h.b16 %v346
    %v1087 = vunpack.c.l.b16 %v347
    %v1088 = vunpack.c.h.b16 %v347
    %v1089 = vunpack.c.l.b16 %v348
    %v1090 = vunpack.c.l.b16 %v349
    %v1091 = vunpack.c.h.b16 %v349
    %v1092 = vunpack.c.l.b16 %v350
    %v1093 = vunpack.c.h.b16 %v350
    %v1094 = vunpack.c.l.b16 %v351
    %v1095 = vunpack.c.l.b16 %v352
    %v1096 = vunpack.c.h.b16 %v352
    %v1097 = vunpack.c.l.b16 %v353
    %v1098 = vunpack.c.h.b16 %v353
    %v1099 = vunpack.c.l.b16 %v354
    %v1100 = vunpack.c.l.b16 %v355
    %v1101 = vunpack.c.h.b16 %v355
    %v1102 = vunpack.c.l.b16 %v356
    %v1103 = vunpack.c.h.b16 %v356
    %v1104 = vunpack.c.l.b16 %v357
    %v1105 = vunpack.c.l.b16 %v358
    %v1106 = vunpack.c.h.b16 %v358
    %v1107 = vunpack.c.l.b16 %v359
    %v1108 = vunpack.c.h.b16 %v359
    %v1109 = vunpack.c.l.b16 %v360
    %v1110 = vunpack.c.l.b16 %v361
    %v1111 = vunpack.c.h.b16 %v361
    %v1112 = vunpack.c.l.b16 %v362
    %v1113 = vunpack.c.h.b16 %v362
    %v1114 = vunpack.c.l.b16 %v363
    %v1115 = vunpack.c.l.b16 %v364
    %v1116 = vunpack.c.h.b16 %v364
    %v1117 = vunpack.c.l.b16 %v365
    %v1118 = vunpack.c.h.b16 %v365
    %v1119 = vunpack.c.l.b16 %v366
    %v1120 = vunpack.c.l.b16 %v367
    %v1121 = vunpack.c.h.b16 %v367
    %v1122 = vunpack.c.l.b16 %v368
    %v1123 = vunpack.c.h.b16 %v368
    %v1124 = vunpack.c.l.b16 %v369
    %v1125 = vunpack.c.l.b16 %v370
    %v1126 = vunpack.c.h.b16 %v370
    %v1127 = vunpack.c.l.b16 %v371
    %v1128 = vunpack.c.h.b16 %v371
    %v1129 = vunpack.c.l.b16 %v372
    %v1130 = vunpack.c.l.b16 %v373
    %v1131 = vunpack.c.h.b16 %v373
    %v1132 = vunpack.c.l.b16 %v374
    %v1133 = vunpack.c.h.b16 %v374
    %v1134 = vunpack.c.l.b16 %v375
    %v1135 = vunpack.c.l.b16 %v376
    %v1136 = vunpack.c.h.b16 %v376
    %v1137 = vunpack.c.l.b16 %v377
    %v1138 = vunpack.c.h.b16 %v377
    %v1139 = vunpack.c.l.b16 %v378
    %v1140 = vunpack.c.l.b16 %v379
    %v1141 = vunpack.c.h.b16 %v379
    %v1142 = vunpack.c.l.b16 %v380
    %v1143 = vunpack.c.h.b16 %v380
    %v1144 = vunpack.c.l.b16 %v381
    %v1145 = vunpack.c.l.b16 %v382
    %v1146 = vunpack.c.h.b16 %v382
    %v1147 = vunpack.c.l.b16 %v383
    %v1148 = vunpack.c.h.b16 %v383
    %v1149 = vunpack.c.l.b16 %v384
    %v1150 = vunpack.c.l.b16 %v385
    %v1151 = vunpack.c.h.b16 %v385
    %v1152 = vunpack.c.l.b16 %v386
    %v1153 = vunpack.c.h.b16 %v386
    %v1154 = vunpack.c.l.b16 %v387
    %v1155 = vunpack.c.l.b16 %v388
    %v1156 = vunpack.c.h.b16 %v388
    %v1157 = vunpack.c.l.b16 %v389
    %v1158 = vunpack.c.h.b16 %v389
    %v1159 = vunpack.c.l.b16 %v390
    %v1160 = vunpack.c.l.b16 %v391
    %v1161 = vunpack.c.h.b16 %v391
    %v1162 = vunpack.c.l.b16 %v392
    %v1163 = vunpack.c.h.b16 %v392
    %v1164 = vunpack.c.l.b16 %v393
    %v1165 = vunpack.c.l.b16 %v394
    %v1166 = vunpack.c.h.b16 %v394
    %v1167 = vunpack.c.l.b16 %v395
    %v1168 = vunpack.c.h.b16 %v395
    %v1169 = vunpack.c.l.b16 %v396
    %v1170 = vunpack.c.l.b16 %v397
    %v1171 = vunpack.c.h.b16 %v397
    %v1172 = vunpack.c.l.b16 %v398
    %v1173 = vunpack.c.h.b16 %v398
    %v1174 = vunpack.c.l.b16 %v399
    %v1175 = vunpack.c.l.b16 %v400
    %v1176 = vunpack.c.h.b16 %v400
    %v1177 = vunpack.c.l.b16 %v401
    %v1178 = vunpack.c.h.b16 %v401
    %v1179 = vunpack.c.l.b16 %v402
    %v1180 = vunpack.c.l.b16 %v403
    %v1181 = vunpack.c.h.b16 %v403
    %v1182 = vunpack.c.l.b16 %v404
    %v1183 = vunpack.c.h.b16 %v404
    %v1184 = vunpack.c.l.b16 %v405
    %v1185 = vunpack.c.l.b16 %v406
    %v1186 = vunpack.c.h.b16 %v406
    %v1187 = vunpack.c.l.b16 %v407
    %v1188 = vunpack.c.h.b16 %v407
    %v1189 = vunpack.c.l.b16 %v408
    %v1190 = vunpack.c.l.b16 %v409
    %v1191 = vunpack.c.h.b16 %v409
    %v1192 = vunpack.c.l.b16 %v410
    %v1193 = vunpack.c.h.b16 %v410
    %v1194 = vunpack.c.l.b16 %v411
    %v1195 = vunpack.c.l.b16 %v412
    %v1196 = vunpack.c.h.b16 %v412
    %v1197 = vunpack.c.l.b16 %v413
    %v1198 = vunpack.c.h.b16 %v413
    %v1199 = vunpack.c.l.b16 %v414
    %v1200 = vunpack.c.l.b16 %v415
    %v1201 = vunpack.c.h.b16 %v415
    %v1202 = vunpack.c.l.b16 %v416
    %v1203 = vunpack.c.h.b16 %v416
    %v1204 = vunpack.c.l.b16 %v417
    %v1205 = vunpack.c.l.b16 %v418
    %v1206 = vunpack.c.h.b16 %v418
    %v1207 = vunpack.c.l.b16 %v419
    %v1208 = vunpack.c.h.b16 %v419
    %v1209 = vunpack.c.l.b16 %v420
    %v1210 = vunpack.c.l.b16 %v421
    %v1211 = vunpack.c.h.b16 %v421
    %v1212 = vunpack.c.l.b16 %v422
    %v1213 = vunpack.c.h.b16 %v422
    %v1214 = vunpack.c.l.b16 %v423
    %v1215 = vunpack.c.l.b16 %v424
    %v1216 = vunpack.c.h.b16 %v424
    %v1217 = vunpack.c.l.b16 %v425
    %v1218 = vunpack.c.h.b16 %v425
    %v1219 = vunpack.c.l.b16 %v426
    %v1220 = vunpack.c.l.b16 %v427
    %v1221 = vunpack.c.h.b16 %v427
    %v1222 = vunpack.c.l.b16 %v428
    %v1223 = vunpack.c.h.b16 %v428
    %v1224 = vunpack.c.l.b16 %v429
    %v1225 = vunpack.c.l.b16 %v430
    %v1226 = vunpack.c.h.b16 %v430
    %v1227 = vunpack.c.l.b16 %v431
    %v1228 = vunpack.c.h.b16 %v431
    %v1229 = vunpack.c.l.b16 %v432
    %v1230 = vunpack.c.l.b16 %v433
    %v1231 = vunpack.c.h.b16 %v433
    %v1232 = vunpack.c.l.b16 %v434
    %v1233 = vunpack.c.h.b16 %v434
    %v1234 = vunpack.c.l.b16 %v435
    %v1235 = vunpack.c.l.b16 %v436
    %v1236 = vunpack.c.h.b16 %v436
    %v1237 = vunpack.c.l.b16 %v437
    %v1238 = vunpack.c.h.b16 %v437
    %v1239 = vunpack.c.l.b16 %v438
    %v1240 = vunpack.c.l.b16 %v439
    %v1241 = vunpack.c.h.b16 %v439
    %v1242 = vunpack.c.l.b16 %v440
    %v1243 = vunpack.c.h.b16 %v440
    %v1244 = vunpack.c.l.b16 %v441
    %v1245 = vunpack.c.l.b16 %v442
    %v1246 = vunpack.c.h.b16 %v442
    %v1247 = vunpack.c.l.b16 %v443
    %v1248 = vunpack.c.h.b16 %v443
    %v1249 = vunpack.c.l.b16 %v444
    %v1250 = vunpack.c.l.b16 %v445
    %v1251 = vunpack.c.h.b16 %v445
    %v1252 = vunpack.c.l.b16 %v446
    %v1253 = vunpack.c.h.b16 %v446
    %v1254 = vunpack.c.l.b16 %v447
    %v1255 = vunpack.c.l.b16 %v448
    %v1256 = vunpack.c.h.b16 %v448
    %v1257 = vunpack.c.l.b16 %v449
    %v1258 = vunpack.c.h.b16 %v449
    %v1259 = vunpack.c.l.b16 %v450
    %v1260 = vunpack.c.l.b16 %v451
    %v1261 = vunpack.c.h.b16 %v451
    %v1262 = vunpack.c.l.b16 %v452
    %v1263 = vunpack.c.h.b16 %v452
    %v1264 = vunpack.c.l.b16 %v453
    %v1265 = vpack.c.b16 %v780, %v775
    %v1266 = vpack.c.b16 %v781, %v776
    %v1267 = vpack.c.b16 %v782, %v777
    %v1268 = vpack.c.b16 %v783, %v778
    %v1269 = vpack.c.b16 %v784, %v779
    %v1270 = vpack.c.b16 %v790, %v785
    %v1271 = vpack.c.b16 %v791, %v786
    %v1272 = vpack.c.b16 %v792, %v787
    %v1273 = vpack.c.b16 %v793, %v788
    %v1274 = vpack.c.b16 %v794, %v789
    %v1275 = vpack.c.b16 %v800, %v795
    %v1276 = vpack.c.b16 %v801, %v796
    %v1277 = vpack.c.b16 %v802, %v797
    %v1278 = vpack.c.b16 %v803, %v798
    %v1279 = vpack.c.b16 %v804, %v799
    %v1280 = vpack.c.b16 %v810, %v805
    %v1281 = vpack.c.b16 %v811, %v806
    %v1282 = vpack.c.b16 %v812, %v807
    %v1283 = vpack.c.b16 %v813, %v808
    %v1284 = vpack.c.b16 %v814, %v809
    %v1285 = vpack.c.b16 %v820, %v815
    %v1286 = vpack.c.b16 %v821, %v816
    %v1287 = vpack.c.b16 %v822, %v817
    %v1288 = vpack.c.b16 %v823, %v818
    %v1289 = vpack.c.b16 %v824, %v819
    %v1290 = vpack.c.b16 %v830, %v825
    %v1291 = vpack.c.b16 %v831, %v826
    %v1292 = vpack.c.b16 %v832, %v827
    %v1293 = vpack.c.b16 %v833, %v828
    %v1294 = vpack.c.b16 %v834, %v829
    %v1295 = vpack.c.b16 %v840, %v835
    %v1296 = vpack.c.b16 %v841, %v836
    %v1297 = vpack.c.b16 %v842, %v837
    %v1298 = vpack.c.b16 %v843, %v838
    %v1299 = vpack.c.b16 %v844, %v839
    %v1300 = vpack.c.b16 %v850, %v845
    %v1301 = vpack.c.b16 %v851, %v846
    %v1302 = vpack.c.b16 %v852, %v847
    %v1303 = vpack.c.b16 %v853, %v848
    %v1304 = vpack.c.b16 %v854, %v849
    %v1305 = vpack.c.b16 %v860, %v855
    %v1306 = vpack.c.b16 %v861, %v856
    %v1307 = vpack.c.b16 %v862, %v857
    %v1308 = vpack.c.b16 %v863, %v858
    %v1309 = vpack.c.b16 %v864, %v859
    %v1310 = vpack.c.b16 %v870, %v865
    %v1311 = vpack.c.b16 %v871, %v866
    %v1312 = vpack.c.b16 %v872, %v867
    %v1313 = vpack.c.b16 %v873, %v868
    %v1314 = vpack.c.b16 %v874, %v869
    %v1315 = vpack.c.b16 %v880, %v875
    %v1316 = vpack.c.b16 %v881, %v876
    %v1317 = vpack.c.b16 %v882, %v877
    %v1318 = vpack.c.b16 %v883, %v878
    %v1319 = vpack.c.b16 %v884, %v879
    %v1320 = vpack.c.b16 %v890, %v885
    %v1321 = vpack.c.b16 %v891, %v886
    %v1322 = vpack.c.b16 %v892, %v887
    %v1323 = vpack.c.b16 %v893, %v888
    %v1324 = vpack.c.b16 %v894, %v889
    %v1325 = vpack.c.b16 %v900, %v895
    %v1326 = vpack.c.b16 %v901, %v896
    %v1327 = vpack.c.b16 %v902, %v897
    %v1328 = vpack.c.b16 %v903, %v898
    %v1329 = vpack.c.b16 %v904, %v899
    %v1330 = vpack.c.b16 %v910, %v905
    %v1331 = vpack.c.b16 %v911, %v906
    %v1332 = vpack.c.b16 %v912, %v907
    %v1333 = vpack.c.b16 %v913, %v908
    %v1334 = vpack.c.b16 %v914, %v909
    %v1335 = vpack.c.b16 %v920, %v915
    %v1336 = vpack.c.b16 %v921, %v916
    %v1337 = vpack.c.b16 %v922, %v917
    %v1338 = vpack.c.b16 %v923, %v918
    %v1339 = vpack.c.b16 %v924, %v919
    %v1340 = vpack.c.b16 %v930, %v925
    %v1341 = vpack.c.b16 %v931, %v926
    %v1342 = vpack.c.b16 %v932, %v927
    %v1343 = vpack.c.b16 %v933, %v928
    %v1344 = vpack.c.b16 %v934, %v929
    %v1345 = vpack.c.b16 %v940, %v935
    %v1346 = vpack.c.b16 %v941, %v936
    %v1347 = vpack.c.b16 %v942, %v937
    %v1348 = vpack.c.b16 %v943, %v938
    %v1349 = vpack.c.b16 %v944, %v939
    %v1350 = vpack.c.b16 %v950, %v945
    %v1351 = vpack.c.b16 %v951, %v946
    %v1352 = vpack.c.b16 %v952, %v947
    %v1353 = vpack.c.b16 %v953, %v948
    %v1354 = vpack.c.b16 %v954, %v949
    %v1355 = vpack.c.b16 %v960, %v955
    %v1356 = vpack.c.b16 %v961, %v956
    %v1357 = vpack.c.b16 %v962, %v957
    %v1358 = vpack.c.b16 %v963, %v958
    %v1359 = vpack.c.b16 %v964, %v959
    %v1360 = vpack.c.b16 %v970, %v965
    %v1361 = vpack.c.b16 %v971, %v966
    %v1362 = vpack.c.b16 %v972, %v967
    %v1363 = vpack.c.b16 %v973, %v968
    %v1364 = vpack.c.b16 %v974, %v969
    %v1365 = vpack.c.b16 %v980, %v975
    %v1366 = vpack.c.b16 %v981, %v976
    %v1367 = vpack.c.b16 %v982, %v977
    %v1368 = vpack.c.b16 %v983, %v978
    %v1369 = vpack.c.b16 %v984, %v979
    %v1370 = vpack.c.b16 %v990, %v985
    %v1371 = vpack.c.b16 %v991, %v986
    %v1372 = vpack.c.b16 %v992, %v987
    %v1373 = vpack.c.b16 %v993, %v988
    %v1374 = vpack.c.b16 %v994, %v989
    %v1375 = vpack.c.b16 %v1000, %v995
    %v1376 = vpack.c.b16 %v1001, %v996
    %v1377 = vpack.c.b16 %v1002, %v997
    %v1378 = vpack.c.b16 %v1003, %v998
    %v1379 = vpack.c.b16 %v1004, %v999
    %v1380 = vpack.c.b16 %v1010, %v1005
    %v1381 = vpack.c.b16 %v1011, %v1006
    %v1382 = vpack.c.b16 %v1012, %v1007
    %v1383 = vpack.c.b16 %v1013, %v1008
    %v1384 = vpack.c.b16 %v1014, %v1009
    %v1385 = vpack.c.b16 %v1020, %v1015
    %v1386 = vpack.c.b16 %v1021, %v1016
    %v1387 = vpack.c.b16 %v1022, %v1017
    %v1388 = vpack.c.b16 %v1023, %v1018
    %v1389 = vpack.c.b16 %v1024, %v1019
    %v1390 = vpack.c.b16 %v1030, %v1025
    %v1391 = vpack.c.b16 %v1031, %v1026
    %v1392 = vpack.c.b16 %v1032, %v1027
    %v1393 = vpack.c.b16 %v1033, %v1028
    %v1394 = vpack.c.b16 %v1034, %v1029
    %v1395 = vpack.c.b16 %v1040, %v1035
    %v1396 = vpack.c.b16 %v1041, %v1036
    %v1397 = vpack.c.b16 %v1042, %v1037
    %v1398 = vpack.c.b16 %v1043, %v1038
    %v1399 = vpack.c.b16 %v1044, %v1039
    %v1400 = vpack.c.b16 %v1050, %v1045
    %v1401 = vpack.c.b16 %v1051, %v1046
    %v1402 = vpack.c.b16 %v1052, %v1047
    %v1403 = vpack.c.b16 %v1053, %v1048
    %v1404 = vpack.c.b16 %v1054, %v1049
    %v1405 = vpack.c.b16 %v1060, %v1055
    %v1406 = vpack.c.b16 %v1061, %v1056
    %v1407 = vpack.c.b16 %v1062, %v1057
    %v1408 = vpack.c.b16 %v1063, %v1058
    %v1409 = vpack.c.b16 %v1064, %v1059
    %v1410 = vpack.c.b16 %v1070, %v1065
    %v1411 = vpack.c.b16 %v1071, %v1066
    %v1412 = vpack.c.b16 %v1072, %v1067
    %v1413 = vpack.c.b16 %v1073, %v1068
    %v1414 = vpack.c.b16 %v1074, %v1069
    %v1415 = vpack.c.b16 %v1080, %v1075
    %v1416 = vpack.c.b16 %v1081, %v1076
    %v1417 = vpack.c.b16 %v1082, %v1077
    %v1418 = vpack.c.b16 %v1083, %v1078
    %v1419 = vpack.c.b16 %v1084, %v1079
    %v1420 = vpack.c.b16 %v1090, %v1085
    %v1421 = vpack.c.b16 %v1091, %v1086
    %v1422 = vpack.c.b16 %v1092, %v1087
    %v1423 = vpack.c.b16 %v1093, %v1088
    %v1424 = vpack.c.b16 %v1094, %v1089
    %v1425 = vpack.c.b16 %v1100, %v1095
    %v1426 = vpack.c.b16 %v1101, %v1096
    %v1427 = vpack.c.b16 %v1102, %v1097
    %v1428 = vpack.c.b16 %v1103, %v1098
    %v1429 = vpack.c.b16 %v1104, %v1099
    %v1430 = vpack.c.b16 %v1110, %v1105
    %v1431 = vpack.c.b16 %v1111, %v1106
    %v1432 = vpack.c.b16 %v1112, %v1107
    %v1433 = vpack.c.b16 %v1113, %v1108
    %v1434 = vpack.c.b16 %v1114, %v1109
    %v1435 = vpack.c.b16 %v1120, %v1115
    %v1436 = vpack.c.b16 %v1121, %v1116
    %v1437 = vpack.c.b16 %v1122, %v1117
    %v1438 = vpack.c.b16 %v1123, %v1118
    %v1439 = vpack.c.b16 %v1124, %v1119
    %v1440 = vpack.c.b16 %v1130, %v1125
    %v1441 = vpack.c.b16 %v1131, %v1126
    %v1442 = vpack.c.b16 %v1132, %v1127
    %v1443 = vpack.c.b16 %v1133, %v1128
    %v1444 = vpack.c.b16 %v1134, %v1129
    %v1445 = vpack.c.b16 %v1140, %v1135
    %v1446 = vpack.c.b16 %v1141, %v1136
    %v1447 = vpack.c.b16 %v1142, %v1137
    %v1448 = vpack.c.b16 %v1143, %v1138
    %v1449 = vpack.c.b16 %v1144, %v1139
    %v1450 = vpack.c.b16 %v1150, %v1145
    %v1451 = vpack.c.b16 %v1151, %v1146
    %v1452 = vpack.c.b16 %v1152, %v1147
    %v1453 = vpack.c.b16 %v1153, %v1148
    %v1454 = vpack.c.b16 %v1154, %v1149
    %v1455 = vpack.c.b16 %v1160, %v1155
    %v1456 = vpack.c.b16 %v1161, %v1156
    %v1457 = vpack.c.b16 %v1162, %v1157
    %v1458 = vpack.c.b16 %v1163, %v1158
    %v1459 = vpack.c.b16 %v1164, %v1159
    %v1460 = vpack.c.b16 %v1170, %v1165
    %v1461 = vpack.c.b16 %v1171, %v1166
    %v1462 = vpack.c.b16 %v1172, %v1167
    %v1463 = vpack.c.b16 %v1173, %v1168
    %v1464 = vpack.c.b16 %v1174, %v1169
    %v1465 = vpack.c.b16 %v1180, %v1175
    %v1466 = vpack.c.b16 %v1181, %v1176
    %v1467 = vpack.c.b16 %v1182, %v1177
    %v1468 = vpack.c.b16 %v1183, %v1178
    %v1469 = vpack.c.b16 %v1184, %v1179
    %v1470 = vpack.c.b16 %v1190, %v1185
    %v1471 = vpack.c.b16 %v1191, %v1186
    %v1472 = vpack.c.b16 %v1192, %v1187
    %v1473 = vpack.c.b16 %v1193, %v1188
    %v1474 = vpack.c.b16 %v1194, %v1189
    %v1475 = vpack.c.b16 %v1200, %v1195
    %v1476 = vpack.c.b16 %v1201, %v1196
    %v1477 = vpack.c.b16 %v1202, %v1197
    %v1478 = vpack.c.b16 %v1203, %v1198
    %v1479 = vpack.c.b16 %v1204, %v1199
    %v1480 = vpack.c.b16 %v1210, %v1205
    %v1481 = vpack.c.b16 %v1211, %v1206
    %v1482 = vpack.c.b16 %v1212, %v1207
    %v1483 = vpack.c.b16 %v1213, %v1208
    %v1484 = vpack.c.b16 %v1214, %v1209
    %v1485 = vpack.c.b16 %v1220, %v1215
    %v1486 = vpack.c.b16 %v1221, %v1216
    %v1487 = vpack.c.b16 %v1222, %v1217
    %v1488 = vpack.c.b16 %v1223, %v1218
    %v1489 = vpack.c.b16 %v1224, %v1219
    %v1490 = vpack.c.b16 %v1230, %v1225
    %v1491 = vpack.c.b16 %v1231, %v1226
    %v1492 = vpack.c.b16 %v1232, %v1227
    %v1493 = vpack.c.b16 %v1233, %v1228
    %v1494 = vpack.c.b16 %v1234, %v1229
    %v1495 = vpack.c.b16 %v1240, %v1235
    %v1496 = vpack.c.b16 %v1241, %v1236
    %v1497 = vpack.c.b16 %v1242, %v1237
    %v1498 = vpack.c.b16 %v1243, %v1238
    %v1499 = vpack.c.b16 %v1244, %v1239
    %v1500 = vpack.c.b16 %v1250, %v1245
    %v1501 = vpack.c.b16 %v1251, %v1246
    %v1502 = vpack.c.b16 %v1252, %v1247
    %v1503 = vpack.c.b16 %v1253, %v1248
    %v1504 = vpack.c.b16 %v1254, %v1249
    %v1505 = vpack.c.b16 %v1260, %v1255
    %v1506 = vpack.c.b16 %v1261, %v1256
    %v1507 = vpack.c.b16 %v1262, %v1257
    %v1508 = vpack.c.b16 %v1263, %v1258
    %v1509 = vpack.c.b16 %v1264, %v1259
    %vm1755 = vcmask 130048
    %v1757 = vsel %vm1755, %v159, 0
    %1759 = vmatprep.subr.bf16.mxu0 %v1266
    %1760 = vmatpush1.bf16.msra.mxu0 %v1265
    %1761 = vmatprep.subr.bf16.mxu0 %v1271
    %1762 = vmatpush1.bf16.msra.mxu0 %v1270
    %1763 = vmatprep.subr.bf16.mxu0 %v1276
    %1764 = vmatpush1.bf16.msra.mxu0 %v1275
    %1765 = vmatprep.subr.bf16.mxu0 %v1281
    %1766 = vmatpush1.bf16.msra.mxu0 %v1280
    %1767 = vmatprep.subr.bf16.mxu0 %v1286
    %1768 = vmatpush1.bf16.msra.mxu0 %v1285
    %1769 = vmatprep.subr.bf16.mxu0 %v1291
    %1770 = vmatpush1.bf16.msra.mxu0 %v1290
    %1771 = vmatprep.subr.bf16.mxu0 %v1296
    %1772 = vmatpush1.bf16.msra.mxu0 %v1295
    %1773 = vmatprep.subr.bf16.mxu0 %v1301
    %1774 = vmatpush1.bf16.msra.mxu0 %v1300
    %1775 = vmatprep.subr.bf16.mxu0 %v1306
    %1776 = vmatpush1.bf16.msra.mxu0 %v1305
    %1777 = vmatprep.subr.bf16.mxu0 %v1311
    %1778 = vmatpush1.bf16.msra.mxu0 %v1310
    %1779 = vmatprep.subr.bf16.mxu0 %v1316
    %1780 = vmatpush1.bf16.msra.mxu0 %v1315
    %1781 = vmatprep.subr.bf16.mxu0 %v1321
    %1782 = vmatpush1.bf16.msra.mxu0 %v1320
    %1783 = vmatprep.subr.bf16.mxu0 %v1326
    %1784 = vmatpush1.bf16.msra.mxu0 %v1325
    %1785 = vmatprep.subr.bf16.mxu0 %v1331
    %1786 = vmatpush1.bf16.msra.mxu0 %v1330
    %1787 = vmatprep.subr.bf16.mxu0 %v1336
    %1788 = vmatpush1.bf16.msra.mxu0 %v1335
    %1789 = vmatprep.subr.bf16.mxu0 %v1341
    %1790 = vmatpush1.bf16.msra.mxu0 %v1340
    %1791 = vmatprep.mubr.bf16.mxu0 %v154
    %1792 = vmatmul.mubr.bf16.gmra.mrb[0].mxu0 %v153
    %v1793 = vpop.f32.mrb[0].mxu0
    %v1794 = vadd.f32 %v459, %v1793
    %v1795 = vpop.f32.mrb[0].mxu0
    %v1796 = vadd.f32 %v463, %v1795
    %v1797 = vpop.f32.mrb[0].mxu0
    %v1798 = vpop.f32.mrb[0].mxu0
    %1799 = vdwg.mxu0
    %1800 = vmatprep.subr.bf16.mxu0 %v1346
    %1801 = vmatpush1.bf16.msra.mxu0 %v1345
    %1802 = vmatprep.subr.bf16.mxu0 %v1351
    %1803 = vmatpush1.bf16.msra.mxu0 %v1350
    %1804 = vmatprep.subr.bf16.mxu0 %v1356
    %1805 = vmatpush1.bf16.msra.mxu0 %v1355
    %1806 = vmatprep.subr.bf16.mxu0 %v1361
    %1807 = vmatpush1.bf16.msra.mxu0 %v1360
    %1808 = vmatprep.subr.bf16.mxu0 %v1366
    %1809 = vmatpush1.bf16.msra.mxu0 %v1365
    %1810 = vmatprep.subr.bf16.mxu0 %v1371
    %1811 = vmatpush1.bf16.msra.mxu0 %v1370
    %1812 = vmatprep.subr.bf16.mxu0 %v1376
    %1813 = vmatpush1.bf16.msra.mxu0 %v1375
    %1814 = vmatprep.subr.bf16.mxu0 %v1381
    %1815 = vmatpush1.bf16.msra.mxu0 %v1380
    %1816 = vmatprep.subr.bf16.mxu0 %v1386
    %1817 = vmatpush1.bf16.msra.mxu0 %v1385
    %1818 = vmatprep.subr.bf16.mxu0 %v1391
    %1819 = vmatpush1.bf16.msra.mxu0 %v1390
    %1820 = vmatprep.subr.bf16.mxu0 %v1396
    %1821 = vmatpush1.bf16.msra.mxu0 %v1395
    %1822 = vmatprep.subr.bf16.mxu0 %v1401
    %1823 = vmatpush1.bf16.msra.mxu0 %v1400
    %1824 = vmatprep.subr.bf16.mxu0 %v1406
    %1825 = vmatpush1.bf16.msra.mxu0 %v1405
    %1826 = vmatprep.subr.bf16.mxu0 %v1411
    %1827 = vmatpush1.bf16.msra.mxu0 %v1410
    %1828 = vmatprep.subr.bf16.mxu0 %v1416
    %1829 = vmatpush1.bf16.msra.mxu0 %v1415
    %1830 = vmatprep.subr.bf16.mxu0 %v1421
    %1831 = vmatpush1.bf16.msra.mxu0 %v1420
    %1832 = vmatprep.mubr.bf16.mxu0 %v156
    %1833 = vmatmul.mubr.bf16.gmra.mrb[0].mxu0 %v155
    %v1834 = vpop.f32.mrb[0].mxu0
    %v1835 = vadd.f32 %v1794, %v1834
    %v1836 = vpop.f32.mrb[0].mxu0
    %v1837 = vadd.f32 %v1796, %v1836
    %v1838 = vpop.f32.mrb[0].mxu0
    %v1839 = vpop.f32.mrb[0].mxu0
    %1840 = vdwg.mxu0
    %1841 = vmatprep.subr.bf16.mxu0 %v1426
    %1842 = vmatpush1.bf16.msra.mxu0 %v1425
    %1843 = vmatprep.subr.bf16.mxu0 %v1431
    %1844 = vmatpush1.bf16.msra.mxu0 %v1430
    %1845 = vmatprep.subr.bf16.mxu0 %v1436
    %1846 = vmatpush1.bf16.msra.mxu0 %v1435
    %1847 = vmatprep.subr.bf16.mxu0 %v1441
    %1848 = vmatpush1.bf16.msra.mxu0 %v1440
    %1849 = vmatprep.subr.bf16.mxu0 %v1446
    %1850 = vmatpush1.bf16.msra.mxu0 %v1445
    %1851 = vmatprep.subr.bf16.mxu0 %v1451
    %1852 = vmatpush1.bf16.msra.mxu0 %v1450
    %1853 = vmatprep.subr.bf16.mxu0 %v1456
    %1854 = vmatpush1.bf16.msra.mxu0 %v1455
    %1855 = vmatprep.subr.bf16.mxu0 %v1461
    %1856 = vmatpush1.bf16.msra.mxu0 %v1460
    %1857 = vmatprep.subr.bf16.mxu0 %v1466
    %1858 = vmatpush1.bf16.msra.mxu0 %v1465
    %1859 = vmatprep.subr.bf16.mxu0 %v1471
    %1860 = vmatpush1.bf16.msra.mxu0 %v1470
    %1861 = vmatprep.subr.bf16.mxu0 %v1476
    %1862 = vmatpush1.bf16.msra.mxu0 %v1475
    %1863 = vmatprep.subr.bf16.mxu0 %v1481
    %1864 = vmatpush1.bf16.msra.mxu0 %v1480
    %1865 = vmatprep.subr.bf16.mxu0 %v1486
    %1866 = vmatpush1.bf16.msra.mxu0 %v1485
    %1867 = vmatprep.subr.bf16.mxu0 %v1491
    %1868 = vmatpush1.bf16.msra.mxu0 %v1490
    %1869 = vmatprep.subr.bf16.mxu0 %v1496
    %1870 = vmatpush1.bf16.msra.mxu0 %v1495
    %1871 = vmatprep.subr.bf16.mxu0 %v1501
    %1872 = vmatpush1.bf16.msra.mxu0 %v1500
    %1873 = vmatprep.mubr.bf16.mxu0 %v158
    %1874 = vmatmul.mubr.bf16.gmra.mrb[0].mxu0 %v157
    %v1875 = vpop.f32.mrb[0].mxu0
    %v1876 = vadd.f32 %v1835, %v1875
    %v1877 = vpop.f32.mrb[0].mxu0
    %v1878 = vadd.f32 %v1837, %v1877
    %v1879 = vpop.f32.mrb[0].mxu0
    %v1880 = vpop.f32.mrb[0].mxu0
    %1881 = vdwg.mxu0
    %1882 = vmatprep.subr.bf16.mxu0 %v1506
    %1883 = vmatpush1.bf16.msra.mxu0 %v1505
    %1884 = vmatprep.subr.bf16.mxu0 0
    %1885 = vmatpush1.bf16.msra.mxu0 0
    %1886 = vmatprep.subr.bf16.mxu0 0
    %1887 = vmatpush1.bf16.msra.mxu0 0
    %1888 = vmatprep.subr.bf16.mxu0 0
    %1889 = vmatpush1.bf16.msra.mxu0 0
    %1890 = vmatprep.subr.bf16.mxu0 0
    %1891 = vmatpush1.bf16.msra.mxu0 0
    %1892 = vmatprep.subr.bf16.mxu0 0
    %1893 = vmatpush1.bf16.msra.mxu0 0
    %1894 = vmatprep.subr.bf16.mxu0 0
    %1895 = vmatpush1.bf16.msra.mxu0 0
    %1896 = vmatprep.subr.bf16.mxu0 0
    %1897 = vmatpush1.bf16.msra.mxu0 0
    %1898 = vmatprep.subr.bf16.mxu0 0
    %1899 = vmatpush1.bf16.msra.mxu0 0
    %1900 = vmatprep.subr.bf16.mxu0 0
    %1901 = vmatpush1.bf16.msra.mxu0 0
    %1902 = vmatprep.subr.bf16.mxu0 0
    %1903 = vmatpush1.bf16.msra.mxu0 0
    %1904 = vmatprep.subr.bf16.mxu0 0
    %1905 = vmatpush1.bf16.msra.mxu0 0
    %1906 = vmatprep.subr.bf16.mxu0 0
    %1907 = vmatpush1.bf16.msra.mxu0 0
    %1908 = vmatprep.subr.bf16.mxu0 0
    %1909 = vmatpush1.bf16.msra.mxu0 0
    %1910 = vmatprep.subr.bf16.mxu0 0
    %1911 = vmatpush1.bf16.msra.mxu0 0
    %1912 = vmatprep.subr.bf16.mxu0 0
    %1913 = vmatpush1.bf16.msra.mxu0 0
    %1914 = vmatprep.mubr.bf16.mxu0 0
    %1915 = vmatmul.mubr.bf16.gmra.mrb[0].mxu0 %v1757
    %v1916 = vpop.f32.mrb[0].mxu0
    %v1917 = vadd.f32 %v1876, %v1916
    %v1918 = vpop.f32.mrb[0].mxu0
    %v1919 = vadd.f32 %v1878, %v1918
    %v1920 = vpop.f32.mrb[0].mxu0
    %v1921 = vpop.f32.mrb[0].mxu0
    %1922 = vdwg.mxu0
    %1923 = vmatprep.subr.bf16.mxu0 %v1268
    %1924 = vmatpush1.bf16.msra.mxu0 %v1267
    %1925 = vmatprep.subr.bf16.mxu0 %v1273
    %1926 = vmatpush1.bf16.msra.mxu0 %v1272
    %1927 = vmatprep.subr.bf16.mxu0 %v1278
    %1928 = vmatpush1.bf16.msra.mxu0 %v1277
    %1929 = vmatprep.subr.bf16.mxu0 %v1283
    %1930 = vmatpush1.bf16.msra.mxu0 %v1282
    %1931 = vmatprep.subr.bf16.mxu0 %v1288
    %1932 = vmatpush1.bf16.msra.mxu0 %v1287
    %1933 = vmatprep.subr.bf16.mxu0 %v1293
    %1934 = vmatpush1.bf16.msra.mxu0 %v1292
    %1935 = vmatprep.subr.bf16.mxu0 %v1298
    %1936 = vmatpush1.bf16.msra.mxu0 %v1297
    %1937 = vmatprep.subr.bf16.mxu0 %v1303
    %1938 = vmatpush1.bf16.msra.mxu0 %v1302
    %1939 = vmatprep.subr.bf16.mxu0 %v1308
    %1940 = vmatpush1.bf16.msra.mxu0 %v1307
    %1941 = vmatprep.subr.bf16.mxu0 %v1313
    %1942 = vmatpush1.bf16.msra.mxu0 %v1312
    %1943 = vmatprep.subr.bf16.mxu0 %v1318
    %1944 = vmatpush1.bf16.msra.mxu0 %v1317
    %1945 = vmatprep.subr.bf16.mxu0 %v1323
    %1946 = vmatpush1.bf16.msra.mxu0 %v1322
    %1947 = vmatprep.subr.bf16.mxu0 %v1328
    %1948 = vmatpush1.bf16.msra.mxu0 %v1327
    %1949 = vmatprep.subr.bf16.mxu0 %v1333
    %1950 = vmatpush1.bf16.msra.mxu0 %v1332
    %1951 = vmatprep.subr.bf16.mxu0 %v1338
    %1952 = vmatpush1.bf16.msra.mxu0 %v1337
    %1953 = vmatprep.subr.bf16.mxu0 %v1343
    %1954 = vmatpush1.bf16.msra.mxu0 %v1342
    %1955 = vmatprep.mubr.bf16.mxu0 %v154
    %1956 = vmatmul.mubr.bf16.gmra.mrb[0].mxu0 %v153
    %v1957 = vpop.f32.mrb[0].mxu0
    %v1958 = vadd.f32 %v467, %v1957
    %v1959 = vpop.f32.mrb[0].mxu0
    %v1960 = vadd.f32 %v471, %v1959
    %v1961 = vpop.f32.mrb[0].mxu0
    %v1962 = vpop.f32.mrb[0].mxu0
    %1963 = vdwg.mxu0
    %1964 = vmatprep.subr.bf16.mxu0 %v1348
    %1965 = vmatpush1.bf16.msra.mxu0 %v1347
    %1966 = vmatprep.subr.bf16.mxu0 %v1353
    %1967 = vmatpush1.bf16.msra.mxu0 %v1352
    %1968 = vmatprep.subr.bf16.mxu0 %v1358
    %1969 = vmatpush1.bf16.msra.mxu0 %v1357
    %1970 = vmatprep.subr.bf16.mxu0 %v1363
    %1971 = vmatpush1.bf16.msra.mxu0 %v1362
    %1972 = vmatprep.subr.bf16.mxu0 %v1368
    %1973 = vmatpush1.bf16.msra.mxu0 %v1367
    %1974 = vmatprep.subr.bf16.mxu0 %v1373
    %1975 = vmatpush1.bf16.msra.mxu0 %v1372
    %1976 = vmatprep.subr.bf16.mxu0 %v1378
    %1977 = vmatpush1.bf16.msra.mxu0 %v1377
    %1978 = vmatprep.subr.bf16.mxu0 %v1383
    %1979 = vmatpush1.bf16.msra.mxu0 %v1382
    %1980 = vmatprep.subr.bf16.mxu0 %v1388
    %1981 = vmatpush1.bf16.msra.mxu0 %v1387
    %1982 = vmatprep.subr.bf16.mxu0 %v1393
    %1983 = vmatpush1.bf16.msra.mxu0 %v1392
    %1984 = vmatprep.subr.bf16.mxu0 %v1398
    %1985 = vmatpush1.bf16.msra.mxu0 %v1397
    %1986 = vmatprep.subr.bf16.mxu0 %v1403
    %1987 = vmatpush1.bf16.msra.mxu0 %v1402
    %1988 = vmatprep.subr.bf16.mxu0 %v1408
    %1989 = vmatpush1.bf16.msra.mxu0 %v1407
    %1990 = vmatprep.subr.bf16.mxu0 %v1413
    %1991 = vmatpush1.bf16.msra.mxu0 %v1412
    %1992 = vmatprep.subr.bf16.mxu0 %v1418
    %1993 = vmatpush1.bf16.msra.mxu0 %v1417
    %1994 = vmatprep.subr.bf16.mxu0 %v1423
    %1995 = vmatpush1.bf16.msra.mxu0 %v1422
    %1996 = vmatprep.mubr.bf16.mxu0 %v156
    %1997 = vmatmul.mubr.bf16.gmra.mrb[0].mxu0 %v155
    %v1998 = vpop.f32.mrb[0].mxu0
    %v1999 = vadd.f32 %v1958, %v1998
    %v2000 = vpop.f32.mrb[0].mxu0
    %v2001 = vadd.f32 %v1960, %v2000
    %v2002 = vpop.f32.mrb[0].mxu0
    %v2003 = vpop.f32.mrb[0].mxu0
    %2004 = vdwg.mxu0
    %2005 = vmatprep.subr.bf16.mxu0 %v1428
    %2006 = vmatpush1.bf16.msra.mxu0 %v1427
    %2007 = vmatprep.subr.bf16.mxu0 %v1433
    %2008 = vmatpush1.bf16.msra.mxu0 %v1432
    %2009 = vmatprep.subr.bf16.mxu0 %v1438
    %2010 = vmatpush1.bf16.msra.mxu0 %v1437
    %2011 = vmatprep.subr.bf16.mxu0 %v1443
    %2012 = vmatpush1.bf16.msra.mxu0 %v1442
    %2013 = vmatprep.subr.bf16.mxu0 %v1448
    %2014 = vmatpush1.bf16.msra.mxu0 %v1447
    %2015 = vmatprep.subr.bf16.mxu0 %v1453
    %2016 = vmatpush1.bf16.msra.mxu0 %v1452
    %2017 = vmatprep.subr.bf16.mxu0 %v1458
    %2018 = vmatpush1.bf16.msra.mxu0 %v1457
    %2019 = vmatprep.subr.bf16.mxu0 %v1463
    %2020 = vmatpush1.bf16.msra.mxu0 %v1462
    %2021 = vmatprep.subr.bf16.mxu0 %v1468
    %2022 = vmatpush1.bf16.msra.mxu0 %v1467
    %2023 = vmatprep.subr.bf16.mxu0 %v1473
    %2024 = vmatpush1.bf16.msra.mxu0 %v1472
    %2025 = vmatprep.subr.bf16.mxu0 %v1478
    %2026 = vmatpush1.bf16.msra.mxu0 %v1477
    %2027 = vmatprep.subr.bf16.mxu0 %v1483
    %2028 = vmatpush1.bf16.msra.mxu0 %v1482
    %2029 = vmatprep.subr.bf16.mxu0 %v1488
    %2030 = vmatpush1.bf16.msra.mxu0 %v1487
    %2031 = vmatprep.subr.bf16.mxu0 %v1493
    %2032 = vmatpush1.bf16.msra.mxu0 %v1492
    %2033 = vmatprep.subr.bf16.mxu0 %v1498
    %2034 = vmatpush1.bf16.msra.mxu0 %v1497
    %2035 = vmatprep.subr.bf16.mxu0 %v1503
    %2036 = vmatpush1.bf16.msra.mxu0 %v1502
    %2037 = vmatprep.mubr.bf16.mxu0 %v158
    %2038 = vmatmul.mubr.bf16.gmra.mrb[0].mxu0 %v157
    %v2039 = vpop.f32.mrb[0].mxu0
    %v2040 = vadd.f32 %v1999, %v2039
    %v2041 = vpop.f32.mrb[0].mxu0
    %v2042 = vadd.f32 %v2001, %v2041
    %v2043 = vpop.f32.mrb[0].mxu0
    %v2044 = vpop.f32.mrb[0].mxu0
    %2045 = vdwg.mxu0
    %2046 = vmatprep.subr.bf16.mxu0 %v1508
    %2047 = vmatpush1.bf16.msra.mxu0 %v1507
    %2048 = vmatprep.subr.bf16.mxu0 0
    %2049 = vmatpush1.bf16.msra.mxu0 0
    %2050 = vmatprep.subr.bf16.mxu0 0
    %2051 = vmatpush1.bf16.msra.mxu0 0
    %2052 = vmatprep.subr.bf16.mxu0 0
    %2053 = vmatpush1.bf16.msra.mxu0 0
    %2054 = vmatprep.subr.bf16.mxu0 0
    %2055 = vmatpush1.bf16.msra.mxu0 0
    %2056 = vmatprep.subr.bf16.mxu0 0
    %2057 = vmatpush1.bf16.msra.mxu0 0
    %2058 = vmatprep.subr.bf16.mxu0 0
    %2059 = vmatpush1.bf16.msra.mxu0 0
    %2060 = vmatprep.subr.bf16.mxu0 0
    %2061 = vmatpush1.bf16.msra.mxu0 0
    %2062 = vmatprep.subr.bf16.mxu0 0
    %2063 = vmatpush1.bf16.msra.mxu0 0
    %2064 = vmatprep.subr.bf16.mxu0 0
    %2065 = vmatpush1.bf16.msra.mxu0 0
    %2066 = vmatprep.subr.bf16.mxu0 0
    %2067 = vmatpush1.bf16.msra.mxu0 0
    %2068 = vmatprep.subr.bf16.mxu0 0
    %2069 = vmatpush1.bf16.msra.mxu0 0
    %2070 = vmatprep.subr.bf16.mxu0 0
    %2071 = vmatpush1.bf16.msra.mxu0 0
    %2072 = vmatprep.subr.bf16.mxu0 0
    %2073 = vmatpush1.bf16.msra.mxu0 0
    %2074 = vmatprep.subr.bf16.mxu0 0
    %2075 = vmatpush1.bf16.msra.mxu0 0
    %2076 = vmatprep.subr.bf16.mxu0 0
    %2077 = vmatpush1.bf16.msra.mxu0 0
    %2078 = vmatprep.mubr.bf16.mxu0 0
    %2079 = vmatmul.mubr.bf16.gmra.mrb[0].mxu0 %v1757
    %v2080 = vpop.f32.mrb[0].mxu0
    %v2081 = vadd.f32 %v2040, %v2080
    %v2082 = vpop.f32.mrb[0].mxu0
    %v2083 = vadd.f32 %v2042, %v2082
    %v2084 = vpop.f32.mrb[0].mxu0
    %v2085 = vpop.f32.mrb[0].mxu0
    %2086 = vdwg.mxu0
    %2087 = vmatprep.subr.bf16.mxu0 0
    %2088 = vmatpush1.bf16.msra.mxu0 %v1269
    %2089 = vmatprep.subr.bf16.mxu0 0
    %2090 = vmatpush1.bf16.msra.mxu0 %v1274
    %2091 = vmatprep.subr.bf16.mxu0 0
    %2092 = vmatpush1.bf16.msra.mxu0 %v1279
    %2093 = vmatprep.subr.bf16.mxu0 0
    %2094 = vmatpush1.bf16.msra.mxu0 %v1284
    %2095 = vmatprep.subr.bf16.mxu0 0
    %2096 = vmatpush1.bf16.msra.mxu0 %v1289
    %2097 = vmatprep.subr.bf16.mxu0 0
    %2098 = vmatpush1.bf16.msra.mxu0 %v1294
    %2099 = vmatprep.subr.bf16.mxu0 0
    %2100 = vmatpush1.bf16.msra.mxu0 %v1299
    %2101 = vmatprep.subr.bf16.mxu0 0
    %2102 = vmatpush1.bf16.msra.mxu0 %v1304
    %2103 = vmatprep.subr.bf16.mxu0 0
    %2104 = vmatpush1.bf16.msra.mxu0 %v1309
    %2105 = vmatprep.subr.bf16.mxu0 0
    %2106 = vmatpush1.bf16.msra.mxu0 %v1314
    %2107 = vmatprep.subr.bf16.mxu0 0
    %2108 = vmatpush1.bf16.msra.mxu0 %v1319
    %2109 = vmatprep.subr.bf16.mxu0 0
    %2110 = vmatpush1.bf16.msra.mxu0 %v1324
    %2111 = vmatprep.subr.bf16.mxu0 0
    %2112 = vmatpush1.bf16.msra.mxu0 %v1329
    %2113 = vmatprep.subr.bf16.mxu0 0
    %2114 = vmatpush1.bf16.msra.mxu0 %v1334
    %2115 = vmatprep.subr.bf16.mxu0 0
    %2116 = vmatpush1.bf16.msra.mxu0 %v1339
    %2117 = vmatprep.subr.bf16.mxu0 0
    %2118 = vmatpush1.bf16.msra.mxu0 %v1344
    %2119 = vmatprep.mubr.bf16.mxu0 %v154
    %2120 = vmatmul.mubr.bf16.gmra.mrb[0].mxu0 %v153
    %v2121 = vpop.f32.mrb[0].mxu0
    %v2122 = vadd.f32 %v475, %v2121
    %v2123 = vpop.f32.mrb[0].mxu0
    %v2124 = vpop.f32.mrb[0].mxu0
    %v2125 = vpop.f32.mrb[0].mxu0
    %2126 = vdwg.mxu0
    %2127 = vmatprep.subr.bf16.mxu0 0
    %2128 = vmatpush1.bf16.msra.mxu0 %v1349
    %2129 = vmatprep.subr.bf16.mxu0 0
    %2130 = vmatpush1.bf16.msra.mxu0 %v1354
    %2131 = vmatprep.subr.bf16.mxu0 0
    %2132 = vmatpush1.bf16.msra.mxu0 %v1359
    %2133 = vmatprep.subr.bf16.mxu0 0
    %2134 = vmatpush1.bf16.msra.mxu0 %v1364
    %2135 = vmatprep.subr.bf16.mxu0 0
    %2136 = vmatpush1.bf16.msra.mxu0 %v1369
    %2137 = vmatprep.subr.bf16.mxu0 0
    %2138 = vmatpush1.bf16.msra.mxu0 %v1374
    %2139 = vmatprep.subr.bf16.mxu0 0
    %2140 = vmatpush1.bf16.msra.mxu0 %v1379
    %2141 = vmatprep.subr.bf16.mxu0 0
    %2142 = vmatpush1.bf16.msra.mxu0 %v1384
    %2143 = vmatprep.subr.bf16.mxu0 0
    %2144 = vmatpush1.bf16.msra.mxu0 %v1389
    %2145 = vmatprep.subr.bf16.mxu0 0
    %2146 = vmatpush1.bf16.msra.mxu0 %v1394
    %2147 = vmatprep.subr.bf16.mxu0 0
    %2148 = vmatpush1.bf16.msra.mxu0 %v1399
    %2149 = vmatprep.subr.bf16.mxu0 0
    %2150 = vmatpush1.bf16.msra.mxu0 %v1404
    %2151 = vmatprep.subr.bf16.mxu0 0
    %2152 = vmatpush1.bf16.msra.mxu0 %v1409
    %2153 = vmatprep.subr.bf16.mxu0 0
    %2154 = vmatpush1.bf16.msra.mxu0 %v1414
    %2155 = vmatprep.subr.bf16.mxu0 0
    %2156 = vmatpush1.bf16.msra.mxu0 %v1419
    %2157 = vmatprep.subr.bf16.mxu0 0
    %2158 = vmatpush1.bf16.msra.mxu0 %v1424
    %2159 = vmatprep.mubr.bf16.mxu0 %v156
    %2160 = vmatmul.mubr.bf16.gmra.mrb[0].mxu0 %v155
    %v2161 = vpop.f32.mrb[0].mxu0
    %v2162 = vadd.f32 %v2122, %v2161
    %v2163 = vpop.f32.mrb[0].mxu0
    %v2164 = vpop.f32.mrb[0].mxu0
    %v2165 = vpop.f32.mrb[0].mxu0
    %2166 = vdwg.mxu0
    %2167 = vmatprep.subr.bf16.mxu0 0
    %2168 = vmatpush1.bf16.msra.mxu0 %v1429
    %2169 = vmatprep.subr.bf16.mxu0 0
    %2170 = vmatpush1.bf16.msra.mxu0 %v1434
    %2171 = vmatprep.subr.bf16.mxu0 0
    %2172 = vmatpush1.bf16.msra.mxu0 %v1439
    %2173 = vmatprep.subr.bf16.mxu0 0
    %2174 = vmatpush1.bf16.msra.mxu0 %v1444
    %2175 = vmatprep.subr.bf16.mxu0 0
    %2176 = vmatpush1.bf16.msra.mxu0 %v1449
    %2177 = vmatprep.subr.bf16.mxu0 0
    %2178 = vmatpush1.bf16.msra.mxu0 %v1454
    %2179 = vmatprep.subr.bf16.mxu0 0
    %2180 = vmatpush1.bf16.msra.mxu0 %v1459
    %2181 = vmatprep.subr.bf16.mxu0 0
    %2182 = vmatpush1.bf16.msra.mxu0 %v1464
    %2183 = vmatprep.subr.bf16.mxu0 0
    %2184 = vmatpush1.bf16.msra.mxu0 %v1469
    %2185 = vmatprep.subr.bf16.mxu0 0
    %2186 = vmatpush1.bf16.msra.mxu0 %v1474
    %2187 = vmatprep.subr.bf16.mxu0 0
    %2188 = vmatpush1.bf16.msra.mxu0 %v1479
    %2189 = vmatprep.subr.bf16.mxu0 0
    %2190 = vmatpush1.bf16.msra.mxu0 %v1484
    %2191 = vmatprep.subr.bf16.mxu0 0
    %2192 = vmatpush1.bf16.msra.mxu0 %v1489
    %2193 = vmatprep.subr.bf16.mxu0 0
    %2194 = vmatpush1.bf16.msra.mxu0 %v1494
    %2195 = vmatprep.subr.bf16.mxu0 0
    %2196 = vmatpush1.bf16.msra.mxu0 %v1499
    %2197 = vmatprep.subr.bf16.mxu0 0
    %2198 = vmatpush1.bf16.msra.mxu0 %v1504
    %2199 = vmatprep.mubr.bf16.mxu0 %v158
    %2200 = vmatmul.mubr.bf16.gmra.mrb[0].mxu0 %v157
    %v2201 = vpop.f32.mrb[0].mxu0
    %v2202 = vadd.f32 %v2162, %v2201
    %v2203 = vpop.f32.mrb[0].mxu0
    %v2204 = vpop.f32.mrb[0].mxu0
    %v2205 = vpop.f32.mrb[0].mxu0
    %2206 = vdwg.mxu0
    %2207 = vmatprep.subr.bf16.mxu0 0
    %2208 = vmatpush1.bf16.msra.mxu0 %v1509
    %2209 = vmatprep.subr.bf16.mxu0 0
    %2210 = vmatpush1.bf16.msra.mxu0 0
    %2211 = vmatprep.subr.bf16.mxu0 0
    %2212 = vmatpush1.bf16.msra.mxu0 0
    %2213 = vmatprep.subr.bf16.mxu0 0
    %2214 = vmatpush1.bf16.msra.mxu0 0
    %2215 = vmatprep.subr.bf16.mxu0 0
    %2216 = vmatpush1.bf16.msra.mxu0 0
    %2217 = vmatprep.subr.bf16.mxu0 0
    %2218 = vmatpush1.bf16.msra.mxu0 0
    %2219 = vmatprep.subr.bf16.mxu0 0
    %2220 = vmatpush1.bf16.msra.mxu0 0
    %2221 = vmatprep.subr.bf16.mxu0 0
    %2222 = vmatpush1.bf16.msra.mxu0 0
    %2223 = vmatprep.subr.bf16.mxu0 0
    %2224 = vmatpush1.bf16.msra.mxu0 0
    %2225 = vmatprep.subr.bf16.mxu0 0
    %2226 = vmatpush1.bf16.msra.mxu0 0
    %2227 = vmatprep.subr.bf16.mxu0 0
    %2228 = vmatpush1.bf16.msra.mxu0 0
    %2229 = vmatprep.subr.bf16.mxu0 0
    %2230 = vmatpush1.bf16.msra.mxu0 0
    %2231 = vmatprep.subr.bf16.mxu0 0
    %2232 = vmatpush1.bf16.msra.mxu0 0
    %2233 = vmatprep.subr.bf16.mxu0 0
    %2234 = vmatpush1.bf16.msra.mxu0 0
    %2235 = vmatprep.subr.bf16.mxu0 0
    %2236 = vmatpush1.bf16.msra.mxu0 0
    %2237 = vmatprep.subr.bf16.mxu0 0
    %2238 = vmatpush1.bf16.msra.mxu0 0
    %2239 = vmatprep.mubr.bf16.mxu0 0
    %2240 = vmatmul.mubr.bf16.gmra.mrb[0].mxu0 %v1757
    %v2241 = vpop.f32.mrb[0].mxu0
    %v2242 = vadd.f32 %v2202, %v2241
    %v2243 = vpop.f32.mrb[0].mxu0
    %v2244 = vpop.f32.mrb[0].mxu0
    %v2245 = vpop.f32.mrb[0].mxu0
    %2246 = vdwg.mxu0
    %v2247 = vmax.f32 %v1917, 0.0
    %v2248 = vmax.f32 %v1919, 0.0
    %v2249 = vmax.f32 %v2081, 0.0
    %v2250 = vmax.f32 %v2083, 0.0
    %v2251 = vmax.f32 %v2242, 0.0
    %v2252 = vpack.c.bf16 %v2247, %v2247
    %v2253 = vpack.c.bf16 %v2248, %v2248
    %v2254 = vpack.c.bf16 %v2249, %v2249
    %v2255 = vpack.c.bf16 %v2250, %v2250
    %v2256 = vpack.c.bf16 %v2251, %v2251
    %v2257 = vld [vmem:[#allocation8] sm:$0xff]
    %v2258 = vld [vmem:[#allocation8 + $0x8] sm:$0xff]
    %v2259 = vld [vmem:[#allocation8 + $0x10] sm:$0xff]
    %v2260 = vld [vmem:[#allocation8 + $0x18] sm:$0xff]
    %v2261 = vld [vmem:[#allocation8 + $0x20] sm:$0xff]
    %v2262 = vld [vmem:[#allocation8 + $0x28] sm:$0xff]
    %v2263 = vld [vmem:[#allocation8 + $0x30] sm:$0xff]
    %v2264 = vld [vmem:[#allocation8 + $0x38] sm:$0xff]
    %v2265 = vld [vmem:[#allocation8 + $0x40] sm:$0xff]
    %v2266 = vld [vmem:[#allocation8 + $0x48] sm:$0xff]
    %v2267 = vld [vmem:[#allocation8 + $0x50] sm:$0xff]
    %v2268 = vld [vmem:[#allocation8 + $0x58] sm:$0xff]
    %v2269 = vld [vmem:[#allocation8 + $0x60] sm:$0xff]
    %v2270 = vld [vmem:[#allocation8 + $0x68] sm:$0xff]
    %v2271 = vld [vmem:[#allocation8 + $0x70] sm:$0xff]
    %v2272 = vld [vmem:[#allocation8 + $0x78] sm:$0xff]
    %v2273 = vld [vmem:[#allocation8 + $0x80] sm:$0xff]
    %v2274 = vld [vmem:[#allocation8 + $0x88] sm:$0xff]
    %v2275 = vld [vmem:[#allocation8 + $0x90] sm:$0xff]
    %v2276 = vld [vmem:[#allocation8 + $0x98] sm:$0xff]
    %v2277 = vld [vmem:[#allocation8 + $0xa0] sm:$0xff]
    %v2278 = vld [vmem:[#allocation8 + $0xa8] sm:$0xff]
    %v2279 = vld [vmem:[#allocation8 + $0xb0] sm:$0xff]
    %v2280 = vld [vmem:[#allocation8 + $0xb8] sm:$0xff]
    %v2281 = vld [vmem:[#allocation8 + $0xc0] sm:$0xff]
    %v2282 = vld [vmem:[#allocation8 + $0xc8] sm:$0xff]
    %v2283 = vld [vmem:[#allocation8 + $0xd0] sm:$0xff]
    %v2284 = vld [vmem:[#allocation8 + $0xd8] sm:$0xff]
    %v2285 = vld [vmem:[#allocation8 + $0xe0] sm:$0xff]
    %v2286 = vld [vmem:[#allocation8 + $0xe8] sm:$0xff]
    %v2287 = vld [vmem:[#allocation8 + $0xf0] sm:$0xff]
    %v2288 = vld [vmem:[#allocation8 + $0xf8] sm:$0xff]
    %v2289 = vld [vmem:[#allocation8 + $0x100] sm:$0xff]
    %v2290 = vld [vmem:[#allocation8 + $0x108] sm:$0xff]
    %v2291 = vld [vmem:[#allocation8 + $0x110] sm:$0xff]
    %v2292 = vld [vmem:[#allocation8 + $0x118] sm:$0xff]
    %v2293 = vld [vmem:[#allocation8 + $0x120] sm:$0xff]
    %v2294 = vld [vmem:[#allocation8 + $0x128] sm:$0xff]
    %v2295 = vld [vmem:[#allocation8 + $0x130] sm:$0xff]
    %v2296 = vld [vmem:[#allocation8 + $0x138] sm:$0xff]
    %v2297 = vld [vmem:[#allocation8 + $0x140] sm:$0xff]
    %v2298 = vld [vmem:[#allocation8 + $0x148] sm:$0xff]
    %v2299 = vld [vmem:[#allocation8 + $0x150] sm:$0xff]
    %v2300 = vld [vmem:[#allocation8 + $0x158] sm:$0xff]
    %v2301 = vld [vmem:[#allocation8 + $0x160] sm:$0xff]
    %v2302 = vld [vmem:[#allocation8 + $0x168] sm:$0xff]
    %v2303 = vld [vmem:[#allocation8 + $0x170] sm:$0xff]
    %v2304 = vld [vmem:[#allocation8 + $0x178] sm:$0xff]
    %v2305 = vld [vmem:[#allocation8 + $0x180] sm:$0xff]
    %v2306 = vld [vmem:[#allocation8 + $0x188] sm:$0xff]
    %v2307 = vld [vmem:[#allocation8 + $0x190] sm:$0xff]
    %v2308 = vld [vmem:[#allocation8 + $0x198] sm:$0xff]
    %v2309 = vld [vmem:[#allocation8 + $0x1a0] sm:$0xff]
    %v2310 = vld [vmem:[#allocation8 + $0x1a8] sm:$0xff]
    %v2311 = vld [vmem:[#allocation8 + $0x1b0] sm:$0xff]
    %v2312 = vld [vmem:[#allocation8 + $0x1b8] sm:$0xff]
    %v2313 = vld [vmem:[#allocation8 + $0x1c0] sm:$0xff]
    %v2314 = vld [vmem:[#allocation8 + $0x1c8] sm:$0xff]
    %v2315 = vld [vmem:[#allocation8 + $0x1d0] sm:$0xff]
    %v2316 = vld [vmem:[#allocation8 + $0x1d8] sm:$0xff]
    %v2317 = vld [vmem:[#allocation8 + $0x1e0] sm:$0xff]
    %v2318 = vld [vmem:[#allocation8 + $0x1e8] sm:$0xff]
    %v2319 = vld [vmem:[#allocation8 + $0x1f0] sm:$0xff]
    %v2320 = vld [vmem:[#allocation8 + $0x1f8] sm:$0xff]
    %v2321 = vld [vmem:[#allocation8 + $0x200] sm:$0xff]
    %v2322 = vld [vmem:[#allocation8 + $0x208] sm:$0xff]
    %v2323 = vld [vmem:[#allocation8 + $0x210] sm:$0xff]
    %v2324 = vld [vmem:[#allocation8 + $0x218] sm:$0xff]
    %v2325 = vld [vmem:[#allocation8 + $0x220] sm:$0xff]
    %v2326 = vld [vmem:[#allocation8 + $0x228] sm:$0xff]
    %v2327 = vld [vmem:[#allocation8 + $0x230] sm:$0xff]
    %v2328 = vld [vmem:[#allocation8 + $0x238] sm:$0xff]
    %v2329 = vld [vmem:[#allocation8 + $0x240] sm:$0xff]
    %v2330 = vld [vmem:[#allocation8 + $0x248] sm:$0xff]
    %v2331 = vld [vmem:[#allocation8 + $0x250] sm:$0xff]
    %v2332 = vld [vmem:[#allocation8 + $0x258] sm:$0xff]
    %v2333 = vld [vmem:[#allocation8 + $0x260] sm:$0xff]
    %v2334 = vld [vmem:[#allocation8 + $0x268] sm:$0xff]
    %v2335 = vld [vmem:[#allocation8 + $0x270] sm:$0xff]
    %v2336 = vld [vmem:[#allocation8 + $0x278] sm:$0xff]
    %v2337 = vld [vmem:[#allocation8 + $0x280] sm:$0xff]
    %v2338 = vld [vmem:[#allocation8 + $0x288] sm:$0xff]
    %v2339 = vld [vmem:[#allocation8 + $0x290] sm:$0xff]
    %v2340 = vld [vmem:[#allocation8 + $0x298] sm:$0xff]
    %v2341 = vld [vmem:[#allocation8 + $0x2a0] sm:$0xff]
    %v2342 = vld [vmem:[#allocation8 + $0x2a8] sm:$0xff]
    %v2343 = vld [vmem:[#allocation8 + $0x2b0] sm:$0xff]
    %v2344 = vld [vmem:[#allocation8 + $0x2b8] sm:$0xff]
    %v2345 = vld [vmem:[#allocation8 + $0x2c0] sm:$0xff]
    %v2346 = vld [vmem:[#allocation8 + $0x2c8] sm:$0xff]
    %v2347 = vld [vmem:[#allocation8 + $0x2d0] sm:$0xff]
    %v2348 = vld [vmem:[#allocation8 + $0x2d8] sm:$0xff]
    %v2349 = vld [vmem:[#allocation8 + $0x2e0] sm:$0xff]
    %v2350 = vld [vmem:[#allocation8 + $0x2e8] sm:$0xff]
    %v2351 = vld [vmem:[#allocation8 + $0x2f0] sm:$0xff]
    %v2352 = vld [vmem:[#allocation8 + $0x2f8] sm:$0xff]
    %v2353 = vld [vmem:[#allocation8 + $0x300] sm:$0xff]
    %v2354 = vld [vmem:[#allocation8 + $0x308] sm:$0xff]
    %v2355 = vld [vmem:[#allocation8 + $0x310] sm:$0xff]
    %v2356 = vld [vmem:[#allocation8 + $0x318] sm:$0xff]
    %v2357 = vld [vmem:[#allocation8 + $0x320] sm:$0xff]
    %v2358 = vld [vmem:[#allocation8 + $0x328] sm:$0xff]
    %v2359 = vld [vmem:[#allocation8 + $0x330] sm:$0xff]
    %v2360 = vld [vmem:[#allocation8 + $0x338] sm:$0xff]
    %v2361 = vld [vmem:[#allocation8 + $0x340] sm:$0xff]
    %v2362 = vld [vmem:[#allocation8 + $0x348] sm:$0xff]
    %v2363 = vld [vmem:[#allocation8 + $0x350] sm:$0xff]
    %v2364 = vld [vmem:[#allocation8 + $0x358] sm:$0xff]
    %v2365 = vld [vmem:[#allocation8 + $0x360] sm:$0xff]
    %v2366 = vld [vmem:[#allocation8 + $0x368] sm:$0xff]
    %v2367 = vld [vmem:[#allocation8 + $0x370] sm:$0xff]
    %v2368 = vld [vmem:[#allocation8 + $0x378] sm:$0xff]
    %v2369 = vld [vmem:[#allocation8 + $0x380] sm:$0xff]
    %v2370 = vld [vmem:[#allocation8 + $0x388] sm:$0xff]
    %v2371 = vld [vmem:[#allocation8 + $0x390] sm:$0xff]
    %v2372 = vld [vmem:[#allocation8 + $0x398] sm:$0xff]
    %v2373 = vld [vmem:[#allocation8 + $0x3a0] sm:$0xff]
    %v2374 = vld [vmem:[#allocation8 + $0x3a8] sm:$0xff]
    %v2375 = vld [vmem:[#allocation8 + $0x3b0] sm:$0xff]
    %v2376 = vld [vmem:[#allocation8 + $0x3b8] sm:$0xff]
    %v2377 = vld [vmem:[#allocation8 + $0x3c0] sm:$0xff]
    %v2378 = vld [vmem:[#allocation8 + $0x3c8] sm:$0xff]
    %v2379 = vld [vmem:[#allocation8 + $0x3d0] sm:$0xff]
    %v2380 = vld [vmem:[#allocation8 + $0x3d8] sm:$0xff]
    %v2381 = vld [vmem:[#allocation8 + $0x3e0] sm:$0xff]
    %v2382 = vld [vmem:[#allocation8 + $0x3e8] sm:$0xff]
    %v2383 = vld [vmem:[#allocation8 + $0x3f0] sm:$0xff]
    %v2384 = vld [vmem:[#allocation8 + $0x3f8] sm:$0xff]
    %v2385 = vld [vmem:[#allocation8 + $0x400] sm:$0xff]
    %v2386 = vld [vmem:[#allocation8 + $0x408] sm:$0xff]
    %v2387 = vld [vmem:[#allocation8 + $0x410] sm:$0xff]
    %v2388 = vld [vmem:[#allocation8 + $0x418] sm:$0xff]
    %v2389 = vld [vmem:[#allocation8 + $0x420] sm:$0xff]
    %v2390 = vld [vmem:[#allocation8 + $0x428] sm:$0xff]
    %v2391 = vld [vmem:[#allocation8 + $0x430] sm:$0xff]
    %v2392 = vld [vmem:[#allocation8 + $0x438] sm:$0xff]
    %v2393 = vld [vmem:[#allocation8 + $0x440] sm:$0xff]
    %v2394 = vld [vmem:[#allocation8 + $0x448] sm:$0xff]
    %v2395 = vld [vmem:[#allocation8 + $0x450] sm:$0xff]
    %v2396 = vld [vmem:[#allocation8 + $0x458] sm:$0xff]
    %v2397 = vld [vmem:[#allocation8 + $0x460] sm:$0xff]
    %v2398 = vld [vmem:[#allocation8 + $0x468] sm:$0xff]
    %v2399 = vld [vmem:[#allocation8 + $0x470] sm:$0xff]
    %v2400 = vld [vmem:[#allocation8 + $0x478] sm:$0xff]
    %v2401 = vld [vmem:[#allocation8 + $0x480] sm:$0xff]
    %v2402 = vld [vmem:[#allocation8 + $0x488] sm:$0xff]
    %v2403 = vld [vmem:[#allocation8 + $0x490] sm:$0xff]
    %v2404 = vld [vmem:[#allocation8 + $0x498] sm:$0xff]
    %v2405 = vld [vmem:[#allocation8 + $0x4a0] sm:$0xff]
    %v2406 = vld [vmem:[#allocation8 + $0x4a8] sm:$0xff]
    %v2407 = vld [vmem:[#allocation8 + $0x4b0] sm:$0xff]
    %v2408 = vld [vmem:[#allocation8 + $0x4b8] sm:$0xff]
    %v2409 = vld [vmem:[#allocation8 + $0x4c0] sm:$0xff]
    %v2410 = vld [vmem:[#allocation8 + $0x4c8] sm:$0xff]
    %v2411 = vld [vmem:[#allocation8 + $0x4d0] sm:$0xff]
    %v2412 = vld [vmem:[#allocation8 + $0x4d8] sm:$0xff]
    %v2413 = vld [vmem:[#allocation8 + $0x4e0] sm:$0xff]
    %v2414 = vld [vmem:[#allocation8 + $0x4e8] sm:$0xff]
    %v2415 = vld [vmem:[#allocation8 + $0x4f0] sm:$0xff]
    %v2416 = vld [vmem:[#allocation8 + $0x4f8] sm:$0xff]
    %v2417 = vld [vmem:[#allocation10] sm:$0xf]
    %v2419 = vlaneseq
    %v2420 = vshrl.u32 %v2419, 7
    %v2421 = vsub.s32 0, %v2420
    %v2422 = vrot.slane %v2417, %v2421
    %v2423 = vlaneseq
    %v2424 = vshrl.u32 %v2423, 7
    %v2425 = vsub.s32 1, %v2424
    %v2426 = vrot.slane %v2417, %v2425
    %v2427 = vlaneseq
    %v2428 = vshrl.u32 %v2427, 7
    %v2429 = vsub.s32 2, %v2428
    %v2430 = vrot.slane %v2417, %v2429
    %v2431 = vlaneseq
    %v2432 = vshrl.u32 %v2431, 7
    %v2433 = vsub.s32 3, %v2432
    %v2434 = vrot.slane %v2417, %v2433
    %v2599 = vunpack.c.l.b16 %v2257
    %v2600 = vunpack.c.h.b16 %v2257
    %v2601 = vunpack.c.l.b16 %v2258
    %v2602 = vunpack.c.h.b16 %v2258
    %v2603 = vunpack.c.l.b16 %v2259
    %v2604 = vunpack.c.h.b16 %v2259
    %v2605 = vunpack.c.l.b16 %v2260
    %v2606 = vunpack.c.h.b16 %v2260
    %v2607 = vunpack.c.l.b16 %v2261
    %v2608 = vunpack.c.h.b16 %v2261
    %v2609 = vunpack.c.l.b16 %v2262
    %v2610 = vunpack.c.h.b16 %v2262
    %v2611 = vunpack.c.l.b16 %v2263
    %v2612 = vunpack.c.h.b16 %v2263
    %v2613 = vunpack.c.l.b16 %v2264
    %v2614 = vunpack.c.h.b16 %v2264
    %v2615 = vunpack.c.l.b16 %v2265
    %v2616 = vunpack.c.h.b16 %v2265
    %v2617 = vunpack.c.l.b16 %v2266
    %v2618 = vunpack.c.h.b16 %v2266
    %v2619 = vunpack.c.l.b16 %v2267
    %v2620 = vunpack.c.h.b16 %v2267
    %v2621 = vunpack.c.l.b16 %v2268
    %v2622 = vunpack.c.h.b16 %v2268
    %v2623 = vunpack.c.l.b16 %v2269
    %v2624 = vunpack.c.h.b16 %v2269
    %v2625 = vunpack.c.l.b16 %v2270
    %v2626 = vunpack.c.h.b16 %v2270
    %v2627 = vunpack.c.l.b16 %v2271
    %v2628 = vunpack.c.h.b16 %v2271
    %v2629 = vunpack.c.l.b16 %v2272
    %v2630 = vunpack.c.h.b16 %v2272
    %v2631 = vunpack.c.l.b16 %v2273
    %v2632 = vunpack.c.h.b16 %v2273
    %v2633 = vunpack.c.l.b16 %v2274
    %v2634 = vunpack.c.h.b16 %v2274
    %v2635 = vunpack.c.l.b16 %v2275
    %v2636 = vunpack.c.h.b16 %v2275
    %v2637 = vunpack.c.l.b16 %v2276
    %v2638 = vunpack.c.h.b16 %v2276
    %v2639 = vunpack.c.l.b16 %v2277
    %v2640 = vunpack.c.h.b16 %v2277
    %v2641 = vunpack.c.l.b16 %v2278
    %v2642 = vunpack.c.h.b16 %v2278
    %v2643 = vunpack.c.l.b16 %v2279
    %v2644 = vunpack.c.h.b16 %v2279
    %v2645 = vunpack.c.l.b16 %v2280
    %v2646 = vunpack.c.h.b16 %v2280
    %v2647 = vunpack.c.l.b16 %v2281
    %v2648 = vunpack.c.h.b16 %v2281
    %v2649 = vunpack.c.l.b16 %v2282
    %v2650 = vunpack.c.h.b16 %v2282
    %v2651 = vunpack.c.l.b16 %v2283
    %v2652 = vunpack.c.h.b16 %v2283
    %v2653 = vunpack.c.l.b16 %v2284
    %v2654 = vunpack.c.h.b16 %v2284
    %v2655 = vunpack.c.l.b16 %v2285
    %v2656 = vunpack.c.h.b16 %v2285
    %v2657 = vunpack.c.l.b16 %v2286
    %v2658 = vunpack.c.h.b16 %v2286
    %v2659 = vunpack.c.l.b16 %v2287
    %v2660 = vunpack.c.h.b16 %v2287
    %v2661 = vunpack.c.l.b16 %v2288
    %v2662 = vunpack.c.h.b16 %v2288
    %v2663 = vunpack.c.l.b16 %v2289
    %v2664 = vunpack.c.h.b16 %v2289
    %v2665 = vunpack.c.l.b16 %v2290
    %v2666 = vunpack.c.h.b16 %v2290
    %v2667 = vunpack.c.l.b16 %v2291
    %v2668 = vunpack.c.h.b16 %v2291
    %v2669 = vunpack.c.l.b16 %v2292
    %v2670 = vunpack.c.h.b16 %v2292
    %v2671 = vunpack.c.l.b16 %v2293
    %v2672 = vunpack.c.h.b16 %v2293
    %v2673 = vunpack.c.l.b16 %v2294
    %v2674 = vunpack.c.h.b16 %v2294
    %v2675 = vunpack.c.l.b16 %v2295
    %v2676 = vunpack.c.h.b16 %v2295
    %v2677 = vunpack.c.l.b16 %v2296
    %v2678 = vunpack.c.h.b16 %v2296
    %v2679 = vunpack.c.l.b16 %v2297
    %v2680 = vunpack.c.h.b16 %v2297
    %v2681 = vunpack.c.l.b16 %v2298
    %v2682 = vunpack.c.h.b16 %v2298
    %v2683 = vunpack.c.l.b16 %v2299
    %v2684 = vunpack.c.h.b16 %v2299
    %v2685 = vunpack.c.l.b16 %v2300
    %v2686 = vunpack.c.h.b16 %v2300
    %v2687 = vunpack.c.l.b16 %v2301
    %v2688 = vunpack.c.h.b16 %v2301
    %v2689 = vunpack.c.l.b16 %v2302
    %v2690 = vunpack.c.h.b16 %v2302
    %v2691 = vunpack.c.l.b16 %v2303
    %v2692 = vunpack.c.h.b16 %v2303
    %v2693 = vunpack.c.l.b16 %v2304
    %v2694 = vunpack.c.h.b16 %v2304
    %v2695 = vunpack.c.l.b16 %v2305
    %v2696 = vunpack.c.h.b16 %v2305
    %v2697 = vunpack.c.l.b16 %v2306
    %v2698 = vunpack.c.h.b16 %v2306
    %v2699 = vunpack.c.l.b16 %v2307
    %v2700 = vunpack.c.h.b16 %v2307
    %v2701 = vunpack.c.l.b16 %v2308
    %v2702 = vunpack.c.h.b16 %v2308
    %v2703 = vunpack.c.l.b16 %v2309
    %v2704 = vunpack.c.h.b16 %v2309
    %v2705 = vunpack.c.l.b16 %v2310
    %v2706 = vunpack.c.h.b16 %v2310
    %v2707 = vunpack.c.l.b16 %v2311
    %v2708 = vunpack.c.h.b16 %v2311
    %v2709 = vunpack.c.l.b16 %v2312
    %v2710 = vunpack.c.h.b16 %v2312
    %v2711 = vunpack.c.l.b16 %v2313
    %v2712 = vunpack.c.h.b16 %v2313
    %v2713 = vunpack.c.l.b16 %v2314
    %v2714 = vunpack.c.h.b16 %v2314
    %v2715 = vunpack.c.l.b16 %v2315
    %v2716 = vunpack.c.h.b16 %v2315
    %v2717 = vunpack.c.l.b16 %v2316
    %v2718 = vunpack.c.h.b16 %v2316
    %v2719 = vunpack.c.l.b16 %v2317
    %v2720 = vunpack.c.h.b16 %v2317
    %v2721 = vunpack.c.l.b16 %v2318
    %v2722 = vunpack.c.h.b16 %v2318
    %v2723 = vunpack.c.l.b16 %v2319
    %v2724 = vunpack.c.h.b16 %v2319
    %v2725 = vunpack.c.l.b16 %v2320
    %v2726 = vunpack.c.h.b16 %v2320
    %v2727 = vunpack.c.l.b16 %v2321
    %v2728 = vunpack.c.h.b16 %v2321
    %v2729 = vunpack.c.l.b16 %v2322
    %v2730 = vunpack.c.h.b16 %v2322
    %v2731 = vunpack.c.l.b16 %v2323
    %v2732 = vunpack.c.h.b16 %v2323
    %v2733 = vunpack.c.l.b16 %v2324
    %v2734 = vunpack.c.h.b16 %v2324
    %v2735 = vunpack.c.l.b16 %v2325
    %v2736 = vunpack.c.h.b16 %v2325
    %v2737 = vunpack.c.l.b16 %v2326
    %v2738 = vunpack.c.h.b16 %v2326
    %v2739 = vunpack.c.l.b16 %v2327
    %v2740 = vunpack.c.h.b16 %v2327
    %v2741 = vunpack.c.l.b16 %v2328
    %v2742 = vunpack.c.h.b16 %v2328
    %v2743 = vunpack.c.l.b16 %v2329
    %v2744 = vunpack.c.h.b16 %v2329
    %v2745 = vunpack.c.l.b16 %v2330
    %v2746 = vunpack.c.h.b16 %v2330
    %v2747 = vunpack.c.l.b16 %v2331
    %v2748 = vunpack.c.h.b16 %v2331
    %v2749 = vunpack.c.l.b16 %v2332
    %v2750 = vunpack.c.h.b16 %v2332
    %v2751 = vunpack.c.l.b16 %v2333
    %v2752 = vunpack.c.h.b16 %v2333
    %v2753 = vunpack.c.l.b16 %v2334
    %v2754 = vunpack.c.h.b16 %v2334
    %v2755 = vunpack.c.l.b16 %v2335
    %v2756 = vunpack.c.h.b16 %v2335
    %v2757 = vunpack.c.l.b16 %v2336
    %v2758 = vunpack.c.h.b16 %v2336
    %v2759 = vunpack.c.l.b16 %v2337
    %v2760 = vunpack.c.h.b16 %v2337
    %v2761 = vunpack.c.l.b16 %v2338
    %v2762 = vunpack.c.h.b16 %v2338
    %v2763 = vunpack.c.l.b16 %v2339
    %v2764 = vunpack.c.h.b16 %v2339
    %v2765 = vunpack.c.l.b16 %v2340
    %v2766 = vunpack.c.h.b16 %v2340
    %v2767 = vunpack.c.l.b16 %v2341
    %v2768 = vunpack.c.h.b16 %v2341
    %v2769 = vunpack.c.l.b16 %v2342
    %v2770 = vunpack.c.h.b16 %v2342
    %v2771 = vunpack.c.l.b16 %v2343
    %v2772 = vunpack.c.h.b16 %v2343
    %v2773 = vunpack.c.l.b16 %v2344
    %v2774 = vunpack.c.h.b16 %v2344
    %v2775 = vunpack.c.l.b16 %v2345
    %v2776 = vunpack.c.h.b16 %v2345
    %v2777 = vunpack.c.l.b16 %v2346
    %v2778 = vunpack.c.h.b16 %v2346
    %v2779 = vunpack.c.l.b16 %v2347
    %v2780 = vunpack.c.h.b16 %v2347
    %v2781 = vunpack.c.l.b16 %v2348
    %v2782 = vunpack.c.h.b16 %v2348
    %v2783 = vunpack.c.l.b16 %v2349
    %v2784 = vunpack.c.h.b16 %v2349
    %v2785 = vunpack.c.l.b16 %v2350
    %v2786 = vunpack.c.h.b16 %v2350
    %v2787 = vunpack.c.l.b16 %v2351
    %v2788 = vunpack.c.h.b16 %v2351
    %v2789 = vunpack.c.l.b16 %v2352
    %v2790 = vunpack.c.h.b16 %v2352
    %v2791 = vunpack.c.l.b16 %v2353
    %v2792 = vunpack.c.h.b16 %v2353
    %v2793 = vunpack.c.l.b16 %v2354
    %v2794 = vunpack.c.h.b16 %v2354
    %v2795 = vunpack.c.l.b16 %v2355
    %v2796 = vunpack.c.h.b16 %v2355
    %v2797 = vunpack.c.l.b16 %v2356
    %v2798 = vunpack.c.h.b16 %v2356
    %v2799 = vunpack.c.l.b16 %v2357
    %v2800 = vunpack.c.h.b16 %v2357
    %v2801 = vunpack.c.l.b16 %v2358
    %v2802 = vunpack.c.h.b16 %v2358
    %v2803 = vunpack.c.l.b16 %v2359
    %v2804 = vunpack.c.h.b16 %v2359
    %v2805 = vunpack.c.l.b16 %v2360
    %v2806 = vunpack.c.h.b16 %v2360
    %v2807 = vunpack.c.l.b16 %v2361
    %v2808 = vunpack.c.h.b16 %v2361
    %v2809 = vunpack.c.l.b16 %v2362
    %v2810 = vunpack.c.h.b16 %v2362
    %v2811 = vunpack.c.l.b16 %v2363
    %v2812 = vunpack.c.h.b16 %v2363
    %v2813 = vunpack.c.l.b16 %v2364
    %v2814 = vunpack.c.h.b16 %v2364
    %v2815 = vunpack.c.l.b16 %v2365
    %v2816 = vunpack.c.h.b16 %v2365
    %v2817 = vunpack.c.l.b16 %v2366
    %v2818 = vunpack.c.h.b16 %v2366
    %v2819 = vunpack.c.l.b16 %v2367
    %v2820 = vunpack.c.h.b16 %v2367
    %v2821 = vunpack.c.l.b16 %v2368
    %v2822 = vunpack.c.h.b16 %v2368
    %v2823 = vunpack.c.l.b16 %v2369
    %v2824 = vunpack.c.h.b16 %v2369
    %v2825 = vunpack.c.l.b16 %v2370
    %v2826 = vunpack.c.h.b16 %v2370
    %v2827 = vunpack.c.l.b16 %v2371
    %v2828 = vunpack.c.h.b16 %v2371
    %v2829 = vunpack.c.l.b16 %v2372
    %v2830 = vunpack.c.h.b16 %v2372
    %v2831 = vunpack.c.l.b16 %v2373
    %v2832 = vunpack.c.h.b16 %v2373
    %v2833 = vunpack.c.l.b16 %v2374
    %v2834 = vunpack.c.h.b16 %v2374
    %v2835 = vunpack.c.l.b16 %v2375
    %v2836 = vunpack.c.h.b16 %v2375
    %v2837 = vunpack.c.l.b16 %v2376
    %v2838 = vunpack.c.h.b16 %v2376
    %v2839 = vunpack.c.l.b16 %v2377
    %v2840 = vunpack.c.h.b16 %v2377
    %v2841 = vunpack.c.l.b16 %v2378
    %v2842 = vunpack.c.h.b16 %v2378
    %v2843 = vunpack.c.l.b16 %v2379
    %v2844 = vunpack.c.h.b16 %v2379
    %v2845 = vunpack.c.l.b16 %v2380
    %v2846 = vunpack.c.h.b16 %v2380
    %v2847 = vunpack.c.l.b16 %v2381
    %v2848 = vunpack.c.h.b16 %v2381
    %v2849 = vunpack.c.l.b16 %v2382
    %v2850 = vunpack.c.h.b16 %v2382
    %v2851 = vunpack.c.l.b16 %v2383
    %v2852 = vunpack.c.h.b16 %v2383
    %v2853 = vunpack.c.l.b16 %v2384
    %v2854 = vunpack.c.h.b16 %v2384
    %v2855 = vunpack.c.l.b16 %v2385
    %v2856 = vunpack.c.h.b16 %v2385
    %v2857 = vunpack.c.l.b16 %v2386
    %v2858 = vunpack.c.h.b16 %v2386
    %v2859 = vunpack.c.l.b16 %v2387
    %v2860 = vunpack.c.h.b16 %v2387
    %v2861 = vunpack.c.l.b16 %v2388
    %v2862 = vunpack.c.h.b16 %v2388
    %v2863 = vunpack.c.l.b16 %v2389
    %v2864 = vunpack.c.h.b16 %v2389
    %v2865 = vunpack.c.l.b16 %v2390
    %v2866 = vunpack.c.h.b16 %v2390
    %v2867 = vunpack.c.l.b16 %v2391
    %v2868 = vunpack.c.h.b16 %v2391
    %v2869 = vunpack.c.l.b16 %v2392
    %v2870 = vunpack.c.h.b16 %v2392
    %v2871 = vunpack.c.l.b16 %v2393
    %v2872 = vunpack.c.h.b16 %v2393
    %v2873 = vunpack.c.l.b16 %v2394
    %v2874 = vunpack.c.h.b16 %v2394
    %v2875 = vunpack.c.l.b16 %v2395
    %v2876 = vunpack.c.h.b16 %v2395
    %v2877 = vunpack.c.l.b16 %v2396
    %v2878 = vunpack.c.h.b16 %v2396
    %v2879 = vunpack.c.l.b16 %v2397
    %v2880 = vunpack.c.h.b16 %v2397
    %v2881 = vunpack.c.l.b16 %v2398
    %v2882 = vunpack.c.h.b16 %v2398
    %v2883 = vunpack.c.l.b16 %v2399
    %v2884 = vunpack.c.h.b16 %v2399
    %v2885 = vunpack.c.l.b16 %v2400
    %v2886 = vunpack.c.h.b16 %v2400
    %v2887 = vunpack.c.l.b16 %v2401
    %v2888 = vunpack.c.h.b16 %v2401
    %v2889 = vunpack.c.l.b16 %v2402
    %v2890 = vunpack.c.h.b16 %v2402
    %v2891 = vunpack.c.l.b16 %v2403
    %v2892 = vunpack.c.h.b16 %v2403
    %v2893 = vunpack.c.l.b16 %v2404
    %v2894 = vunpack.c.h.b16 %v2404
    %v2895 = vunpack.c.l.b16 %v2405
    %v2896 = vunpack.c.h.b16 %v2405
    %v2897 = vunpack.c.l.b16 %v2406
    %v2898 = vunpack.c.h.b16 %v2406
    %v2899 = vunpack.c.l.b16 %v2407
    %v2900 = vunpack.c.h.b16 %v2407
    %v2901 = vunpack.c.l.b16 %v2408
    %v2902 = vunpack.c.h.b16 %v2408
    %v2903 = vunpack.c.l.b16 %v2409
    %v2904 = vunpack.c.h.b16 %v2409
    %v2905 = vunpack.c.l.b16 %v2410
    %v2906 = vunpack.c.h.b16 %v2410
    %v2907 = vunpack.c.l.b16 %v2411
    %v2908 = vunpack.c.h.b16 %v2411
    %v2909 = vunpack.c.l.b16 %v2412
    %v2910 = vunpack.c.h.b16 %v2412
    %v2911 = vunpack.c.l.b16 %v2413
    %v2912 = vunpack.c.h.b16 %v2413
    %v2913 = vunpack.c.l.b16 %v2414
    %v2914 = vunpack.c.h.b16 %v2414
    %v2915 = vunpack.c.l.b16 %v2415
    %v2916 = vunpack.c.h.b16 %v2415
    %v2917 = vunpack.c.l.b16 %v2416
    %v2918 = vunpack.c.h.b16 %v2416
    %v2919 = vpack.c.b16 %v2603, %v2599
    %v2920 = vpack.c.b16 %v2604, %v2600
    %v2921 = vpack.c.b16 %v2605, %v2601
    %v2922 = vpack.c.b16 %v2606, %v2602
    %v2923 = vpack.c.b16 %v2611, %v2607
    %v2924 = vpack.c.b16 %v2612, %v2608
    %v2925 = vpack.c.b16 %v2613, %v2609
    %v2926 = vpack.c.b16 %v2614, %v2610
    %v2927 = vpack.c.b16 %v2619, %v2615
    %v2928 = vpack.c.b16 %v2620, %v2616
    %v2929 = vpack.c.b16 %v2621, %v2617
    %v2930 = vpack.c.b16 %v2622, %v2618
    %v2931 = vpack.c.b16 %v2627, %v2623
    %v2932 = vpack.c.b16 %v2628, %v2624
    %v2933 = vpack.c.b16 %v2629, %v2625
    %v2934 = vpack.c.b16 %v2630, %v2626
    %v2935 = vpack.c.b16 %v2635, %v2631
    %v2936 = vpack.c.b16 %v2636, %v2632
    %v2937 = vpack.c.b16 %v2637, %v2633
    %v2938 = vpack.c.b16 %v2638, %v2634
    %v2939 = vpack.c.b16 %v2643, %v2639
    %v2940 = vpack.c.b16 %v2644, %v2640
    %v2941 = vpack.c.b16 %v2645, %v2641
    %v2942 = vpack.c.b16 %v2646, %v2642
    %v2943 = vpack.c.b16 %v2651, %v2647
    %v2944 = vpack.c.b16 %v2652, %v2648
    %v2945 = vpack.c.b16 %v2653, %v2649
    %v2946 = vpack.c.b16 %v2654, %v2650
    %v2947 = vpack.c.b16 %v2659, %v2655
    %v2948 = vpack.c.b16 %v2660, %v2656
    %v2949 = vpack.c.b16 %v2661, %v2657
    %v2950 = vpack.c.b16 %v2662, %v2658
    %v2951 = vpack.c.b16 %v2667, %v2663
    %v2952 = vpack.c.b16 %v2668, %v2664
    %v2953 = vpack.c.b16 %v2669, %v2665
    %v2954 = vpack.c.b16 %v2670, %v2666
    %v2955 = vpack.c.b16 %v2675, %v2671
    %v2956 = vpack.c.b16 %v2676, %v2672
    %v2957 = vpack.c.b16 %v2677, %v2673
    %v2958 = vpack.c.b16 %v2678, %v2674
    %v2959 = vpack.c.b16 %v2683, %v2679
    %v2960 = vpack.c.b16 %v2684, %v2680
    %v2961 = vpack.c.b16 %v2685, %v2681
    %v2962 = vpack.c.b16 %v2686, %v2682
    %v2963 = vpack.c.b16 %v2691, %v2687
    %v2964 = vpack.c.b16 %v2692, %v2688
    %v2965 = vpack.c.b16 %v2693, %v2689
    %v2966 = vpack.c.b16 %v2694, %v2690
    %v2967 = vpack.c.b16 %v2699, %v2695
    %v2968 = vpack.c.b16 %v2700, %v2696
    %v2969 = vpack.c.b16 %v2701, %v2697
    %v2970 = vpack.c.b16 %v2702, %v2698
    %v2971 = vpack.c.b16 %v2707, %v2703
    %v2972 = vpack.c.b16 %v2708, %v2704
    %v2973 = vpack.c.b16 %v2709, %v2705
    %v2974 = vpack.c.b16 %v2710, %v2706
    %v2975 = vpack.c.b16 %v2715, %v2711
    %v2976 = vpack.c.b16 %v2716, %v2712
    %v2977 = vpack.c.b16 %v2717, %v2713
    %v2978 = vpack.c.b16 %v2718, %v2714
    %v2979 = vpack.c.b16 %v2723, %v2719
    %v2980 = vpack.c.b16 %v2724, %v2720
    %v2981 = vpack.c.b16 %v2725, %v2721
    %v2982 = vpack.c.b16 %v2726, %v2722
    %v2983 = vpack.c.b16 %v2731, %v2727
    %v2984 = vpack.c.b16 %v2732, %v2728
    %v2985 = vpack.c.b16 %v2733, %v2729
    %v2986 = vpack.c.b16 %v2734, %v2730
    %v2987 = vpack.c.b16 %v2739, %v2735
    %v2988 = vpack.c.b16 %v2740, %v2736
    %v2989 = vpack.c.b16 %v2741, %v2737
    %v2990 = vpack.c.b16 %v2742, %v2738
    %v2991 = vpack.c.b16 %v2747, %v2743
    %v2992 = vpack.c.b16 %v2748, %v2744
    %v2993 = vpack.c.b16 %v2749, %v2745
    %v2994 = vpack.c.b16 %v2750, %v2746
    %v2995 = vpack.c.b16 %v2755, %v2751
    %v2996 = vpack.c.b16 %v2756, %v2752
    %v2997 = vpack.c.b16 %v2757, %v2753
    %v2998 = vpack.c.b16 %v2758, %v2754
    %v2999 = vpack.c.b16 %v2763, %v2759
    %v3000 = vpack.c.b16 %v2764, %v2760
    %v3001 = vpack.c.b16 %v2765, %v2761
    %v3002 = vpack.c.b16 %v2766, %v2762
    %v3003 = vpack.c.b16 %v2771, %v2767
    %v3004 = vpack.c.b16 %v2772, %v2768
    %v3005 = vpack.c.b16 %v2773, %v2769
    %v3006 = vpack.c.b16 %v2774, %v2770
    %v3007 = vpack.c.b16 %v2779, %v2775
    %v3008 = vpack.c.b16 %v2780, %v2776
    %v3009 = vpack.c.b16 %v2781, %v2777
    %v3010 = vpack.c.b16 %v2782, %v2778
    %v3011 = vpack.c.b16 %v2787, %v2783
    %v3012 = vpack.c.b16 %v2788, %v2784
    %v3013 = vpack.c.b16 %v2789, %v2785
    %v3014 = vpack.c.b16 %v2790, %v2786
    %v3015 = vpack.c.b16 %v2795, %v2791
    %v3016 = vpack.c.b16 %v2796, %v2792
    %v3017 = vpack.c.b16 %v2797, %v2793
    %v3018 = vpack.c.b16 %v2798, %v2794
    %v3019 = vpack.c.b16 %v2803, %v2799
    %v3020 = vpack.c.b16 %v2804, %v2800
    %v3021 = vpack.c.b16 %v2805, %v2801
    %v3022 = vpack.c.b16 %v2806, %v2802
    %v3023 = vpack.c.b16 %v2811, %v2807
    %v3024 = vpack.c.b16 %v2812, %v2808
    %v3025 = vpack.c.b16 %v2813, %v2809
    %v3026 = vpack.c.b16 %v2814, %v2810
    %v3027 = vpack.c.b16 %v2819, %v2815
    %v3028 = vpack.c.b16 %v2820, %v2816
    %v3029 = vpack.c.b16 %v2821, %v2817
    %v3030 = vpack.c.b16 %v2822, %v2818
    %v3031 = vpack.c.b16 %v2827, %v2823
    %v3032 = vpack.c.b16 %v2828, %v2824
    %v3033 = vpack.c.b16 %v2829, %v2825
    %v3034 = vpack.c.b16 %v2830, %v2826
    %v3035 = vpack.c.b16 %v2835, %v2831
    %v3036 = vpack.c.b16 %v2836, %v2832
    %v3037 = vpack.c.b16 %v2837, %v2833
    %v3038 = vpack.c.b16 %v2838, %v2834
    %v3039 = vpack.c.b16 %v2843, %v2839
    %v3040 = vpack.c.b16 %v2844, %v2840
    %v3041 = vpack.c.b16 %v2845, %v2841
    %v3042 = vpack.c.b16 %v2846, %v2842
    %v3043 = vpack.c.b16 %v2851, %v2847
    %v3044 = vpack.c.b16 %v2852, %v2848
    %v3045 = vpack.c.b16 %v2853, %v2849
    %v3046 = vpack.c.b16 %v2854, %v2850
    %v3047 = vpack.c.b16 %v2859, %v2855
    %v3048 = vpack.c.b16 %v2860, %v2856
    %v3049 = vpack.c.b16 %v2861, %v2857
    %v3050 = vpack.c.b16 %v2862, %v2858
    %v3051 = vpack.c.b16 %v2867, %v2863
    %v3052 = vpack.c.b16 %v2868, %v2864
    %v3053 = vpack.c.b16 %v2869, %v2865
    %v3054 = vpack.c.b16 %v2870, %v2866
    %v3055 = vpack.c.b16 %v2875, %v2871
    %v3056 = vpack.c.b16 %v2876, %v2872
    %v3057 = vpack.c.b16 %v2877, %v2873
    %v3058 = vpack.c.b16 %v2878, %v2874
    %v3059 = vpack.c.b16 %v2883, %v2879
    %v3060 = vpack.c.b16 %v2884, %v2880
    %v3061 = vpack.c.b16 %v2885, %v2881
    %v3062 = vpack.c.b16 %v2886, %v2882
    %v3063 = vpack.c.b16 %v2891, %v2887
    %v3064 = vpack.c.b16 %v2892, %v2888
    %v3065 = vpack.c.b16 %v2893, %v2889
    %v3066 = vpack.c.b16 %v2894, %v2890
    %v3067 = vpack.c.b16 %v2899, %v2895
    %v3068 = vpack.c.b16 %v2900, %v2896
    %v3069 = vpack.c.b16 %v2901, %v2897
    %v3070 = vpack.c.b16 %v2902, %v2898
    %v3071 = vpack.c.b16 %v2907, %v2903
    %v3072 = vpack.c.b16 %v2908, %v2904
    %v3073 = vpack.c.b16 %v2909, %v2905
    %v3074 = vpack.c.b16 %v2910, %v2906
    %v3075 = vpack.c.b16 %v2915, %v2911
    %v3076 = vpack.c.b16 %v2916, %v2912
    %v3077 = vpack.c.b16 %v2917, %v2913
    %v3078 = vpack.c.b16 %v2918, %v2914
    %3239 = vmatprep.subr.bf16.mxu0 %v2920
    %3240 = vmatpush1.bf16.msra.mxu0 %v2919
    %3241 = vmatprep.subr.bf16.mxu0 %v2924
    %3242 = vmatpush1.bf16.msra.mxu0 %v2923
    %3243 = vmatprep.subr.bf16.mxu0 %v2928
    %3244 = vmatpush1.bf16.msra.mxu0 %v2927
    %3245 = vmatprep.subr.bf16.mxu0 %v2932
    %3246 = vmatpush1.bf16.msra.mxu0 %v2931
    %3247 = vmatprep.subr.bf16.mxu0 %v2936
    %3248 = vmatpush1.bf16.msra.mxu0 %v2935
    %3249 = vmatprep.subr.bf16.mxu0 %v2940
    %3250 = vmatpush1.bf16.msra.mxu0 %v2939
    %3251 = vmatprep.subr.bf16.mxu0 %v2944
    %3252 = vmatpush1.bf16.msra.mxu0 %v2943
    %3253 = vmatprep.subr.bf16.mxu0 %v2948
    %3254 = vmatpush1.bf16.msra.mxu0 %v2947
    %3255 = vmatprep.subr.bf16.mxu0 %v2952
    %3256 = vmatpush1.bf16.msra.mxu0 %v2951
    %3257 = vmatprep.subr.bf16.mxu0 %v2956
    %3258 = vmatpush1.bf16.msra.mxu0 %v2955
    %3259 = vmatprep.subr.bf16.mxu0 %v2960
    %3260 = vmatpush1.bf16.msra.mxu0 %v2959
    %3261 = vmatprep.subr.bf16.mxu0 %v2964
    %3262 = vmatpush1.bf16.msra.mxu0 %v2963
    %3263 = vmatprep.subr.bf16.mxu0 %v2968
    %3264 = vmatpush1.bf16.msra.mxu0 %v2967
    %3265 = vmatprep.subr.bf16.mxu0 %v2972
    %3266 = vmatpush1.bf16.msra.mxu0 %v2971
    %3267 = vmatprep.subr.bf16.mxu0 %v2976
    %3268 = vmatpush1.bf16.msra.mxu0 %v2975
    %3269 = vmatprep.subr.bf16.mxu0 %v2980
    %3270 = vmatpush1.bf16.msra.mxu0 %v2979
    %3271 = vmatprep.mubr.bf16.mxu0 %v2253
    %3272 = vmatmul.mubr.bf16.gmra.mrb[0].mxu0 %v2252
    %v3273 = vpop.f32.mrb[0].mxu0
    %v3274 = vadd.f32 %v2422, %v3273
    %v3275 = vpop.f32.mrb[0].mxu0
    %v3276 = vadd.f32 %v2426, %v3275
    %v3277 = vpop.f32.mrb[0].mxu0
    %v3278 = vpop.f32.mrb[0].mxu0
    %3279 = vdwg.mxu0
    %3280 = vmatprep.subr.bf16.mxu0 %v2984
    %3281 = vmatpush1.bf16.msra.mxu0 %v2983
    %3282 = vmatprep.subr.bf16.mxu0 %v2988
    %3283 = vmatpush1.bf16.msra.mxu0 %v2987
    %3284 = vmatprep.subr.bf16.mxu0 %v2992
    %3285 = vmatpush1.bf16.msra.mxu0 %v2991
    %3286 = vmatprep.subr.bf16.mxu0 %v2996
    %3287 = vmatpush1.bf16.msra.mxu0 %v2995
    %3288 = vmatprep.subr.bf16.mxu0 %v3000
    %3289 = vmatpush1.bf16.msra.mxu0 %v2999
    %3290 = vmatprep.subr.bf16.mxu0 %v3004
    %3291 = vmatpush1.bf16.msra.mxu0 %v3003
    %3292 = vmatprep.subr.bf16.mxu0 %v3008
    %3293 = vmatpush1.bf16.msra.mxu0 %v3007
    %3294 = vmatprep.subr.bf16.mxu0 %v3012
    %3295 = vmatpush1.bf16.msra.mxu0 %v3011
    %3296 = vmatprep.subr.bf16.mxu0 %v3016
    %3297 = vmatpush1.bf16.msra.mxu0 %v3015
    %3298 = vmatprep.subr.bf16.mxu0 %v3020
    %3299 = vmatpush1.bf16.msra.mxu0 %v3019
    %3300 = vmatprep.subr.bf16.mxu0 %v3024
    %3301 = vmatpush1.bf16.msra.mxu0 %v3023
    %3302 = vmatprep.subr.bf16.mxu0 %v3028
    %3303 = vmatpush1.bf16.msra.mxu0 %v3027
    %3304 = vmatprep.subr.bf16.mxu0 %v3032
    %3305 = vmatpush1.bf16.msra.mxu0 %v3031
    %3306 = vmatprep.subr.bf16.mxu0 %v3036
    %3307 = vmatpush1.bf16.msra.mxu0 %v3035
    %3308 = vmatprep.subr.bf16.mxu0 %v3040
    %3309 = vmatpush1.bf16.msra.mxu0 %v3039
    %3310 = vmatprep.subr.bf16.mxu0 %v3044
    %3311 = vmatpush1.bf16.msra.mxu0 %v3043
    %3312 = vmatprep.mubr.bf16.mxu0 %v2255
    %3313 = vmatmul.mubr.bf16.gmra.mrb[0].mxu0 %v2254
    %v3314 = vpop.f32.mrb[0].mxu0
    %v3315 = vadd.f32 %v3274, %v3314
    %v3316 = vpop.f32.mrb[0].mxu0
    %v3317 = vadd.f32 %v3276, %v3316
    %v3318 = vpop.f32.mrb[0].mxu0
    %v3319 = vpop.f32.mrb[0].mxu0
    %3320 = vdwg.mxu0
    %3321 = vmatprep.subr.bf16.mxu0 %v3048
    %3322 = vmatpush1.bf16.msra.mxu0 %v3047
    %3323 = vmatprep.subr.bf16.mxu0 %v3052
    %3324 = vmatpush1.bf16.msra.mxu0 %v3051
    %3325 = vmatprep.subr.bf16.mxu0 %v3056
    %3326 = vmatpush1.bf16.msra.mxu0 %v3055
    %3327 = vmatprep.subr.bf16.mxu0 %v3060
    %3328 = vmatpush1.bf16.msra.mxu0 %v3059
    %3329 = vmatprep.subr.bf16.mxu0 %v3064
    %3330 = vmatpush1.bf16.msra.mxu0 %v3063
    %3331 = vmatprep.subr.bf16.mxu0 %v3068
    %3332 = vmatpush1.bf16.msra.mxu0 %v3067
    %3333 = vmatprep.subr.bf16.mxu0 %v3072
    %3334 = vmatpush1.bf16.msra.mxu0 %v3071
    %3335 = vmatprep.subr.bf16.mxu0 %v3076
    %3336 = vmatpush1.bf16.msra.mxu0 %v3075
    %3337 = vmatprep.subr.bf16.mxu0 0
    %3338 = vmatpush1.bf16.msra.mxu0 0
    %3339 = vmatprep.subr.bf16.mxu0 0
    %3340 = vmatpush1.bf16.msra.mxu0 0
    %3341 = vmatprep.subr.bf16.mxu0 0
    %3342 = vmatpush1.bf16.msra.mxu0 0
    %3343 = vmatprep.subr.bf16.mxu0 0
    %3344 = vmatpush1.bf16.msra.mxu0 0
    %3345 = vmatprep.subr.bf16.mxu0 0
    %3346 = vmatpush1.bf16.msra.mxu0 0
    %3347 = vmatprep.subr.bf16.mxu0 0
    %3348 = vmatpush1.bf16.msra.mxu0 0
    %3349 = vmatprep.subr.bf16.mxu0 0
    %3350 = vmatpush1.bf16.msra.mxu0 0
    %3351 = vmatprep.subr.bf16.mxu0 0
    %3352 = vmatpush1.bf16.msra.mxu0 0
    %3353 = vmatprep.mubr.bf16.mxu0 0
    %3354 = vmatmul.mubr.bf16.gmra.mrb[0].mxu0 %v2256
    %v3355 = vpop.f32.mrb[0].mxu0
    %v3356 = vadd.f32 %v3315, %v3355
    %v3357 = vpop.f32.mrb[0].mxu0
    %v3358 = vadd.f32 %v3317, %v3357
    %v3359 = vpop.f32.mrb[0].mxu0
    %v3360 = vpop.f32.mrb[0].mxu0
    %3361 = vdwg.mxu0
    %3362 = vmatprep.subr.bf16.mxu0 %v2922
    %3363 = vmatpush1.bf16.msra.mxu0 %v2921
    %3364 = vmatprep.subr.bf16.mxu0 %v2926
    %3365 = vmatpush1.bf16.msra.mxu0 %v2925
    %3366 = vmatprep.subr.bf16.mxu0 %v2930
    %3367 = vmatpush1.bf16.msra.mxu0 %v2929
    %3368 = vmatprep.subr.bf16.mxu0 %v2934
    %3369 = vmatpush1.bf16.msra.mxu0 %v2933
    %3370 = vmatprep.subr.bf16.mxu0 %v2938
    %3371 = vmatpush1.bf16.msra.mxu0 %v2937
    %3372 = vmatprep.subr.bf16.mxu0 %v2942
    %3373 = vmatpush1.bf16.msra.mxu0 %v2941
    %3374 = vmatprep.subr.bf16.mxu0 %v2946
    %3375 = vmatpush1.bf16.msra.mxu0 %v2945
    %3376 = vmatprep.subr.bf16.mxu0 %v2950
    %3377 = vmatpush1.bf16.msra.mxu0 %v2949
    %3378 = vmatprep.subr.bf16.mxu0 %v2954
    %3379 = vmatpush1.bf16.msra.mxu0 %v2953
    %3380 = vmatprep.subr.bf16.mxu0 %v2958
    %3381 = vmatpush1.bf16.msra.mxu0 %v2957
    %3382 = vmatprep.subr.bf16.mxu0 %v2962
    %3383 = vmatpush1.bf16.msra.mxu0 %v2961
    %3384 = vmatprep.subr.bf16.mxu0 %v2966
    %3385 = vmatpush1.bf16.msra.mxu0 %v2965
    %3386 = vmatprep.subr.bf16.mxu0 %v2970
    %3387 = vmatpush1.bf16.msra.mxu0 %v2969
    %3388 = vmatprep.subr.bf16.mxu0 %v2974
    %3389 = vmatpush1.bf16.msra.mxu0 %v2973
    %3390 = vmatprep.subr.bf16.mxu0 %v2978
    %3391 = vmatpush1.bf16.msra.mxu0 %v2977
    %3392 = vmatprep.subr.bf16.mxu0 %v2982
    %3393 = vmatpush1.bf16.msra.mxu0 %v2981
    %3394 = vmatprep.mubr.bf16.mxu0 %v2253
    %3395 = vmatmul.mubr.bf16.gmra.mrb[0].mxu0 %v2252
    %v3396 = vpop.f32.mrb[0].mxu0
    %v3397 = vadd.f32 %v2430, %v3396
    %v3398 = vpop.f32.mrb[0].mxu0
    %v3399 = vadd.f32 %v2434, %v3398
    %v3400 = vpop.f32.mrb[0].mxu0
    %v3401 = vpop.f32.mrb[0].mxu0
    %3402 = vdwg.mxu0
    %3403 = vmatprep.subr.bf16.mxu0 %v2986
    %3404 = vmatpush1.bf16.msra.mxu0 %v2985
    %3405 = vmatprep.subr.bf16.mxu0 %v2990
    %3406 = vmatpush1.bf16.msra.mxu0 %v2989
    %3407 = vmatprep.subr.bf16.mxu0 %v2994
    %3408 = vmatpush1.bf16.msra.mxu0 %v2993
    %3409 = vmatprep.subr.bf16.mxu0 %v2998
    %3410 = vmatpush1.bf16.msra.mxu0 %v2997
    %3411 = vmatprep.subr.bf16.mxu0 %v3002
    %3412 = vmatpush1.bf16.msra.mxu0 %v3001
    %3413 = vmatprep.subr.bf16.mxu0 %v3006
    %3414 = vmatpush1.bf16.msra.mxu0 %v3005
    %3415 = vmatprep.subr.bf16.mxu0 %v3010
    %3416 = vmatpush1.bf16.msra.mxu0 %v3009
    %3417 = vmatprep.subr.bf16.mxu0 %v3014
    %3418 = vmatpush1.bf16.msra.mxu0 %v3013
    %3419 = vmatprep.subr.bf16.mxu0 %v3018
    %3420 = vmatpush1.bf16.msra.mxu0 %v3017
    %3421 = vmatprep.subr.bf16.mxu0 %v3022
    %3422 = vmatpush1.bf16.msra.mxu0 %v3021
    %3423 = vmatprep.subr.bf16.mxu0 %v3026
    %3424 = vmatpush1.bf16.msra.mxu0 %v3025
    %3425 = vmatprep.subr.bf16.mxu0 %v3030
    %3426 = vmatpush1.bf16.msra.mxu0 %v3029
    %3427 = vmatprep.subr.bf16.mxu0 %v3034
    %3428 = vmatpush1.bf16.msra.mxu0 %v3033
    %3429 = vmatprep.subr.bf16.mxu0 %v3038
    %3430 = vmatpush1.bf16.msra.mxu0 %v3037
    %3431 = vmatprep.subr.bf16.mxu0 %v3042
    %3432 = vmatpush1.bf16.msra.mxu0 %v3041
    %3433 = vmatprep.subr.bf16.mxu0 %v3046
    %3434 = vmatpush1.bf16.msra.mxu0 %v3045
    %3435 = vmatprep.mubr.bf16.mxu0 %v2255
    %3436 = vmatmul.mubr.bf16.gmra.mrb[0].mxu0 %v2254
    %v3437 = vpop.f32.mrb[0].mxu0
    %v3438 = vadd.f32 %v3397, %v3437
    %v3439 = vpop.f32.mrb[0].mxu0
    %v3440 = vadd.f32 %v3399, %v3439
    %v3441 = vpop.f32.mrb[0].mxu0
    %v3442 = vpop.f32.mrb[0].mxu0
    %3443 = vdwg.mxu0
    %3444 = vmatprep.subr.bf16.mxu0 %v3050
    %3445 = vmatpush1.bf16.msra.mxu0 %v3049
    %3446 = vmatprep.subr.bf16.mxu0 %v3054
    %3447 = vmatpush1.bf16.msra.mxu0 %v3053
    %3448 = vmatprep.subr.bf16.mxu0 %v3058
    %3449 = vmatpush1.bf16.msra.mxu0 %v3057
    %3450 = vmatprep.subr.bf16.mxu0 %v3062
    %3451 = vmatpush1.bf16.msra.mxu0 %v3061
    %3452 = vmatprep.subr.bf16.mxu0 %v3066
    %3453 = vmatpush1.bf16.msra.mxu0 %v3065
    %3454 = vmatprep.subr.bf16.mxu0 %v3070
    %3455 = vmatpush1.bf16.msra.mxu0 %v3069
    %3456 = vmatprep.subr.bf16.mxu0 %v3074
    %3457 = vmatpush1.bf16.msra.mxu0 %v3073
    %3458 = vmatprep.subr.bf16.mxu0 %v3078
    %3459 = vmatpush1.bf16.msra.mxu0 %v3077
    %3460 = vmatprep.subr.bf16.mxu0 0
    %3461 = vmatpush1.bf16.msra.mxu0 0
    %3462 = vmatprep.subr.bf16.mxu0 0
    %3463 = vmatpush1.bf16.msra.mxu0 0
    %3464 = vmatprep.subr.bf16.mxu0 0
    %3465 = vmatpush1.bf16.msra.mxu0 0
    %3466 = vmatprep.subr.bf16.mxu0 0
    %3467 = vmatpush1.bf16.msra.mxu0 0
    %3468 = vmatprep.subr.bf16.mxu0 0
    %3469 = vmatpush1.bf16.msra.mxu0 0
    %3470 = vmatprep.subr.bf16.mxu0 0
    %3471 = vmatpush1.bf16.msra.mxu0 0
    %3472 = vmatprep.subr.bf16.mxu0 0
    %3473 = vmatpush1.bf16.msra.mxu0 0
    %3474 = vmatprep.subr.bf16.mxu0 0
    %3475 = vmatpush1.bf16.msra.mxu0 0
    %3476 = vmatprep.mubr.bf16.mxu0 0
    %3477 = vmatmul.mubr.bf16.gmra.mrb[0].mxu0 %v2256
    %v3478 = vpop.f32.mrb[0].mxu0
    %v3479 = vadd.f32 %v3438, %v3478
    %v3480 = vpop.f32.mrb[0].mxu0
    %v3481 = vadd.f32 %v3440, %v3480
    %v3482 = vpop.f32.mrb[0].mxu0
    %v3483 = vpop.f32.mrb[0].mxu0
    %3484 = vdwg.mxu0
    %v3485 = vmax.f32 %v3356, 0.0
    %v3486 = vmax.f32 %v3358, 0.0
    %v3487 = vmax.f32 %v3479, 0.0
    %v3488 = vmax.f32 %v3481, 0.0
    %v3489 = vpack.c.bf16 %v3485, %v3485
    %v3490 = vpack.c.bf16 %v3486, %v3486
    %v3491 = vpack.c.bf16 %v3487, %v3487
    %v3492 = vpack.c.bf16 %v3488, %v3488
    %v3493 = vld [vmem:[#allocation11] sm:$0xf]
    %v3494 = vld [vmem:[#allocation11 + $0x4] sm:$0xf]
    %v3495 = vld [vmem:[#allocation11 + $0x8] sm:$0xf]
    %v3496 = vld [vmem:[#allocation11 + $0xc] sm:$0xf]
    %v3497 = vld [vmem:[#allocation11 + $0x10] sm:$0xf]
    %v3498 = vld [vmem:[#allocation11 + $0x14] sm:$0xf]
    %v3499 = vld [vmem:[#allocation11 + $0x18] sm:$0xf]
    %v3500 = vld [vmem:[#allocation11 + $0x1c] sm:$0xf]
    %v3501 = vld [vmem:[#allocation11 + $0x20] sm:$0xf]
    %v3502 = vld [vmem:[#allocation11 + $0x24] sm:$0xf]
    %v3503 = vld [vmem:[#allocation11 + $0x28] sm:$0xf]
    %v3504 = vld [vmem:[#allocation11 + $0x2c] sm:$0xf]
    %v3505 = vld [vmem:[#allocation11 + $0x30] sm:$0xf]
    %v3506 = vld [vmem:[#allocation11 + $0x34] sm:$0xf]
    %v3507 = vld [vmem:[#allocation11 + $0x38] sm:$0xf]
    %v3508 = vld [vmem:[#allocation11 + $0x3c] sm:$0xf]
    %v3509 = vld [vmem:[#allocation11 + $0x40] sm:$0xf]
    %v3510 = vld [vmem:[#allocation11 + $0x44] sm:$0xf]
    %v3511 = vld [vmem:[#allocation11 + $0x48] sm:$0xf]
    %v3512 = vld [vmem:[#allocation11 + $0x4c] sm:$0xf]
    %v3513 = vld [vmem:[#allocation11 + $0x50] sm:$0xf]
    %v3514 = vld [vmem:[#allocation11 + $0x54] sm:$0xf]
    %v3515 = vld [vmem:[#allocation11 + $0x58] sm:$0xf]
    %v3516 = vld [vmem:[#allocation11 + $0x5c] sm:$0xf]
    %v3517 = vld [vmem:[#allocation11 + $0x60] sm:$0xf]
    %v3518 = vld [vmem:[#allocation11 + $0x64] sm:$0xf]
    %v3519 = vld [vmem:[#allocation11 + $0x68] sm:$0xf]
    %v3520 = vld [vmem:[#allocation11 + $0x6c] sm:$0xf]
    %v3521 = vld [vmem:[#allocation11 + $0x70] sm:$0xf]
    %v3522 = vld [vmem:[#allocation11 + $0x74] sm:$0xf]
    %v3523 = vld [vmem:[#allocation11 + $0x78] sm:$0xf]
    %v3524 = vld [vmem:[#allocation11 + $0x7c] sm:$0xf]
    %v3525 = vld [vmem:[#allocation11 + $0x80] sm:$0xf]
    %v3526 = vld [vmem:[#allocation11 + $0x84] sm:$0xf]
    %v3527 = vld [vmem:[#allocation11 + $0x88] sm:$0xf]
    %v3528 = vld [vmem:[#allocation11 + $0x8c] sm:$0xf]
    %v3529 = vld [vmem:[#allocation11 + $0x90] sm:$0xf]
    %v3530 = vld [vmem:[#allocation11 + $0x94] sm:$0xf]
    %v3531 = vld [vmem:[#allocation11 + $0x98] sm:$0xf]
    %v3532 = vld [vmem:[#allocation11 + $0x9c] sm:$0xf]
    %v3533 = vld [vmem:[#allocation11 + $0xa0] sm:$0xf]
    %v3534 = vld [vmem:[#allocation11 + $0xa4] sm:$0xf]
    %v3535 = vld [vmem:[#allocation11 + $0xa8] sm:$0xf]
    %v3536 = vld [vmem:[#allocation11 + $0xac] sm:$0xf]
    %v3537 = vld [vmem:[#allocation11 + $0xb0] sm:$0xf]
    %v3538 = vld [vmem:[#allocation11 + $0xb4] sm:$0xf]
    %v3539 = vld [vmem:[#allocation11 + $0xb8] sm:$0xf]
    %v3540 = vld [vmem:[#allocation11 + $0xbc] sm:$0xf]
    %v3541 = vld [vmem:[#allocation11 + $0xc0] sm:$0xf]
    %v3542 = vld [vmem:[#allocation11 + $0xc4] sm:$0xf]
    %v3543 = vld [vmem:[#allocation11 + $0xc8] sm:$0xf]
    %v3544 = vld [vmem:[#allocation11 + $0xcc] sm:$0xf]
    %v3545 = vld [vmem:[#allocation11 + $0xd0] sm:$0xf]
    %v3546 = vld [vmem:[#allocation11 + $0xd4] sm:$0xf]
    %v3547 = vld [vmem:[#allocation11 + $0xd8] sm:$0xf]
    %v3548 = vld [vmem:[#allocation11 + $0xdc] sm:$0xf]
    %v3549 = vld [vmem:[#allocation11 + $0xe0] sm:$0xf]
    %v3550 = vld [vmem:[#allocation11 + $0xe4] sm:$0xf]
    %v3551 = vld [vmem:[#allocation11 + $0xe8] sm:$0xf]
    %v3552 = vld [vmem:[#allocation11 + $0xec] sm:$0xf]
    %v3553 = vld [vmem:[#allocation11 + $0xf0] sm:$0xf]
    %v3554 = vld [vmem:[#allocation11 + $0xf4] sm:$0xf]
    %v3555 = vld [vmem:[#allocation11 + $0xf8] sm:$0xf]
    %v3556 = vld [vmem:[#allocation11 + $0xfc] sm:$0xf]
    %v3557 = vld [vmem:[#allocation13] sm:$0x1]
    %v3559 = vlaneseq
    %v3560 = vshrl.u32 %v3559, 7
    %v3561 = vsub.s32 0, %v3560
    %v3562 = vrot.slane %v3557, %v3561
    %v3628 = vunpack.c.l.b16 %v3493
    %v3629 = vunpack.c.l.b16 %v3494
    %v3630 = vunpack.c.l.b16 %v3495
    %v3631 = vunpack.c.l.b16 %v3496
    %v3632 = vunpack.c.l.b16 %v3497
    %v3633 = vunpack.c.l.b16 %v3498
    %v3634 = vunpack.c.l.b16 %v3499
    %v3635 = vunpack.c.l.b16 %v3500
    %v3636 = vunpack.c.l.b16 %v3501
    %v3637 = vunpack.c.l.b16 %v3502
    %v3638 = vunpack.c.l.b16 %v3503
    %v3639 = vunpack.c.l.b16 %v3504
    %v3640 = vunpack.c.l.b16 %v3505
    %v3641 = vunpack.c.l.b16 %v3506
    %v3642 = vunpack.c.l.b16 %v3507
    %v3643 = vunpack.c.l.b16 %v3508
    %v3644 = vunpack.c.l.b16 %v3509
    %v3645 = vunpack.c.l.b16 %v3510
    %v3646 = vunpack.c.l.b16 %v3511
    %v3647 = vunpack.c.l.b16 %v3512
    %v3648 = vunpack.c.l.b16 %v3513
    %v3649 = vunpack.c.l.b16 %v3514
    %v3650 = vunpack.c.l.b16 %v3515
    %v3651 = vunpack.c.l.b16 %v3516
    %v3652 = vunpack.c.l.b16 %v3517
    %v3653 = vunpack.c.l.b16 %v3518
    %v3654 = vunpack.c.l.b16 %v3519
    %v3655 = vunpack.c.l.b16 %v3520
    %v3656 = vunpack.c.l.b16 %v3521
    %v3657 = vunpack.c.l.b16 %v3522
    %v3658 = vunpack.c.l.b16 %v3523
    %v3659 = vunpack.c.l.b16 %v3524
    %v3660 = vunpack.c.l.b16 %v3525
    %v3661 = vunpack.c.l.b16 %v3526
    %v3662 = vunpack.c.l.b16 %v3527
    %v3663 = vunpack.c.l.b16 %v3528
    %v3664 = vunpack.c.l.b16 %v3529
    %v3665 = vunpack.c.l.b16 %v3530
    %v3666 = vunpack.c.l.b16 %v3531
    %v3667 = vunpack.c.l.b16 %v3532
    %v3668 = vunpack.c.l.b16 %v3533
    %v3669 = vunpack.c.l.b16 %v3534
    %v3670 = vunpack.c.l.b16 %v3535
    %v3671 = vunpack.c.l.b16 %v3536
    %v3672 = vunpack.c.l.b16 %v3537
    %v3673 = vunpack.c.l.b16 %v3538
    %v3674 = vunpack.c.l.b16 %v3539
    %v3675 = vunpack.c.l.b16 %v3540
    %v3676 = vunpack.c.l.b16 %v3541
    %v3677 = vunpack.c.l.b16 %v3542
    %v3678 = vunpack.c.l.b16 %v3543
    %v3679 = vunpack.c.l.b16 %v3544
    %v3680 = vunpack.c.l.b16 %v3545
    %v3681 = vunpack.c.l.b16 %v3546
    %v3682 = vunpack.c.l.b16 %v3547
    %v3683 = vunpack.c.l.b16 %v3548
    %v3684 = vunpack.c.l.b16 %v3549
    %v3685 = vunpack.c.l.b16 %v3550
    %v3686 = vunpack.c.l.b16 %v3551
    %v3687 = vunpack.c.l.b16 %v3552
    %v3688 = vunpack.c.l.b16 %v3553
    %v3689 = vunpack.c.l.b16 %v3554
    %v3690 = vunpack.c.l.b16 %v3555
    %v3691 = vunpack.c.l.b16 %v3556
    %v3692 = vpack.c.b16 %v3629, %v3628
    %v3693 = vpack.c.b16 %v3631, %v3630
    %v3694 = vpack.c.b16 %v3633, %v3632
    %v3695 = vpack.c.b16 %v3635, %v3634
    %v3696 = vpack.c.b16 %v3637, %v3636
    %v3697 = vpack.c.b16 %v3639, %v3638
    %v3698 = vpack.c.b16 %v3641, %v3640
    %v3699 = vpack.c.b16 %v3643, %v3642
    %v3700 = vpack.c.b16 %v3645, %v3644
    %v3701 = vpack.c.b16 %v3647, %v3646
    %v3702 = vpack.c.b16 %v3649, %v3648
    %v3703 = vpack.c.b16 %v3651, %v3650
    %v3704 = vpack.c.b16 %v3653, %v3652
    %v3705 = vpack.c.b16 %v3655, %v3654
    %v3706 = vpack.c.b16 %v3657, %v3656
    %v3707 = vpack.c.b16 %v3659, %v3658
    %v3708 = vpack.c.b16 %v3661, %v3660
    %v3709 = vpack.c.b16 %v3663, %v3662
    %v3710 = vpack.c.b16 %v3665, %v3664
    %v3711 = vpack.c.b16 %v3667, %v3666
    %v3712 = vpack.c.b16 %v3669, %v3668
    %v3713 = vpack.c.b16 %v3671, %v3670
    %v3714 = vpack.c.b16 %v3673, %v3672
    %v3715 = vpack.c.b16 %v3675, %v3674
    %v3716 = vpack.c.b16 %v3677, %v3676
    %v3717 = vpack.c.b16 %v3679, %v3678
    %v3718 = vpack.c.b16 %v3681, %v3680
    %v3719 = vpack.c.b16 %v3683, %v3682
    %v3720 = vpack.c.b16 %v3685, %v3684
    %v3721 = vpack.c.b16 %v3687, %v3686
    %v3722 = vpack.c.b16 %v3689, %v3688
    %v3723 = vpack.c.b16 %v3691, %v3690
    %3756 = vmatprep.subr.bf16.mxu0 0
    %3757 = vmatpush1.bf16.msra.mxu0 %v3692
    %3758 = vmatprep.subr.bf16.mxu0 0
    %3759 = vmatpush1.bf16.msra.mxu0 %v3693
    %3760 = vmatprep.subr.bf16.mxu0 0
    %3761 = vmatpush1.bf16.msra.mxu0 %v3694
    %3762 = vmatprep.subr.bf16.mxu0 0
    %3763 = vmatpush1.bf16.msra.mxu0 %v3695
    %3764 = vmatprep.subr.bf16.mxu0 0
    %3765 = vmatpush1.bf16.msra.mxu0 %v3696
    %3766 = vmatprep.subr.bf16.mxu0 0
    %3767 = vmatpush1.bf16.msra.mxu0 %v3697
    %3768 = vmatprep.subr.bf16.mxu0 0
    %3769 = vmatpush1.bf16.msra.mxu0 %v3698
    %3770 = vmatprep.subr.bf16.mxu0 0
    %3771 = vmatpush1.bf16.msra.mxu0 %v3699
    %3772 = vmatprep.subr.bf16.mxu0 0
    %3773 = vmatpush1.bf16.msra.mxu0 %v3700
    %3774 = vmatprep.subr.bf16.mxu0 0
    %3775 = vmatpush1.bf16.msra.mxu0 %v3701
    %3776 = vmatprep.subr.bf16.mxu0 0
    %3777 = vmatpush1.bf16.msra.mxu0 %v3702
    %3778 = vmatprep.subr.bf16.mxu0 0
    %3779 = vmatpush1.bf16.msra.mxu0 %v3703
    %3780 = vmatprep.subr.bf16.mxu0 0
    %3781 = vmatpush1.bf16.msra.mxu0 %v3704
    %3782 = vmatprep.subr.bf16.mxu0 0
    %3783 = vmatpush1.bf16.msra.mxu0 %v3705
    %3784 = vmatprep.subr.bf16.mxu0 0
    %3785 = vmatpush1.bf16.msra.mxu0 %v3706
    %3786 = vmatprep.subr.bf16.mxu0 0
    %3787 = vmatpush1.bf16.msra.mxu0 %v3707
    %3788 = vmatprep.mubr.bf16.mxu0 %v3490
    %3789 = vmatmul.mubr.bf16.gmra.mrb[0].mxu0 %v3489
    %v3790 = vpop.f32.mrb[0].mxu0
    %v3791 = vadd.f32 %v3562, %v3790
    %v3792 = vpop.f32.mrb[0].mxu0
    %v3793 = vpop.f32.mrb[0].mxu0
    %v3794 = vpop.f32.mrb[0].mxu0
    %3795 = vdwg.mxu0
    %3796 = vmatprep.subr.bf16.mxu0 0
    %3797 = vmatpush1.bf16.msra.mxu0 %v3708
    %3798 = vmatprep.subr.bf16.mxu0 0
    %3799 = vmatpush1.bf16.msra.mxu0 %v3709
    %3800 = vmatprep.subr.bf16.mxu0 0
    %3801 = vmatpush1.bf16.msra.mxu0 %v3710
    %3802 = vmatprep.subr.bf16.mxu0 0
    %3803 = vmatpush1.bf16.msra.mxu0 %v3711
    %3804 = vmatprep.subr.bf16.mxu0 0
    %3805 = vmatpush1.bf16.msra.mxu0 %v3712
    %3806 = vmatprep.subr.bf16.mxu0 0
    %3807 = vmatpush1.bf16.msra.mxu0 %v3713
    %3808 = vmatprep.subr.bf16.mxu0 0
    %3809 = vmatpush1.bf16.msra.mxu0 %v3714
    %3810 = vmatprep.subr.bf16.mxu0 0
    %3811 = vmatpush1.bf16.msra.mxu0 %v3715
    %3812 = vmatprep.subr.bf16.mxu0 0
    %3813 = vmatpush1.bf16.msra.mxu0 %v3716
    %3814 = vmatprep.subr.bf16.mxu0 0
    %3815 = vmatpush1.bf16.msra.mxu0 %v3717
    %3816 = vmatprep.subr.bf16.mxu0 0
    %3817 = vmatpush1.bf16.msra.mxu0 %v3718
    %3818 = vmatprep.subr.bf16.mxu0 0
    %3819 = vmatpush1.bf16.msra.mxu0 %v3719
    %3820 = vmatprep.subr.bf16.mxu0 0
    %3821 = vmatpush1.bf16.msra.mxu0 %v3720
    %3822 = vmatprep.subr.bf16.mxu0 0
    %3823 = vmatpush1.bf16.msra.mxu0 %v3721
    %3824 = vmatprep.subr.bf16.mxu0 0
    %3825 = vmatpush1.bf16.msra.mxu0 %v3722
    %3826 = vmatprep.subr.bf16.mxu0 0
    %3827 = vmatpush1.bf16.msra.mxu0 %v3723
    %3828 = vmatprep.mubr.bf16.mxu0 %v3492
    %3829 = vmatmul.mubr.bf16.gmra.mrb[0].mxu0 %v3491
    %v3830 = vpop.f32.mrb[0].mxu0
    %v3831 = vadd.f32 %v3791, %v3830
    %v3832 = vpop.f32.mrb[0].mxu0
    %v3833 = vpop.f32.mrb[0].mxu0
    %v3834 = vpop.f32.mrb[0].mxu0
    %3835 = vdwg.mxu0
    %v3836 = vmax.f32 %v3831, 0.0
    %v3837 = vpack.c.bf16 %v3836, %v3836
    %v3838 = vld [vmem:[#allocation14] sm:$0xf]
    %v3839 = vld [vmem:[#allocation14 + $0x4] sm:$0xf]
    %v3840 = vld [vmem:[#allocation14 + $0x8] sm:$0xf]
    %v3841 = vld [vmem:[#allocation14 + $0xc] sm:$0xf]
    %v3842 = vld [vmem:[#allocation14 + $0x10] sm:$0xf]
    %v3843 = vld [vmem:[#allocation14 + $0x14] sm:$0xf]
    %v3844 = vld [vmem:[#allocation14 + $0x18] sm:$0xf]
    %v3845 = vld [vmem:[#allocation14 + $0x1c] sm:$0xf]
    %v3846 = vld [vmem:[#allocation14 + $0x20] sm:$0xf]
    %v3847 = vld [vmem:[#allocation14 + $0x24] sm:$0xf]
    %v3848 = vld [vmem:[#allocation14 + $0x28] sm:$0xf]
    %v3849 = vld [vmem:[#allocation14 + $0x2c] sm:$0xf]
    %v3850 = vld [vmem:[#allocation14 + $0x30] sm:$0xf]
    %v3851 = vld [vmem:[#allocation14 + $0x34] sm:$0xf]
    %v3852 = vld [vmem:[#allocation14 + $0x38] sm:$0xf]
    %v3853 = vld [vmem:[#allocation14 + $0x3c] sm:$0xf]
    %v3854 = vld [vmem:[#allocation16] sm:$0x1]
    %v3856 = vlaneseq
    %v3857 = vshrl.u32 %v3856, 7
    %v3858 = vsub.s32 0, %v3857
    %v3859 = vrot.slane %v3854, %v3858
    %v3877 = vunpack.c.l.b16 %v3838
    %v3878 = vunpack.c.l.b16 %v3839
    %v3879 = vunpack.c.l.b16 %v3840
    %v3880 = vunpack.c.l.b16 %v3841
    %v3881 = vunpack.c.l.b16 %v3842
    %v3882 = vunpack.c.l.b16 %v3843
    %v3883 = vunpack.c.l.b16 %v3844
    %v3884 = vunpack.c.l.b16 %v3845
    %v3885 = vunpack.c.l.b16 %v3846
    %v3886 = vunpack.c.l.b16 %v3847
    %v3887 = vunpack.c.l.b16 %v3848
    %v3888 = vunpack.c.l.b16 %v3849
    %v3889 = vunpack.c.l.b16 %v3850
    %v3890 = vunpack.c.l.b16 %v3851
    %v3891 = vunpack.c.l.b16 %v3852
    %v3892 = vunpack.c.l.b16 %v3853
    %v3893 = vpack.c.b16 %v3878, %v3877
    %v3894 = vpack.c.b16 %v3880, %v3879
    %v3895 = vpack.c.b16 %v3882, %v3881
    %v3896 = vpack.c.b16 %v3884, %v3883
    %v3897 = vpack.c.b16 %v3886, %v3885
    %v3898 = vpack.c.b16 %v3888, %v3887
    %v3899 = vpack.c.b16 %v3890, %v3889
    %v3900 = vpack.c.b16 %v3892, %v3891
    %3909 = vmatprep.subr.bf16.mxu0 0
    %3910 = vmatpush1.bf16.msra.mxu0 %v3893
    %3911 = vmatprep.subr.bf16.mxu0 0
    %3912 = vmatpush1.bf16.msra.mxu0 %v3894
    %3913 = vmatprep.subr.bf16.mxu0 0
    %3914 = vmatpush1.bf16.msra.mxu0 %v3895
    %3915 = vmatprep.subr.bf16.mxu0 0
    %3916 = vmatpush1.bf16.msra.mxu0 %v3896
    %3917 = vmatprep.subr.bf16.mxu0 0
    %3918 = vmatpush1.bf16.msra.mxu0 %v3897
    %3919 = vmatprep.subr.bf16.mxu0 0
    %3920 = vmatpush1.bf16.msra.mxu0 %v3898
    %3921 = vmatprep.subr.bf16.mxu0 0
    %3922 = vmatpush1.bf16.msra.mxu0 %v3899
    %3923 = vmatprep.subr.bf16.mxu0 0
    %3924 = vmatpush1.bf16.msra.mxu0 %v3900
    %3925 = vmatprep.subr.bf16.mxu0 0
    %3926 = vmatpush1.bf16.msra.mxu0 0
    %3927 = vmatprep.subr.bf16.mxu0 0
    %3928 = vmatpush1.bf16.msra.mxu0 0
    %3929 = vmatprep.subr.bf16.mxu0 0
    %3930 = vmatpush1.bf16.msra.mxu0 0
    %3931 = vmatprep.subr.bf16.mxu0 0
    %3932 = vmatpush1.bf16.msra.mxu0 0
    %3933 = vmatprep.subr.bf16.mxu0 0
    %3934 = vmatpush1.bf16.msra.mxu0 0
    %3935 = vmatprep.subr.bf16.mxu0 0
    %3936 = vmatpush1.bf16.msra.mxu0 0
    %3937 = vmatprep.subr.bf16.mxu0 0
    %3938 = vmatpush1.bf16.msra.mxu0 0
    %3939 = vmatprep.subr.bf16.mxu0 0
    %3940 = vmatpush1.bf16.msra.mxu0 0
    %3941 = vmatprep.mubr.bf16.mxu0 0
    %3942 = vmatmul.mubr.bf16.gmra.mrb[0].mxu0 %v3837
    %v3943 = vpop.f32.mrb[0].mxu0
    %v3944 = vadd.f32 %v3859, %v3943
    %v3945 = vpop.f32.mrb[0].mxu0
    %v3946 = vpop.f32.mrb[0].mxu0
    %v3947 = vpop.f32.mrb[0].mxu0
    %3948 = vdwg.mxu0
    %vm3949 = vcmask 326656
    %3950 = vst.msk [vmem:[#allocation17] sm:$0xff] %vm3949, %v3944
    // Predicated region
    $region74: #{encoder_forward.1} parent=1 // pred_check
      _
    $region75: #{encoder_forward.1} parent=1 // pred_check_branch
      %3952 = sbr.rel (0) target = $region77
    $region76: #{encoder_forward.1} parent=1 // pred_region
      %s3954 = ssub.s32 128, 128
      %3955 = vsyncadd [#allocation4], %s3954
      %s3957 = sshll.u32 [#allocation17], 4
      %s3958 = int_to_ptr.vmem [resolvable:$true] %s3957
      %3960 = dma.vmem_to_hbm [thread:$0]  %s3958, 128, %s9, [#allocation4]
    $region77: #{encoder_forward.1} parent=1 // pred_fallthru
      _
    // Predicated region
    $region78: #{encoder_forward.1} parent=1 // pred_check
      _
    $region79: #{encoder_forward.1} parent=1 // pred_check_branch
      %3962 = sbr.rel (0) target = $region81
    $region80: #{encoder_forward.1} parent=1 // pred_region
      %3963 = dma.done [#allocation4], 128
    $region81: #{encoder_forward.1} parent=1 // pred_fallthru
      _
    %3964 = vsyncpa [#allocation3], 1
    %3965 = vsyncpa [#allocation6], 1
    %3966 = vsyncpa [#allocation9], 1
    %3967 = vsyncpa [#allocation12], 1
    %3968 = vsyncpa [#allocation15], 1
    %3969 = vsyncpa [#allocation4], 1

</llo_original>
